<compile_context>
chip_gen: v5e
topology: v5e:2x2
jax: 0.10.0
libtpu: 0.0.40
codegen_flags: <defaults>
</compile_context>

<pallas_src>
import functools

import numpy as np
import jax
import jax.numpy as jnp
from jax import lax
from jax.experimental import pallas as pl
from jax.experimental.pallas import tpu as pltpu

LOG2 = 0.6931471805599453
_VMEM = pl.BlockSpec(memory_space=pltpu.MemorySpace.VMEM)


def _ssp(x):
    # shifted softplus: softplus(x) - log(2), numerically stable.  ssp(0)==0,
    # which keeps the zero feature-padding exact through the whole block.
    return jnp.maximum(x, 0.0) + jnp.log1p(jnp.exp(-jnp.abs(x))) - LOG2


def _round_up(x, m):
    return ((x + m - 1) // m) * m


def _pad2(a, rows, cols):
    out = jnp.zeros((rows, cols), jnp.float32)
    return out.at[: a.shape[0], : a.shape[1]].set(a.astype(jnp.float32))


# ------------------------------- prep kernel -------------------------------

def _prep_kernel(dcol_ref, mu_ref, idxi_ref, idxj_ref,
                 fij_ref, gat_ref, scat_ref, rcut_ref, *, gamma, cutoff, n_rbf):
    """Once-per-forward precompute: RBF features, gather/scatter one-hots
    (exact 0/1 values, stored bf16 for the MXU) and the f32 cosine cutoff."""
    d = dcol_ref[...]                                          # (P, 1) f32
    diff = d - mu_ref[...]                                     # (P, F)
    rbf = jnp.exp(-gamma * diff * diff)
    col = lax.broadcasted_iota(jnp.int32, rbf.shape, 1)
    fij_ref[...] = jnp.where(col < n_rbf, rbf, 0.0).astype(fij_ref.dtype)

    p, a = gat_ref.shape
    # gather one-hot: gat[p, a] = [idx_j[p] == a]
    gat_ref[...] = (idxj_ref[...] ==
                    lax.broadcasted_iota(jnp.int32, (p, a), 1)).astype(gat_ref.dtype)
    # scatter one-hot (transposed): scat[a, p] = [idx_i[p] == a]
    scat_ref[...] = (lax.broadcasted_iota(jnp.int32, (a, p), 0) ==
                     idxi_ref[...]).astype(scat_ref.dtype)

    # cosine cutoff, kept in f32 (padded pairs have d >= cutoff -> rcut = 0,
    # which is what neutralizes them in the scatter-add).
    rcut_ref[...] = jnp.where(d < cutoff,
                              0.5 * (jnp.cos(d * (jnp.pi / cutoff)) + 1.0), 0.0)


def prep(d_ij, mu, idx_i, idx_j, a_pad, p_pad, f_pad, gamma, cutoff):
    p = d_ij.shape[0]
    n_rbf = mu.shape[0]
    # padded pairs get d >= cutoff -> rcut = 0 -> zero contribution
    d_pad = jnp.full((p_pad,), 2.0 * cutoff, jnp.float32).at[:p].set(d_ij.astype(jnp.float32))
    ii = jnp.zeros((p_pad,), jnp.int32).at[:p].set(idx_i.astype(jnp.int32))
    jj = jnp.zeros((p_pad,), jnp.int32).at[:p].set(idx_j.astype(jnp.int32))
    mu_pad = jnp.zeros((1, f_pad), jnp.float32).at[0, :n_rbf].set(mu.astype(jnp.float32))
    return pl.pallas_call(
        functools.partial(_prep_kernel, gamma=gamma, cutoff=cutoff, n_rbf=n_rbf),
        out_shape=(jax.ShapeDtypeStruct((p_pad, f_pad), jnp.bfloat16),   # f_ij
                   jax.ShapeDtypeStruct((p_pad, a_pad), jnp.bfloat16),   # gather one-hot
                   jax.ShapeDtypeStruct((a_pad, p_pad), jnp.bfloat16),   # scatter one-hot
                   jax.ShapeDtypeStruct((p_pad, 1), jnp.float32)),       # rcut (f32)
        in_specs=[_VMEM] * 4,
        out_specs=(_VMEM, _VMEM, _VMEM, _VMEM),
    )(d_pad.reshape(p_pad, 1), mu_pad, ii.reshape(1, p_pad), jj.reshape(p_pad, 1))


# ------------------------ fused interaction-layers kernel ------------------------

def _layers_kernel(x0_ref, fij_ref, gat_ref, scat_ref, rcut_ref,
                   w_in_ref, w_f1_ref, b_f1_ref, w_f2_ref, b_f2_ref,
                   w_o1_ref, b_o1_ref, w_o2_ref, b_o2_ref,
                   o_ref, x_scr, xf_scr, agg_scr, *, n_atoms):
    """grid = (layer, pair_tile).  x is carried in VMEM across all layers; the
    scatter-add accumulates across pair tiles in a f32 VMEM scratch."""
    f32, bf16 = jnp.float32, jnp.bfloat16
    l, pt = pl.program_id(0), pl.program_id(1)
    n_pt = pl.num_programs(1)

    @pl.when(jnp.logical_and(l == 0, pt == 0))
    def _():
        x_scr[...] = x0_ref[...]                 # load atom features once

    @pl.when(pt == 0)
    def _():
        # in2f (Dense, no bias), once per layer; kept bf16 for the gather matmul
        xf_scr[...] = jnp.dot(x_scr[...].astype(bf16), w_in_ref[...],
                              preferred_element_type=f32).astype(bf16)
        agg_scr[...] = jnp.zeros_like(agg_scr)

    # filter network on this pair tile: Dense + shifted-softplus, Dense
    h = _ssp(jnp.dot(fij_ref[...], w_f1_ref[...], preferred_element_type=f32)
             + b_f1_ref[...])
    wij = jnp.dot(h.astype(bf16), w_f2_ref[...],
                  preferred_element_type=f32) + b_f2_ref[...]
    # cfconv: gather x[idx_j] via exact 0/1 one-hot matmul, apply filter * cutoff
    x_j = jnp.dot(gat_ref[...], xf_scr[...], preferred_element_type=f32)
    x_ij = x_j * wij * rcut_ref[...]             # rcut kept f32 (review item)
    # scatter-add over idx_i via one-hot matmul; accumulate across pair tiles
    agg_scr[...] += jnp.dot(scat_ref[...], x_ij.astype(bf16),
                            preferred_element_type=f32)

    @pl.when(pt == n_pt - 1)
    def _():
        # f2out: Dense + shifted-softplus, Dense; then residual add
        h2 = _ssp(jnp.dot(agg_scr[...].astype(bf16), w_o1_ref[...],
                          preferred_element_type=f32) + b_o1_ref[...])
        v = jnp.dot(h2.astype(bf16), w_o2_ref[...],
                    preferred_element_type=f32) + b_o2_ref[...]
        # keep padded atom rows exactly zero (no junk accumulation across layers)
        row = lax.broadcasted_iota(jnp.int32, v.shape, 0)
        x_scr[...] = x_scr[...] + jnp.where(row < n_atoms, v, 0.0)
        o_ref[...] = x_scr[...]                  # HBM writeback happens once, at grid end


def schnet_layers(x_pad, fij, gat, scat, rcut, params, *, n_atoms, p_tile):
    a_pad, f_pad = x_pad.shape
    p_pad = fij.shape[0]
    n_layers = params["w_in2f"].shape[0]
    n_pt = p_pad // p_tile

    wspec = pl.BlockSpec((None, f_pad, f_pad), lambda l, pt: (l, 0, 0))
    bspec = pl.BlockSpec((None, 1, f_pad), lambda l, pt: (l, 0, 0))
    const = lambda l, pt: (0, 0)

    return pl.pallas_call(
        functools.partial(_layers_kernel, n_atoms=n_atoms),
        out_shape=jax.ShapeDtypeStruct((a_pad, f_pad), jnp.float32),
        grid_spec=pltpu.PrefetchScalarGridSpec(
            num_scalar_prefetch=0,
            grid=(n_layers, n_pt),
            in_specs=[
                pl.BlockSpec((a_pad, f_pad), const),                    # x0 (read once)
                pl.BlockSpec((p_tile, f_pad), lambda l, pt: (pt, 0)),   # f_ij
                pl.BlockSpec((p_tile, a_pad), lambda l, pt: (pt, 0)),   # gather one-hot
                pl.BlockSpec((a_pad, p_tile), lambda l, pt: (0, pt)),   # scatter one-hot
                pl.BlockSpec((p_tile, 1), lambda l, pt: (pt, 0)),       # rcut (f32)
                wspec, wspec, bspec, wspec, bspec,                      # in2f, filter net
                wspec, bspec, wspec, bspec,                             # f2out
            ],
            out_specs=pl.BlockSpec((a_pad, f_pad), const),
            scratch_shapes=[pltpu.VMEM((a_pad, f_pad), jnp.float32),    # x (layer carry)
                            pltpu.VMEM((a_pad, f_pad), jnp.bfloat16),   # in2f(x)
                            pltpu.VMEM((a_pad, f_pad), jnp.float32)]),  # scatter accumulator
        compiler_params=pltpu.CompilerParams(
            dimension_semantics=("arbitrary", "arbitrary")),
    )(x_pad, fij, gat, scat, rcut,
      params["w_in2f"], params["w_f1"], params["b_f1"], params["w_f2"], params["b_f2"],
      params["w_o1"], params["b_o1"], params["w_o2"], params["b_o2"])


def _stack_layer_params(layers, f_pad):
    """Stack all per-layer weights to (L, F, F)/(L, 1, F) once, zero-padded;
    matmul weights are cast to bf16 (MXU operands), biases stay f32."""
    def wstack(name):
        return jnp.stack([_pad2(p[name], f_pad, f_pad) for p in layers]).astype(jnp.bfloat16)

    def bstack(name):
        return jnp.stack([jnp.zeros((1, f_pad), jnp.float32)
                          .at[0, :p[name].shape[0]].set(p[name].astype(jnp.float32))
                          for p in layers])

    out = {k: wstack(k) for k in ("w_in2f", "w_f1", "w_f2", "w_o1", "w_o2")}
    out.update({k: bstack(k) for k in ("b_f1", "b_f2", "b_o1", "b_o2")})
    return out


# ------------------------------- SchNet forward -------------------------------

def schnet_forward(emb, layers, mu, gamma, cutoff, Z, R, idx_i, idx_j, offsets):
    n_atoms = Z.shape[0]
    n_atom_basis = emb.shape[1]
    n_filters = layers[0]["w_in2f"].shape[1]
    n_rbf = mu.shape[0]
    n_pairs = idx_i.shape[0]

    # lane-dense padded sizes: the atom axis is the lane dim of the gather
    # one-hot and the pair axis is the lane dim of the scatter one-hot, so
    # both are rounded up to multiples of 128.
    a_pad = _round_up(max(n_atoms, 128), 128)
    f_pad = _round_up(max(n_atom_basis, n_filters, n_rbf, 128), 128)
    p_pad = _round_up(max(n_pairs, 128), 128)
    p_tile = min(p_pad, 512)         # up to 512 = multiple of 256 (v6e/v7x MXU depth)
    p_pad = _round_up(p_pad, p_tile)

    # geometry glue (plain JAX)
    r_ij = R[idx_j] - R[idx_i] + offsets
    d_ij = jnp.sqrt(jnp.sum(r_ij * r_ij, axis=1))

    # once-per-forward precompute (Pallas): RBF features, one-hots, cutoff
    fij, gat, scat, rcut = prep(d_ij, mu, idx_i, idx_j, a_pad, p_pad, f_pad,
                                gamma, cutoff)

    # nuclear embedding lookup (glue; padding_idx=0 row is zero)
    x_pad = _pad2(jnp.take(emb, Z, axis=0), a_pad, f_pad)

    # stack + pad + cast all layer weights once (hoisted out of the grid)
    params = _stack_layer_params(layers, f_pad)

    out = schnet_layers(x_pad, fij, gat, scat, rcut, params,
                        n_atoms=n_atoms, p_tile=p_tile)
    return out[:n_atoms, :n_atom_basis]


# ------------------------------ pure-JAX references ------------------------------

def _mm_bf16(a, b):
    return jnp.dot(a.astype(jnp.bfloat16), b.astype(jnp.bfloat16),
                   preferred_element_type=jnp.float32)


def schnet_ref(emb, layers, mu, gamma, cutoff, Z, R, idx_i, idx_j, offsets,
               *, bf16_matmuls):
    """With bf16_matmuls=True this mirrors the kernel's MXU precision (bf16
    operands, f32 accumulation); with False it is the pure-f32 module math."""
    mm = _mm_bf16 if bf16_matmuls else (lambda a, b: a @ b)
    rd = (lambda a: a.astype(jnp.bfloat16).astype(jnp.float32)) if bf16_matmuls \
        else (lambda a: a)
    r_ij = R[idx_j] - R[idx_i] + offsets
    d_ij = jnp.linalg.norm(r_ij, axis=1)
    f_ij = jnp.exp(-gamma * (d_ij[:, None] - mu[None, :]) ** 2)
    rcut = jnp.where(d_ij < cutoff, 0.5 * (jnp.cos(jnp.pi * d_ij / cutoff) + 1.0), 0.0)
    x = emb[Z]
    n_atoms = x.shape[0]
    for p in layers:
        xf = mm(x, p["w_in2f"])
        h = _ssp(mm(f_ij, p["w_f1"]) + p["b_f1"])
        wij = mm(h, p["w_f2"]) + p["b_f2"]
        x_j = rd(xf)[idx_j]
        x_ij = x_j * wij * rcut[:, None]
        agg = jax.ops.segment_sum(rd(x_ij), idx_i, num_segments=n_atoms)
        h2 = _ssp(mm(agg, p["w_o1"]) + p["b_o1"])
        v = mm(h2, p["w_o2"]) + p["b_o2"]
        x = x + v
    return x


# ------------------------------------ main ------------------------------------

if __name__ == "__main__":
    key = jax.random.PRNGKey(0)
    n_atoms = 8
    n_atom_basis = 32
    n_filters = 32
    n_rbf = 16
    n_interactions = 2
    max_z = 101
    cutoff = 5.0

    k_emb, k_layers, k_z, k_r = jax.random.split(key, 4)

    # nn.Embedding(max_z, n_atom_basis, padding_idx=0)
    emb = 0.1 * jax.random.normal(k_emb, (max_z, n_atom_basis), jnp.float32)
    emb = emb.at[0].set(0.0)

    def init_interaction(k):
        ks = jax.random.split(k, 9)
        s = 0.1
        return dict(
            w_in2f=s * jax.random.normal(ks[0], (n_atom_basis, n_filters), jnp.float32),
            w_f1=s * jax.random.normal(ks[1], (n_rbf, n_filters), jnp.float32),
            b_f1=s * jax.random.normal(ks[2], (n_filters,), jnp.float32),
            w_f2=s * jax.random.normal(ks[3], (n_filters, n_filters), jnp.float32),
            b_f2=s * jax.random.normal(ks[4], (n_filters,), jnp.float32),
            w_o1=s * jax.random.normal(ks[5], (n_filters, n_atom_basis), jnp.float32),
            b_o1=s * jax.random.normal(ks[6], (n_atom_basis,), jnp.float32),
            w_o2=s * jax.random.normal(ks[7], (n_atom_basis, n_atom_basis), jnp.float32),
            b_o2=s * jax.random.normal(ks[8], (n_atom_basis,), jnp.float32),
        )

    layers = [init_interaction(k) for k in jax.random.split(k_layers, n_interactions)]

    # Gaussian RBF (schnetpack-style): centers on [0, cutoff], constant width
    mu = jnp.linspace(0.0, cutoff, n_rbf, dtype=jnp.float32)
    width = float(mu[1] - mu[0])
    gamma = 0.5 / (width * width)

    # inputs
    Z = jax.random.randint(k_z, (n_atoms,), 1, 10)
    R = 3.0 * jax.random.uniform(k_r, (n_atoms, 3), jnp.float32)

    # full neighbor list (i != j), zero periodic offsets
    ii, jj = jnp.meshgrid(jnp.arange(n_atoms), jnp.arange(n_atoms), indexing="ij")
    mask = (ii != jj).reshape(-1)
    idx_i = ii.reshape(-1)[mask]
    idx_j = jj.reshape(-1)[mask]
    offsets = jnp.zeros((idx_i.shape[0], 3), jnp.float32)

    out = schnet_forward(emb, layers, mu, gamma, cutoff, Z, R, idx_i, idx_j, offsets)
    out = jax.block_until_ready(out)

    # tight check vs. a reference that mirrors the kernel's MXU precision
    ref_mixed = schnet_ref(emb, layers, mu, gamma, cutoff, Z, R, idx_i, idx_j,
                           offsets, bf16_matmuls=True)
    np.testing.assert_allclose(np.asarray(out), np.asarray(ref_mixed),
                               rtol=1e-3, atol=1e-3)
    # loose check vs. the pure-f32 module math (bf16 MXU operands bound the
    # deviation at the ~1e-3 level for these magnitudes)
    ref_f32 = schnet_ref(emb, layers, mu, gamma, cutoff, Z, R, idx_i, idx_j,
                         offsets, bf16_matmuls=False)
    np.testing.assert_allclose(np.asarray(out), np.asarray(ref_f32),
                               rtol=2e-2, atol=2e-2)

    print("KERNEL_OK")
</pallas_src>

<mosaic_0001>
module attributes {stable_mosaic.version = 11 : i64} {
  func.func @_prep_kernel(%arg0: memref<128x1xf32, #tpu.memory_space<vmem>>, %arg1: memref<1x128xf32, #tpu.memory_space<vmem>>, %arg2: memref<1x128xi32, #tpu.memory_space<vmem>>, %arg3: memref<128x1xi32, #tpu.memory_space<vmem>>, %arg4: memref<128x128xbf16, #tpu.memory_space<vmem>>, %arg5: memref<128x128xbf16, #tpu.memory_space<vmem>>, %arg6: memref<128x128xbf16, #tpu.memory_space<vmem>>, %arg7: memref<128x1xf32, #tpu.memory_space<vmem>>) attributes {dimension_semantics = [], scalar_prefetch = 0 : i64, scratch_operands = 0 : i64, tpu.core_type = #tpu.core_type<tc>} {
    %c0 = arith.constant 0 : index
    %c0_0 = arith.constant 0 : index
    %0 = vector.load %arg0[%c0, %c0_0] : memref<128x1xf32, #tpu.memory_space<vmem>>, vector<128x1xf32>
    %c0_1 = arith.constant 0 : index
    %c0_2 = arith.constant 0 : index
    %1 = vector.load %arg1[%c0_1, %c0_2] : memref<1x128xf32, #tpu.memory_space<vmem>>, vector<1x128xf32>
    %2 = vector.broadcast %0 : vector<128x1xf32> to vector<128x128xf32>
    %3 = vector.broadcast %1 : vector<1x128xf32> to vector<128x128xf32>
    %4 = arith.subf %2, %3 : vector<128x128xf32>
    %cst = arith.constant -4.49999952 : f32
    %5 = vector.broadcast %cst : f32 to vector<128x128xf32>
    %6 = arith.mulf %5, %4 : vector<128x128xf32>
    %7 = arith.mulf %6, %4 : vector<128x128xf32>
    %8 = math.exp %7 : vector<128x128xf32>
    %9 = tpu.iota {dimensions = array<i32: 1>} : vector<128x128xi32>
    %c16_i32 = arith.constant 16 : i32
    %10 = vector.broadcast %c16_i32 : i32 to vector<128x128xi32>
    %11 = arith.cmpi slt, %9, %10 : vector<128x128xi32>
    %cst_3 = arith.constant 0.000000e+00 : f32
    %12 = vector.broadcast %cst_3 : f32 to vector<128x128xf32>
    %13 = arith.select %11, %8, %12 : vector<128x128xi1>, vector<128x128xf32>
    %14 = arith.truncf %13 : vector<128x128xf32> to vector<128x128xbf16>
    %c0_4 = arith.constant 0 : index
    %c0_5 = arith.constant 0 : index
    %15 = vector.load %arg4[%c0_4, %c0_5] : memref<128x128xbf16, #tpu.memory_space<vmem>>, vector<128x128xbf16>
    tpu.vector_store %arg4[%c0_4, %c0_5], %14 {strides = array<i32>} : memref<128x128xbf16, #tpu.memory_space<vmem>>, vector<128x128xbf16>,
    %c0_6 = arith.constant 0 : index
    %c0_7 = arith.constant 0 : index
    %16 = vector.load %arg3[%c0_6, %c0_7] : memref<128x1xi32, #tpu.memory_space<vmem>>, vector<128x1xi32>
    %17 = tpu.iota {dimensions = array<i32: 1>} : vector<128x128xi32>
    %18 = vector.broadcast %16 : vector<128x1xi32> to vector<128x128xi32>
    %19 = arith.cmpi eq, %18, %17 : vector<128x128xi32>
    %20 = arith.extui %19 : vector<128x128xi1> to vector<128x128xi32>
    %21 = arith.sitofp %20 : vector<128x128xi32> to vector<128x128xf32>
    %22 = arith.truncf %21 : vector<128x128xf32> to vector<128x128xbf16>
    %c0_8 = arith.constant 0 : index
    %c0_9 = arith.constant 0 : index
    %23 = vector.load %arg5[%c0_8, %c0_9] : memref<128x128xbf16, #tpu.memory_space<vmem>>, vector<128x128xbf16>
    tpu.vector_store %arg5[%c0_8, %c0_9], %22 {strides = array<i32>} : memref<128x128xbf16, #tpu.memory_space<vmem>>, vector<128x128xbf16>,
    %24 = tpu.iota {dimensions = array<i32: 0>} : vector<128x128xi32>
    %c0_10 = arith.constant 0 : index
    %c0_11 = arith.constant 0 : index
    %25 = vector.load %arg2[%c0_10, %c0_11] : memref<1x128xi32, #tpu.memory_space<vmem>>, vector<1x128xi32>
    %26 = vector.broadcast %25 : vector<1x128xi32> to vector<128x128xi32>
    %27 = arith.cmpi eq, %24, %26 : vector<128x128xi32>
    %28 = arith.extui %27 : vector<128x128xi1> to vector<128x128xi32>
    %29 = arith.sitofp %28 : vector<128x128xi32> to vector<128x128xf32>
    %30 = arith.truncf %29 : vector<128x128xf32> to vector<128x128xbf16>
    %c0_12 = arith.constant 0 : index
    %c0_13 = arith.constant 0 : index
    %31 = vector.load %arg6[%c0_12, %c0_13] : memref<128x128xbf16, #tpu.memory_space<vmem>>, vector<128x128xbf16>
    tpu.vector_store %arg6[%c0_12, %c0_13], %30 {strides = array<i32>} : memref<128x128xbf16, #tpu.memory_space<vmem>>, vector<128x128xbf16>,
    %cst_14 = arith.constant 5.000000e+00 : f32
    %32 = vector.broadcast %cst_14 : f32 to vector<128x1xf32>
    %33 = arith.cmpf olt, %0, %32 : vector<128x1xf32>
    %cst_15 = arith.constant 0.628318548 : f32
    %34 = vector.broadcast %cst_15 : f32 to vector<128x1xf32>
    %35 = arith.mulf %0, %34 : vector<128x1xf32>
    %36 = math.cos %35 : vector<128x1xf32>
    %cst_16 = arith.constant 1.000000e+00 : f32
    %37 = vector.broadcast %cst_16 : f32 to vector<128x1xf32>
    %38 = arith.addf %36, %37 : vector<128x1xf32>
    %cst_17 = arith.constant 5.000000e-01 : f32
    %39 = vector.broadcast %cst_17 : f32 to vector<128x1xf32>
    %40 = arith.mulf %39, %38 : vector<128x1xf32>
    %cst_18 = arith.constant 0.000000e+00 : f32
    %41 = vector.broadcast %cst_18 : f32 to vector<128x1xf32>
    %42 = arith.select %33, %40, %41 : vector<128x1xi1>, vector<128x1xf32>
    %c0_19 = arith.constant 0 : index
    %c0_20 = arith.constant 0 : index
    %43 = vector.load %arg7[%c0_19, %c0_20] : memref<128x1xf32, #tpu.memory_space<vmem>>, vector<128x1xf32>
    tpu.vector_store %arg7[%c0_19, %c0_20], %42 {strides = array<i32>} : memref<128x1xf32, #tpu.memory_space<vmem>>, vector<128x1xf32>,
    return
  }
}

</mosaic_0001>

<llo_original>
// kernel: tpu_custom_call.1
$region0: #{tpu_custom_call.1}
  #allocation0 [shape = 'u32[]', space=smem, size = 0x4, offset = 0x4, fixed_abs, tag = 'smem constant byte address 0x4 - core index']
  #allocation1 [shape = 'u32[72,128]{1,0:T(1,128)}', space=vmem, size = 0x9000, scoped, tag = 'internal scratch']
  %s0 = inlined_call_operand.vmem [shape: f32[128,1], index: 0, kind: input, shape index: {}]
  %s1 = inlined_call_operand.vmem [shape: f32[1,128], index: 1, kind: input, shape index: {}]
  %s2 = inlined_call_operand.vmem [shape: s32[1,128], index: 2, kind: input, shape index: {}]
  %s3 = inlined_call_operand.vmem [shape: s32[128,1], index: 3, kind: input, shape index: {}]
  %s4 = inlined_call_operand.hbm [shape: bf16[128,128], index: 4, kind: output, shape index: {0}]
  %s5 = inlined_call_operand.hbm [shape: bf16[128,128], index: 5, kind: output, shape index: {1}]
  %s6 = inlined_call_operand.hbm [shape: bf16[128,128], index: 6, kind: output, shape index: {2}]
  %s7 = inlined_call_operand.vmem [shape: f32[128,1], index: 7, kind: output, shape index: {3}]
  %8 = xla_tuple %s4, %s5, %s6, %s7
  %s9 = sld [smem:[#allocation0]]
  $region50: #{tpu_custom_call.1} parent=0
    _
  %s11 = ssub.s32 1, %s9
  %s12 = scalar_select 0, %s11, %s9
  $region1: #{tpu_custom_call.1} parent=0
    #allocation2 [shape = 'u8[32768]{0}', space=vmem, size = 0x8000, scoped, tag = 'output window, operand 0, single buffered']
    #allocation3 [shape = 's32[1]{0}', space=sflag, size = 0x4, scoped, tag = 'scoped memory for tpu_custom_call.1']
    #allocation4 [shape = 'u8[32768]{0}', space=vmem, size = 0x8000, scoped, tag = 'output window, operand 1, single buffered']
    #allocation5 [shape = 's32[1]{0}', space=sflag, size = 0x4, scoped, tag = 'scoped memory for tpu_custom_call.1']
    #allocation6 [shape = 'u8[32768]{0}', space=vmem, size = 0x8000, scoped, tag = 'output window, operand 2, single buffered']
    %13 = vsyncpa [#allocation3], 0
    %14 = vsyncpa [#allocation5], 0
    // Predicated region
    $region2: #{tpu_custom_call.1} parent=1 // pred_check
      _
    $region3: #{tpu_custom_call.1} parent=1 // pred_check_branch
      %16 = sbr.rel (0) target = $region5
    $region4: #{tpu_custom_call.1} parent=1 // pred_region
      _
    $region5: #{tpu_custom_call.1} parent=1 // pred_fallthru
      _
    // Predicated region
    $region6: #{tpu_custom_call.1} parent=1 // pred_check
      _
    $region7: #{tpu_custom_call.1} parent=1 // pred_check_branch
      %18 = sbr.rel (0) target = $region9
    $region8: #{tpu_custom_call.1} parent=1 // pred_region
      _
    $region9: #{tpu_custom_call.1} parent=1 // pred_fallthru
      _
    // Predicated region
    $region10: #{tpu_custom_call.1} parent=1 // pred_check
      _
    $region11: #{tpu_custom_call.1} parent=1 // pred_check_branch
      %20 = sbr.rel (0) target = $region13
    $region12: #{tpu_custom_call.1} parent=1 // pred_region
      _
    $region13: #{tpu_custom_call.1} parent=1 // pred_fallthru
      _
    // Predicated region
    $region14: #{tpu_custom_call.1} parent=1 // pred_check
      _
    $region15: #{tpu_custom_call.1} parent=1 // pred_check_branch
      %22 = sbr.rel (0) target = $region17
    $region16: #{tpu_custom_call.1} parent=1 // pred_region
      _
    $region17: #{tpu_custom_call.1} parent=1 // pred_fallthru
      _
    %v23 = vld [vmem:[%s0] sm:$0xff]
    %v24 = vld [vmem:[%s0 + $0x8] sm:$0xff]
    %v25 = vld [vmem:[%s0 + $0x10] sm:$0xff]
    %v26 = vld [vmem:[%s0 + $0x18] sm:$0xff]
    %v27 = vld [vmem:[%s0 + $0x20] sm:$0xff]
    %v28 = vld [vmem:[%s0 + $0x28] sm:$0xff]
    %v29 = vld [vmem:[%s0 + $0x30] sm:$0xff]
    %v30 = vld [vmem:[%s0 + $0x38] sm:$0xff]
    %v31 = vld [vmem:[%s0 + $0x40] sm:$0xff]
    %v32 = vld [vmem:[%s0 + $0x48] sm:$0xff]
    %v33 = vld [vmem:[%s0 + $0x50] sm:$0xff]
    %v34 = vld [vmem:[%s0 + $0x58] sm:$0xff]
    %v35 = vld [vmem:[%s0 + $0x60] sm:$0xff]
    %v36 = vld [vmem:[%s0 + $0x68] sm:$0xff]
    %v37 = vld [vmem:[%s0 + $0x70] sm:$0xff]
    %v38 = vld [vmem:[%s0 + $0x78] sm:$0xff]
    %v39 = vld [vmem:[%s1] sm:$0x1]
    %41 = vset.pattern.permute.xlu0 0
    %42 = vperm.xlu0 %41, %v23
    %v43 = vpop.permute.xlu0 %42
    %46 = vset.pattern.permute.xlu0 0
    %47 = vperm.xlu0 %46, %v24
    %v48 = vpop.permute.xlu0 %47
    %51 = vset.pattern.permute.xlu0 0
    %52 = vperm.xlu0 %51, %v25
    %v53 = vpop.permute.xlu0 %52
    %56 = vset.pattern.permute.xlu0 0
    %57 = vperm.xlu0 %56, %v26
    %v58 = vpop.permute.xlu0 %57
    %61 = vset.pattern.permute.xlu0 0
    %62 = vperm.xlu0 %61, %v27
    %v63 = vpop.permute.xlu0 %62
    %66 = vset.pattern.permute.xlu0 0
    %67 = vperm.xlu0 %66, %v28
    %v68 = vpop.permute.xlu0 %67
    %71 = vset.pattern.permute.xlu0 0
    %72 = vperm.xlu0 %71, %v29
    %v73 = vpop.permute.xlu0 %72
    %76 = vset.pattern.permute.xlu0 0
    %77 = vperm.xlu0 %76, %v30
    %v78 = vpop.permute.xlu0 %77
    %81 = vset.pattern.permute.xlu0 0
    %82 = vperm.xlu0 %81, %v31
    %v83 = vpop.permute.xlu0 %82
    %86 = vset.pattern.permute.xlu0 0
    %87 = vperm.xlu0 %86, %v32
    %v88 = vpop.permute.xlu0 %87
    %91 = vset.pattern.permute.xlu0 0
    %92 = vperm.xlu0 %91, %v33
    %v93 = vpop.permute.xlu0 %92
    %96 = vset.pattern.permute.xlu0 0
    %97 = vperm.xlu0 %96, %v34
    %v98 = vpop.permute.xlu0 %97
    %101 = vset.pattern.permute.xlu0 0
    %102 = vperm.xlu0 %101, %v35
    %v103 = vpop.permute.xlu0 %102
    %106 = vset.pattern.permute.xlu0 0
    %107 = vperm.xlu0 %106, %v36
    %v108 = vpop.permute.xlu0 %107
    %111 = vset.pattern.permute.xlu0 0
    %112 = vperm.xlu0 %111, %v37
    %v113 = vpop.permute.xlu0 %112
    %116 = vset.pattern.permute.xlu0 0
    %117 = vperm.xlu0 %116, %v38
    %v118 = vpop.permute.xlu0 %117
    %v121 = vperm.slane %v39, 0
    %v123 = vsub.f32 %v43, %v121
    %v124 = vsub.f32 %v48, %v121
    %v125 = vsub.f32 %v53, %v121
    %v126 = vsub.f32 %v58, %v121
    %v127 = vsub.f32 %v63, %v121
    %v128 = vsub.f32 %v68, %v121
    %v129 = vsub.f32 %v73, %v121
    %v130 = vsub.f32 %v78, %v121
    %v131 = vsub.f32 %v83, %v121
    %v132 = vsub.f32 %v88, %v121
    %v133 = vsub.f32 %v93, %v121
    %v134 = vsub.f32 %v98, %v121
    %v135 = vsub.f32 %v103, %v121
    %v136 = vsub.f32 %v108, %v121
    %v137 = vsub.f32 %v113, %v121
    %v138 = vsub.f32 %v118, %v121
    %v139 = vmul.f32 %v123, -4.4999995
    %v140 = vmul.f32 %v124, -4.4999995
    %v141 = vmul.f32 %v125, -4.4999995
    %v142 = vmul.f32 %v126, -4.4999995
    %v143 = vmul.f32 %v127, -4.4999995
    %v144 = vmul.f32 %v128, -4.4999995
    %v145 = vmul.f32 %v129, -4.4999995
    %v146 = vmul.f32 %v130, -4.4999995
    %v147 = vmul.f32 %v131, -4.4999995
    %v148 = vmul.f32 %v132, -4.4999995
    %v149 = vmul.f32 %v133, -4.4999995
    %v150 = vmul.f32 %v134, -4.4999995
    %v151 = vmul.f32 %v135, -4.4999995
    %v152 = vmul.f32 %v136, -4.4999995
    %v153 = vmul.f32 %v137, -4.4999995
    %v154 = vmul.f32 %v138, -4.4999995
    %v155 = vmul.f32 %v139, %v123
    %v156 = vmul.f32 %v140, %v124
    %v157 = vmul.f32 %v141, %v125
    %v158 = vmul.f32 %v142, %v126
    %v159 = vmul.f32 %v143, %v127
    %v160 = vmul.f32 %v144, %v128
    %v161 = vmul.f32 %v145, %v129
    %v162 = vmul.f32 %v146, %v130
    %v163 = vmul.f32 %v147, %v131
    %v164 = vmul.f32 %v148, %v132
    %v165 = vmul.f32 %v149, %v133
    %v166 = vmul.f32 %v150, %v134
    %v167 = vmul.f32 %v151, %v135
    %v168 = vmul.f32 %v152, %v136
    %v169 = vmul.f32 %v153, %v137
    %v170 = vmul.f32 %v154, %v138
    %v171 = vmul.f32 %v155, 1.442695
    %v172 = vpow.pop %v171
    %v173 = vmul.f32 %v156, 1.442695
    %v174 = vpow.pop %v173
    %v175 = vmul.f32 %v157, 1.442695
    %v176 = vpow.pop %v175
    %v177 = vmul.f32 %v158, 1.442695
    %v178 = vpow.pop %v177
    %v179 = vmul.f32 %v159, 1.442695
    %v180 = vpow.pop %v179
    %v181 = vmul.f32 %v160, 1.442695
    %v182 = vpow.pop %v181
    %v183 = vmul.f32 %v161, 1.442695
    %v184 = vpow.pop %v183
    %v185 = vmul.f32 %v162, 1.442695
    %v186 = vpow.pop %v185
    %v187 = vmul.f32 %v163, 1.442695
    %v188 = vpow.pop %v187
    %v189 = vmul.f32 %v164, 1.442695
    %v190 = vpow.pop %v189
    %v191 = vmul.f32 %v165, 1.442695
    %v192 = vpow.pop %v191
    %v193 = vmul.f32 %v166, 1.442695
    %v194 = vpow.pop %v193
    %v195 = vmul.f32 %v167, 1.442695
    %v196 = vpow.pop %v195
    %v197 = vmul.f32 %v168, 1.442695
    %v198 = vpow.pop %v197
    %v199 = vmul.f32 %v169, 1.442695
    %v200 = vpow.pop %v199
    %v201 = vmul.f32 %v170, 1.442695
    %v202 = vpow.pop %v201
    %v203 = vlaneseq
    %v204 = vand.u32 %v203, 127
    %vm205 = vcmp.lt.s32.totalorder %v204, 16
    %v206 = vsel %vm205, %v172, 0.0
    %v207 = vsel %vm205, %v174, 0.0
    %v208 = vsel %vm205, %v176, 0.0
    %v209 = vsel %vm205, %v178, 0.0
    %v210 = vsel %vm205, %v180, 0.0
    %v211 = vsel %vm205, %v182, 0.0
    %v212 = vsel %vm205, %v184, 0.0
    %v213 = vsel %vm205, %v186, 0.0
    %v214 = vsel %vm205, %v188, 0.0
    %v215 = vsel %vm205, %v190, 0.0
    %v216 = vsel %vm205, %v192, 0.0
    %v217 = vsel %vm205, %v194, 0.0
    %v218 = vsel %vm205, %v196, 0.0
    %v219 = vsel %vm205, %v198, 0.0
    %v220 = vsel %vm205, %v200, 0.0
    %v221 = vsel %vm205, %v202, 0.0
    %v222 = vpack.c.bf16 %v206, %v206
    %v223 = vpack.c.bf16 %v207, %v207
    %v224 = vpack.c.bf16 %v208, %v208
    %v225 = vpack.c.bf16 %v209, %v209
    %v226 = vpack.c.bf16 %v210, %v210
    %v227 = vpack.c.bf16 %v211, %v211
    %v228 = vpack.c.bf16 %v212, %v212
    %v229 = vpack.c.bf16 %v213, %v213
    %v230 = vpack.c.bf16 %v214, %v214
    %v231 = vpack.c.bf16 %v215, %v215
    %v232 = vpack.c.bf16 %v216, %v216
    %v233 = vpack.c.bf16 %v217, %v217
    %v234 = vpack.c.bf16 %v218, %v218
    %v235 = vpack.c.bf16 %v219, %v219
    %v236 = vpack.c.bf16 %v220, %v220
    %v237 = vpack.c.bf16 %v221, %v221
    %238 = vst [vmem:[#allocation2] sm:$0xf] %v222
    %239 = vst [vmem:[#allocation2 + $0x4] sm:$0xf] %v223
    %240 = vst [vmem:[#allocation2 + $0x8] sm:$0xf] %v224
    %241 = vst [vmem:[#allocation2 + $0xc] sm:$0xf] %v225
    %242 = vst [vmem:[#allocation2 + $0x10] sm:$0xf] %v226
    %243 = vst [vmem:[#allocation2 + $0x14] sm:$0xf] %v227
    %244 = vst [vmem:[#allocation2 + $0x18] sm:$0xf] %v228
    %245 = vst [vmem:[#allocation2 + $0x1c] sm:$0xf] %v229
    %246 = vst [vmem:[#allocation2 + $0x20] sm:$0xf] %v230
    %247 = vst [vmem:[#allocation2 + $0x24] sm:$0xf] %v231
    %248 = vst [vmem:[#allocation2 + $0x28] sm:$0xf] %v232
    %249 = vst [vmem:[#allocation2 + $0x2c] sm:$0xf] %v233
    %250 = vst [vmem:[#allocation2 + $0x30] sm:$0xf] %v234
    %251 = vst [vmem:[#allocation2 + $0x34] sm:$0xf] %v235
    %252 = vst [vmem:[#allocation2 + $0x38] sm:$0xf] %v236
    %253 = vst [vmem:[#allocation2 + $0x3c] sm:$0xf] %v237
    %v254 = vld [vmem:[%s3] sm:$0xff]
    %v255 = vld [vmem:[%s3 + $0x8] sm:$0xff]
    %v256 = vld [vmem:[%s3 + $0x10] sm:$0xff]
    %v257 = vld [vmem:[%s3 + $0x18] sm:$0xff]
    %v258 = vld [vmem:[%s3 + $0x20] sm:$0xff]
    %v259 = vld [vmem:[%s3 + $0x28] sm:$0xff]
    %v260 = vld [vmem:[%s3 + $0x30] sm:$0xff]
    %v261 = vld [vmem:[%s3 + $0x38] sm:$0xff]
    %v262 = vld [vmem:[%s3 + $0x40] sm:$0xff]
    %v263 = vld [vmem:[%s3 + $0x48] sm:$0xff]
    %v264 = vld [vmem:[%s3 + $0x50] sm:$0xff]
    %v265 = vld [vmem:[%s3 + $0x58] sm:$0xff]
    %v266 = vld [vmem:[%s3 + $0x60] sm:$0xff]
    %v267 = vld [vmem:[%s3 + $0x68] sm:$0xff]
    %v268 = vld [vmem:[%s3 + $0x70] sm:$0xff]
    %v269 = vld [vmem:[%s3 + $0x78] sm:$0xff]
    %270 = vset.pattern.permute.xlu0 0
    %271 = vperm.xlu0 %270, %v254
    %v272 = vpop.permute.xlu0 %271
    %273 = vset.pattern.permute.xlu0 0
    %274 = vperm.xlu0 %273, %v255
    %v275 = vpop.permute.xlu0 %274
    %276 = vset.pattern.permute.xlu0 0
    %277 = vperm.xlu0 %276, %v256
    %v278 = vpop.permute.xlu0 %277
    %279 = vset.pattern.permute.xlu0 0
    %280 = vperm.xlu0 %279, %v257
    %v281 = vpop.permute.xlu0 %280
    %282 = vset.pattern.permute.xlu0 0
    %283 = vperm.xlu0 %282, %v258
    %v284 = vpop.permute.xlu0 %283
    %285 = vset.pattern.permute.xlu0 0
    %286 = vperm.xlu0 %285, %v259
    %v287 = vpop.permute.xlu0 %286
    %288 = vset.pattern.permute.xlu0 0
    %289 = vperm.xlu0 %288, %v260
    %v290 = vpop.permute.xlu0 %289
    %291 = vset.pattern.permute.xlu0 0
    %292 = vperm.xlu0 %291, %v261
    %v293 = vpop.permute.xlu0 %292
    %294 = vset.pattern.permute.xlu0 0
    %295 = vperm.xlu0 %294, %v262
    %v296 = vpop.permute.xlu0 %295
    %297 = vset.pattern.permute.xlu0 0
    %298 = vperm.xlu0 %297, %v263
    %v299 = vpop.permute.xlu0 %298
    %300 = vset.pattern.permute.xlu0 0
    %301 = vperm.xlu0 %300, %v264
    %v302 = vpop.permute.xlu0 %301
    %303 = vset.pattern.permute.xlu0 0
    %304 = vperm.xlu0 %303, %v265
    %v305 = vpop.permute.xlu0 %304
    %306 = vset.pattern.permute.xlu0 0
    %307 = vperm.xlu0 %306, %v266
    %v308 = vpop.permute.xlu0 %307
    %309 = vset.pattern.permute.xlu0 0
    %310 = vperm.xlu0 %309, %v267
    %v311 = vpop.permute.xlu0 %310
    %312 = vset.pattern.permute.xlu0 0
    %313 = vperm.xlu0 %312, %v268
    %v314 = vpop.permute.xlu0 %313
    %315 = vset.pattern.permute.xlu0 0
    %316 = vperm.xlu0 %315, %v269
    %v317 = vpop.permute.xlu0 %316
    %vm318 = vcmp.eq.s32.totalorder %v272, %v204
    %vm319 = vcmp.eq.s32.totalorder %v275, %v204
    %vm320 = vcmp.eq.s32.totalorder %v278, %v204
    %vm321 = vcmp.eq.s32.totalorder %v281, %v204
    %vm322 = vcmp.eq.s32.totalorder %v284, %v204
    %vm323 = vcmp.eq.s32.totalorder %v287, %v204
    %vm324 = vcmp.eq.s32.totalorder %v290, %v204
    %vm325 = vcmp.eq.s32.totalorder %v293, %v204
    %vm326 = vcmp.eq.s32.totalorder %v296, %v204
    %vm327 = vcmp.eq.s32.totalorder %v299, %v204
    %vm328 = vcmp.eq.s32.totalorder %v302, %v204
    %vm329 = vcmp.eq.s32.totalorder %v305, %v204
    %vm330 = vcmp.eq.s32.totalorder %v308, %v204
    %vm331 = vcmp.eq.s32.totalorder %v311, %v204
    %vm332 = vcmp.eq.s32.totalorder %v314, %v204
    %vm333 = vcmp.eq.s32.totalorder %v317, %v204
    %v334 = vsel %vm318, 1, 0
    %v335 = vsel %vm319, 1, 0
    %v336 = vsel %vm320, 1, 0
    %v337 = vsel %vm321, 1, 0
    %v338 = vsel %vm322, 1, 0
    %v339 = vsel %vm323, 1, 0
    %v340 = vsel %vm324, 1, 0
    %v341 = vsel %vm325, 1, 0
    %v342 = vsel %vm326, 1, 0
    %v343 = vsel %vm327, 1, 0
    %v344 = vsel %vm328, 1, 0
    %v345 = vsel %vm329, 1, 0
    %v346 = vsel %vm330, 1, 0
    %v347 = vsel %vm331, 1, 0
    %v348 = vsel %vm332, 1, 0
    %v349 = vsel %vm333, 1, 0
    %v350 = vcvt.s32.f32 %v334
    %v351 = vcvt.s32.f32 %v335
    %v352 = vcvt.s32.f32 %v336
    %v353 = vcvt.s32.f32 %v337
    %v354 = vcvt.s32.f32 %v338
    %v355 = vcvt.s32.f32 %v339
    %v356 = vcvt.s32.f32 %v340
    %v357 = vcvt.s32.f32 %v341
    %v358 = vcvt.s32.f32 %v342
    %v359 = vcvt.s32.f32 %v343
    %v360 = vcvt.s32.f32 %v344
    %v361 = vcvt.s32.f32 %v345
    %v362 = vcvt.s32.f32 %v346
    %v363 = vcvt.s32.f32 %v347
    %v364 = vcvt.s32.f32 %v348
    %v365 = vcvt.s32.f32 %v349
    %v366 = vpack.c.bf16 %v350, %v350
    %v367 = vpack.c.bf16 %v351, %v351
    %v368 = vpack.c.bf16 %v352, %v352
    %v369 = vpack.c.bf16 %v353, %v353
    %v370 = vpack.c.bf16 %v354, %v354
    %v371 = vpack.c.bf16 %v355, %v355
    %v372 = vpack.c.bf16 %v356, %v356
    %v373 = vpack.c.bf16 %v357, %v357
    %v374 = vpack.c.bf16 %v358, %v358
    %v375 = vpack.c.bf16 %v359, %v359
    %v376 = vpack.c.bf16 %v360, %v360
    %v377 = vpack.c.bf16 %v361, %v361
    %v378 = vpack.c.bf16 %v362, %v362
    %v379 = vpack.c.bf16 %v363, %v363
    %v380 = vpack.c.bf16 %v364, %v364
    %v381 = vpack.c.bf16 %v365, %v365
    %382 = vst [vmem:[#allocation4] sm:$0xf] %v366
    %383 = vst [vmem:[#allocation4 + $0x4] sm:$0xf] %v367
    %384 = vst [vmem:[#allocation4 + $0x8] sm:$0xf] %v368
    %385 = vst [vmem:[#allocation4 + $0xc] sm:$0xf] %v369
    %386 = vst [vmem:[#allocation4 + $0x10] sm:$0xf] %v370
    %387 = vst [vmem:[#allocation4 + $0x14] sm:$0xf] %v371
    %388 = vst [vmem:[#allocation4 + $0x18] sm:$0xf] %v372
    %389 = vst [vmem:[#allocation4 + $0x1c] sm:$0xf] %v373
    %390 = vst [vmem:[#allocation4 + $0x20] sm:$0xf] %v374
    %391 = vst [vmem:[#allocation4 + $0x24] sm:$0xf] %v375
    %392 = vst [vmem:[#allocation4 + $0x28] sm:$0xf] %v376
    %393 = vst [vmem:[#allocation4 + $0x2c] sm:$0xf] %v377
    %394 = vst [vmem:[#allocation4 + $0x30] sm:$0xf] %v378
    %395 = vst [vmem:[#allocation4 + $0x34] sm:$0xf] %v379
    %396 = vst [vmem:[#allocation4 + $0x38] sm:$0xf] %v380
    %397 = vst [vmem:[#allocation4 + $0x3c] sm:$0xf] %v381
    %v398 = vlaneseq
    %v399 = vshrl.u32 %v398, 7
    %v400 = vadd.s32 %v399, 8
    %v401 = vadd.s32 %v399, 16
    %v402 = vadd.s32 %v399, 24
    %v403 = vadd.s32 %v399, 32
    %v404 = vadd.s32 %v399, 40
    %v405 = vadd.s32 %v399, 48
    %v406 = vadd.s32 %v399, 56
    %v407 = vadd.s32 %v399, 64
    %v408 = vadd.s32 %v399, 72
    %v409 = vadd.s32 %v399, 80
    %v410 = vadd.s32 %v399, 88
    %v411 = vadd.s32 %v399, 96
    %v412 = vadd.s32 %v399, 104
    %v413 = vadd.s32 %v399, 112
    %v414 = vadd.s32 %v399, 120
    %v415 = vld [vmem:[%s2] sm:$0x1]
    %v416 = vperm.slane %v415, 0
    %vm417 = vcmp.eq.s32.totalorder %v399, %v416
    %vm418 = vcmp.eq.s32.totalorder %v400, %v416
    %vm419 = vcmp.eq.s32.totalorder %v401, %v416
    %vm420 = vcmp.eq.s32.totalorder %v402, %v416
    %vm421 = vcmp.eq.s32.totalorder %v403, %v416
    %vm422 = vcmp.eq.s32.totalorder %v404, %v416
    %vm423 = vcmp.eq.s32.totalorder %v405, %v416
    %vm424 = vcmp.eq.s32.totalorder %v406, %v416
    %vm425 = vcmp.eq.s32.totalorder %v407, %v416
    %vm426 = vcmp.eq.s32.totalorder %v408, %v416
    %vm427 = vcmp.eq.s32.totalorder %v409, %v416
    %vm428 = vcmp.eq.s32.totalorder %v410, %v416
    %vm429 = vcmp.eq.s32.totalorder %v411, %v416
    %vm430 = vcmp.eq.s32.totalorder %v412, %v416
    %vm431 = vcmp.eq.s32.totalorder %v413, %v416
    %vm432 = vcmp.eq.s32.totalorder %v414, %v416
    %v433 = vsel %vm417, 1, 0
    %v434 = vsel %vm418, 1, 0
    %v435 = vsel %vm419, 1, 0
    %v436 = vsel %vm420, 1, 0
    %v437 = vsel %vm421, 1, 0
    %v438 = vsel %vm422, 1, 0
    %v439 = vsel %vm423, 1, 0
    %v440 = vsel %vm424, 1, 0
    %v441 = vsel %vm425, 1, 0
    %v442 = vsel %vm426, 1, 0
    %v443 = vsel %vm427, 1, 0
    %v444 = vsel %vm428, 1, 0
    %v445 = vsel %vm429, 1, 0
    %v446 = vsel %vm430, 1, 0
    %v447 = vsel %vm431, 1, 0
    %v448 = vsel %vm432, 1, 0
    %v449 = vcvt.s32.f32 %v433
    %v450 = vcvt.s32.f32 %v434
    %v451 = vcvt.s32.f32 %v435
    %v452 = vcvt.s32.f32 %v436
    %v453 = vcvt.s32.f32 %v437
    %v454 = vcvt.s32.f32 %v438
    %v455 = vcvt.s32.f32 %v439
    %v456 = vcvt.s32.f32 %v440
    %v457 = vcvt.s32.f32 %v441
    %v458 = vcvt.s32.f32 %v442
    %v459 = vcvt.s32.f32 %v443
    %v460 = vcvt.s32.f32 %v444
    %v461 = vcvt.s32.f32 %v445
    %v462 = vcvt.s32.f32 %v446
    %v463 = vcvt.s32.f32 %v447
    %v464 = vcvt.s32.f32 %v448
    %v465 = vpack.c.bf16 %v449, %v449
    %v466 = vpack.c.bf16 %v450, %v450
    %v467 = vpack.c.bf16 %v451, %v451
    %v468 = vpack.c.bf16 %v452, %v452
    %v469 = vpack.c.bf16 %v453, %v453
    %v470 = vpack.c.bf16 %v454, %v454
    %v471 = vpack.c.bf16 %v455, %v455
    %v472 = vpack.c.bf16 %v456, %v456
    %v473 = vpack.c.bf16 %v457, %v457
    %v474 = vpack.c.bf16 %v458, %v458
    %v475 = vpack.c.bf16 %v459, %v459
    %v476 = vpack.c.bf16 %v460, %v460
    %v477 = vpack.c.bf16 %v461, %v461
    %v478 = vpack.c.bf16 %v462, %v462
    %v479 = vpack.c.bf16 %v463, %v463
    %v480 = vpack.c.bf16 %v464, %v464
    %481 = vst [vmem:[#allocation6] sm:$0xf] %v465
    %482 = vst [vmem:[#allocation6 + $0x4] sm:$0xf] %v466
    %483 = vst [vmem:[#allocation6 + $0x8] sm:$0xf] %v467
    %484 = vst [vmem:[#allocation6 + $0xc] sm:$0xf] %v468
    %485 = vst [vmem:[#allocation6 + $0x10] sm:$0xf] %v469
    %486 = vst [vmem:[#allocation6 + $0x14] sm:$0xf] %v470
    %487 = vst [vmem:[#allocation6 + $0x18] sm:$0xf] %v471
    %488 = vst [vmem:[#allocation6 + $0x1c] sm:$0xf] %v472
    %489 = vst [vmem:[#allocation6 + $0x20] sm:$0xf] %v473
    %490 = vst [vmem:[#allocation6 + $0x24] sm:$0xf] %v474
    %491 = vst [vmem:[#allocation6 + $0x28] sm:$0xf] %v475
    %492 = vst [vmem:[#allocation6 + $0x2c] sm:$0xf] %v476
    %493 = vst [vmem:[#allocation6 + $0x30] sm:$0xf] %v477
    %494 = vst [vmem:[#allocation6 + $0x34] sm:$0xf] %v478
    %495 = vst [vmem:[#allocation6 + $0x38] sm:$0xf] %v479
    %496 = vst [vmem:[#allocation6 + $0x3c] sm:$0xf] %v480
    %vm497 = vcmp.lt.f32.partialorder %v23, 5.0
    %vm498 = vcmp.lt.f32.partialorder %v24, 5.0
    %vm499 = vcmp.lt.f32.partialorder %v25, 5.0
    %vm500 = vcmp.lt.f32.partialorder %v26, 5.0
    %vm501 = vcmp.lt.f32.partialorder %v27, 5.0
    %vm502 = vcmp.lt.f32.partialorder %v28, 5.0
    %vm503 = vcmp.lt.f32.partialorder %v29, 5.0
    %vm504 = vcmp.lt.f32.partialorder %v30, 5.0
    %vm505 = vcmp.lt.f32.partialorder %v31, 5.0
    %vm506 = vcmp.lt.f32.partialorder %v32, 5.0
    %vm507 = vcmp.lt.f32.partialorder %v33, 5.0
    %vm508 = vcmp.lt.f32.partialorder %v34, 5.0
    %vm509 = vcmp.lt.f32.partialorder %v35, 5.0
    %vm510 = vcmp.lt.f32.partialorder %v36, 5.0
    %vm511 = vcmp.lt.f32.partialorder %v37, 5.0
    %vm512 = vcmp.lt.f32.partialorder %v38, 5.0
    %v513 = vmul.f32 %v23, 0.62831855
    %v514 = vmul.f32 %v24, 0.62831855
    %v515 = vmul.f32 %v25, 0.62831855
    %v516 = vmul.f32 %v26, 0.62831855
    %v517 = vmul.f32 %v27, 0.62831855
    %v518 = vmul.f32 %v28, 0.62831855
    %v519 = vmul.f32 %v29, 0.62831855
    %v520 = vmul.f32 %v30, 0.62831855
    %v521 = vmul.f32 %v31, 0.62831855
    %v522 = vmul.f32 %v32, 0.62831855
    %v523 = vmul.f32 %v33, 0.62831855
    %v524 = vmul.f32 %v34, 0.62831855
    %v525 = vmul.f32 %v35, 0.62831855
    %v526 = vmul.f32 %v36, 0.62831855
    %v527 = vmul.f32 %v37, 0.62831855
    %v528 = vmul.f32 %v38, 0.62831855
    %v529 = vand.u32 2147483647, %v513
    %vm530 = vcmp.le.f32.partialorder %v529, 0.7853982
    %vm531 = vcmp.lt.s32.totalorder %v513, 0
    %v532 = vand.u32 %v513, 2139095040
    %v533 = vshrl.u32 %v532, 23
    %v534 = vsub.s32 %v533, 127
    %v535 = vand.u32 2147483647, %v513
    %v536 = vand.u32 %v535, 8388607
    %v537 = vor.u32 %v536, 8388608
    %v538 = vsub.s32 0, %v537
    %v539 = vadd.s32 %v534, 1
    %vm540 = vcmp.gt.s32.totalorder %v539, 0
    %v541 = vsel %vm540, %v539, 0
    %v542 = vshrl.u32 %v541, 5
    %v543 = vand.u32 %v541, 31
    %v544 = vsub.s32 32, %v543
    %v545 = vshrl.u32 683565275, %v544
    %v546 = vshll.u32 683565275, %v543
    %v547 = vshrl.u32 2475754826, %v544
    %v548 = vor.u32 %v546, %v547
    %v549 = vshll.u32 2475754826, %v543
    %v550 = vshrl.u32 2131351028, %v544
    %v551 = vor.u32 %v549, %v550
    %v552 = vshll.u32 2131351028, %v543
    %v553 = vshrl.u32 2102212464, %v544
    %v554 = vor.u32 %v552, %v553
    %v555 = vshll.u32 2102212464, %v543
    %v556 = vshrl.u32 920167782, %v544
    %v557 = vor.u32 %v555, %v556
    %v558 = vshll.u32 920167782, %v543
    %v559 = vshrl.u32 1326507024, %v544
    %v560 = vor.u32 %v558, %v559
    %vm561 = vcmp.lt.s32.totalorder %v542, 1
    %vm562 = vcmp.lt.s32.totalorder %v542, 2
    %vm563 = vcmp.lt.s32.totalorder %v542, 3
    %vm564 = vcmp.lt.s32.totalorder %v542, 4
    %v565 = vsel %vm561, %v545, %v548
    %v566 = vsel %vm564, %v554, 2102212464
    %v567 = vsel %vm563, %v551, %v566
    %v568 = vsel %vm562, %v565, %v567
    %v569 = vsel %vm561, %v548, %v551
    %v570 = vsel %vm564, %v557, 920167782
    %v571 = vsel %vm563, %v554, %v570
    %v572 = vsel %vm562, %v569, %v571
    %v573 = vsel %vm561, %v551, %v554
    %v574 = vsel %vm564, %v560, 1326507024
    %v575 = vsel %vm563, %v557, %v574
    %v576 = vsel %vm562, %v573, %v575
    %v577 = vshll.u32 %v537, 8
    %v578 = vand.u32 %v577, 65535
    %v579 = vshrl.u32 %v577, 16
    %v580 = vand.u32 %v576, 65535
    %v581 = vshrl.u32 %v576, 16
    %v582 = vmul.u32 %v578, %v580
    %v583 = vmul.u32 %v578, %v581
    %v584 = vmul.u32 %v579, %v580
    %v585 = vmul.u32 %v579, %v581
    %v586 = vshll.u32 %v583, 16
    %v587 = vshrl.u32 %v583, 16
    %v588 = vshll.u32 %v584, 16
    %v589 = vshrl.u32 %v584, 16
    %vm590 = vc.u32 %v582, %v586
    %v591 = vsel %vm590, 1, 0
    %v592 = vadd.s32 %v582, %v586
    %v593 = vadd.s32 %v585, %v591
    %vm594 = vc.u32 %v592, %v588
    %v595 = vsel %vm594, 1, 0
    %v596 = vadd.s32 %v592, %v588
    %v597 = vadd.s32 %v593, %v595
    %v598 = vadd.s32 %v597, %v587
    %v599 = vadd.s32 %v598, %v589
    %v600 = vand.u32 %v577, 65535
    %v601 = vshrl.u32 %v577, 16
    %v602 = vand.u32 %v572, 65535
    %v603 = vshrl.u32 %v572, 16
    %v604 = vmul.u32 %v600, %v602
    %v605 = vmul.u32 %v600, %v603
    %v606 = vmul.u32 %v601, %v602
    %v607 = vmul.u32 %v601, %v603
    %v608 = vshll.u32 %v605, 16
    %v609 = vshrl.u32 %v605, 16
    %v610 = vshll.u32 %v606, 16
    %v611 = vshrl.u32 %v606, 16
    %vm612 = vc.u32 %v604, %v608
    %v613 = vsel %vm612, 1, 0
    %v614 = vadd.s32 %v604, %v608
    %v615 = vadd.s32 %v607, %v613
    %vm616 = vc.u32 %v614, %v610
    %v617 = vsel %vm616, 1, 0
    %v618 = vadd.s32 %v614, %v610
    %v619 = vadd.s32 %v615, %v617
    %v620 = vadd.s32 %v619, %v609
    %v621 = vadd.s32 %v620, %v611
    %v622 = vmul.u32 %v577, %v568
    %v623 = vadd.s32 %v599, %v618
    %vm624 = vc.u32 %v599, %v618
    %v625 = vadd.s32 %v621, 1
    %v626 = vsel %vm624, %v625, %v621
    %v627 = vadd.s32 %v622, %v626
    %v628 = vadd.s32 %v627, 536870912
    %v629 = vshrl.u32 %v628, 30
    %v630 = vshll.u32 %v629, 30
    %v631 = vsub.s32 %v627, %v630
    %vm632 = vcmp.lt.s32.totalorder %v631, 0
    %v633 = vsub.s32 0, %v631
    %v634 = vsel %vm632, %v633, %v631
    %v635 = vclz %v634
    %v636 = vsub.s32 %v635, 2
    %vm637 = vcmp.gt.s32.totalorder 0, %v636
    %v638 = vsel %vm637, 0, %v636
    %v639 = vsub.s32 32, %v638
    %v640 = vshll.u32 %v631, %v638
    %v641 = vshrl.u32 %v623, %v639
    %v642 = vor.u32 %v640, %v641
    %v643 = vsub.s32 4294967266, %v638
    %v644 = vadd.s32 %v643, 127
    %v645 = vshll.u32 %v644, 23
    %v646 = vor.u32 4788187, %v645
    %v647 = vand.u32 2147483647, %v646
    %v649 = vcvt.s32.f32 %v642
    %v650 = vmul.f32 %v649, %v647
    %v651 = vxor.u32 %v650, 2147483648
    %v652 = vsel %vm531, %v651, %v650
    %v653 = vsub.s32 4, %v629
    %v654 = vsel %vm531, %v653, %v629
    %v655 = vsel %vm530, %v513, %v652
    %v656 = vsel %vm530, 0, %v654
    %v657 = vmul.f32 %v655, %v655
    %v658 = vmul.f32 %v657, -0.001358992
    %v659 = vadd.f32 %v658, 0.041655596
    %v660 = vmul.f32 %v657, %v659
    %v661 = vadd.f32 %v660, -0.4999988
    %v662 = vmul.f32 %v657, %v661
    %v663 = vadd.f32 1.0, %v662
    %v664 = vmul.f32 %v655, %v655
    %v665 = vmul.f32 %v664, -0.00019511016
    %v666 = vadd.f32 %v665, 0.008332121
    %v667 = vmul.f32 %v664, %v666
    %v668 = vadd.f32 %v667, -0.16666654
    %v669 = vmul.f32 %v664, %v668
    %v670 = vadd.f32 %v669, 1.0
    %v671 = vmul.f32 %v670, %v655
    %vm672 = vweird.f32 %v513
    %v673 = vand.u32 %v656, 3
    %vm674 = vcmp.lt.s32.totalorder %v673, 2
    %vm675 = vcmp.eq.s32.totalorder %v673, 0
    %v676 = vxor.u32 %v671, 2147483648
    %v677 = vsel %vm675, %v663, %v676
    %vm678 = vcmp.eq.s32.totalorder %v673, 2
    %v679 = vxor.u32 %v663, 2147483648
    %v680 = vsel %vm678, %v679, %v671
    %v681 = vsel %vm674, %v677, %v680
    %v682 = vsel %vm672, nan, %v681
    %v683 = vand.u32 2147483647, %v514
    %vm684 = vcmp.le.f32.partialorder %v683, 0.7853982
    %vm685 = vcmp.lt.s32.totalorder %v514, 0
    %v686 = vand.u32 %v514, 2139095040
    %v687 = vshrl.u32 %v686, 23
    %v688 = vsub.s32 %v687, 127
    %v689 = vand.u32 2147483647, %v514
    %v690 = vand.u32 %v689, 8388607
    %v691 = vor.u32 %v690, 8388608
    %v692 = vsub.s32 0, %v691
    %v693 = vadd.s32 %v688, 1
    %vm694 = vcmp.gt.s32.totalorder %v693, 0
    %v695 = vsel %vm694, %v693, 0
    %v696 = vshrl.u32 %v695, 5
    %v697 = vand.u32 %v695, 31
    %v698 = vsub.s32 32, %v697
    %v699 = vshrl.u32 683565275, %v698
    %v700 = vshll.u32 683565275, %v697
    %v701 = vshrl.u32 2475754826, %v698
    %v702 = vor.u32 %v700, %v701
    %v703 = vshll.u32 2475754826, %v697
    %v704 = vshrl.u32 2131351028, %v698
    %v705 = vor.u32 %v703, %v704
    %v706 = vshll.u32 2131351028, %v697
    %v707 = vshrl.u32 2102212464, %v698
    %v708 = vor.u32 %v706, %v707
    %v709 = vshll.u32 2102212464, %v697
    %v710 = vshrl.u32 920167782, %v698
    %v711 = vor.u32 %v709, %v710
    %v712 = vshll.u32 920167782, %v697
    %v713 = vshrl.u32 1326507024, %v698
    %v714 = vor.u32 %v712, %v713
    %vm715 = vcmp.lt.s32.totalorder %v696, 1
    %vm716 = vcmp.lt.s32.totalorder %v696, 2
    %vm717 = vcmp.lt.s32.totalorder %v696, 3
    %vm718 = vcmp.lt.s32.totalorder %v696, 4
    %v719 = vsel %vm715, %v699, %v702
    %v720 = vsel %vm718, %v708, 2102212464
    %v721 = vsel %vm717, %v705, %v720
    %v722 = vsel %vm716, %v719, %v721
    %v723 = vsel %vm715, %v702, %v705
    %v724 = vsel %vm718, %v711, 920167782
    %v725 = vsel %vm717, %v708, %v724
    %v726 = vsel %vm716, %v723, %v725
    %v727 = vsel %vm715, %v705, %v708
    %v728 = vsel %vm718, %v714, 1326507024
    %v729 = vsel %vm717, %v711, %v728
    %v730 = vsel %vm716, %v727, %v729
    %v731 = vshll.u32 %v691, 8
    %v732 = vand.u32 %v731, 65535
    %v733 = vshrl.u32 %v731, 16
    %v734 = vand.u32 %v730, 65535
    %v735 = vshrl.u32 %v730, 16
    %v736 = vmul.u32 %v732, %v734
    %v737 = vmul.u32 %v732, %v735
    %v738 = vmul.u32 %v733, %v734
    %v739 = vmul.u32 %v733, %v735
    %v740 = vshll.u32 %v737, 16
    %v741 = vshrl.u32 %v737, 16
    %v742 = vshll.u32 %v738, 16
    %v743 = vshrl.u32 %v738, 16
    %vm744 = vc.u32 %v736, %v740
    %v745 = vsel %vm744, 1, 0
    %v746 = vadd.s32 %v736, %v740
    %v747 = vadd.s32 %v739, %v745
    %vm748 = vc.u32 %v746, %v742
    %v749 = vsel %vm748, 1, 0
    %v750 = vadd.s32 %v746, %v742
    %v751 = vadd.s32 %v747, %v749
    %v752 = vadd.s32 %v751, %v741
    %v753 = vadd.s32 %v752, %v743
    %v754 = vand.u32 %v731, 65535
    %v755 = vshrl.u32 %v731, 16
    %v756 = vand.u32 %v726, 65535
    %v757 = vshrl.u32 %v726, 16
    %v758 = vmul.u32 %v754, %v756
    %v759 = vmul.u32 %v754, %v757
    %v760 = vmul.u32 %v755, %v756
    %v761 = vmul.u32 %v755, %v757
    %v762 = vshll.u32 %v759, 16
    %v763 = vshrl.u32 %v759, 16
    %v764 = vshll.u32 %v760, 16
    %v765 = vshrl.u32 %v760, 16
    %vm766 = vc.u32 %v758, %v762
    %v767 = vsel %vm766, 1, 0
    %v768 = vadd.s32 %v758, %v762
    %v769 = vadd.s32 %v761, %v767
    %vm770 = vc.u32 %v768, %v764
    %v771 = vsel %vm770, 1, 0
    %v772 = vadd.s32 %v768, %v764
    %v773 = vadd.s32 %v769, %v771
    %v774 = vadd.s32 %v773, %v763
    %v775 = vadd.s32 %v774, %v765
    %v776 = vmul.u32 %v731, %v722
    %v777 = vadd.s32 %v753, %v772
    %vm778 = vc.u32 %v753, %v772
    %v779 = vadd.s32 %v775, 1
    %v780 = vsel %vm778, %v779, %v775
    %v781 = vadd.s32 %v776, %v780
    %v782 = vadd.s32 %v781, 536870912
    %v783 = vshrl.u32 %v782, 30
    %v784 = vshll.u32 %v783, 30
    %v785 = vsub.s32 %v781, %v784
    %vm786 = vcmp.lt.s32.totalorder %v785, 0
    %v787 = vsub.s32 0, %v785
    %v788 = vsel %vm786, %v787, %v785
    %v789 = vclz %v788
    %v790 = vsub.s32 %v789, 2
    %vm791 = vcmp.gt.s32.totalorder 0, %v790
    %v792 = vsel %vm791, 0, %v790
    %v793 = vsub.s32 32, %v792
    %v794 = vshll.u32 %v785, %v792
    %v795 = vshrl.u32 %v777, %v793
    %v796 = vor.u32 %v794, %v795
    %v797 = vsub.s32 4294967266, %v792
    %v798 = vadd.s32 %v797, 127
    %v799 = vshll.u32 %v798, 23
    %v800 = vor.u32 4788187, %v799
    %v801 = vand.u32 2147483647, %v800
    %v803 = vcvt.s32.f32 %v796
    %v804 = vmul.f32 %v803, %v801
    %v805 = vxor.u32 %v804, 2147483648
    %v806 = vsel %vm685, %v805, %v804
    %v807 = vsub.s32 4, %v783
    %v808 = vsel %vm685, %v807, %v783
    %v809 = vsel %vm684, %v514, %v806
    %v810 = vsel %vm684, 0, %v808
    %v811 = vmul.f32 %v809, %v809
    %v812 = vmul.f32 %v811, -0.001358992
    %v813 = vadd.f32 %v812, 0.041655596
    %v814 = vmul.f32 %v811, %v813
    %v815 = vadd.f32 %v814, -0.4999988
    %v816 = vmul.f32 %v811, %v815
    %v817 = vadd.f32 1.0, %v816
    %v818 = vmul.f32 %v809, %v809
    %v819 = vmul.f32 %v818, -0.00019511016
    %v820 = vadd.f32 %v819, 0.008332121
    %v821 = vmul.f32 %v818, %v820
    %v822 = vadd.f32 %v821, -0.16666654
    %v823 = vmul.f32 %v818, %v822
    %v824 = vadd.f32 %v823, 1.0
    %v825 = vmul.f32 %v824, %v809
    %vm826 = vweird.f32 %v514
    %v827 = vand.u32 %v810, 3
    %vm828 = vcmp.lt.s32.totalorder %v827, 2
    %vm829 = vcmp.eq.s32.totalorder %v827, 0
    %v830 = vxor.u32 %v825, 2147483648
    %v831 = vsel %vm829, %v817, %v830
    %vm832 = vcmp.eq.s32.totalorder %v827, 2
    %v833 = vxor.u32 %v817, 2147483648
    %v834 = vsel %vm832, %v833, %v825
    %v835 = vsel %vm828, %v831, %v834
    %v836 = vsel %vm826, nan, %v835
    %v837 = vand.u32 2147483647, %v515
    %vm838 = vcmp.le.f32.partialorder %v837, 0.7853982
    %vm839 = vcmp.lt.s32.totalorder %v515, 0
    %v840 = vand.u32 %v515, 2139095040
    %v841 = vshrl.u32 %v840, 23
    %v842 = vsub.s32 %v841, 127
    %v843 = vand.u32 2147483647, %v515
    %v844 = vand.u32 %v843, 8388607
    %v845 = vor.u32 %v844, 8388608
    %v846 = vsub.s32 0, %v845
    %v847 = vadd.s32 %v842, 1
    %vm848 = vcmp.gt.s32.totalorder %v847, 0
    %v849 = vsel %vm848, %v847, 0
    %v850 = vshrl.u32 %v849, 5
    %v851 = vand.u32 %v849, 31
    %v852 = vsub.s32 32, %v851
    %v853 = vshrl.u32 683565275, %v852
    %v854 = vshll.u32 683565275, %v851
    %v855 = vshrl.u32 2475754826, %v852
    %v856 = vor.u32 %v854, %v855
    %v857 = vshll.u32 2475754826, %v851
    %v858 = vshrl.u32 2131351028, %v852
    %v859 = vor.u32 %v857, %v858
    %v860 = vshll.u32 2131351028, %v851
    %v861 = vshrl.u32 2102212464, %v852
    %v862 = vor.u32 %v860, %v861
    %v863 = vshll.u32 2102212464, %v851
    %v864 = vshrl.u32 920167782, %v852
    %v865 = vor.u32 %v863, %v864
    %v866 = vshll.u32 920167782, %v851
    %v867 = vshrl.u32 1326507024, %v852
    %v868 = vor.u32 %v866, %v867
    %vm869 = vcmp.lt.s32.totalorder %v850, 1
    %vm870 = vcmp.lt.s32.totalorder %v850, 2
    %vm871 = vcmp.lt.s32.totalorder %v850, 3
    %vm872 = vcmp.lt.s32.totalorder %v850, 4
    %v873 = vsel %vm869, %v853, %v856
    %v874 = vsel %vm872, %v862, 2102212464
    %v875 = vsel %vm871, %v859, %v874
    %v876 = vsel %vm870, %v873, %v875
    %v877 = vsel %vm869, %v856, %v859
    %v878 = vsel %vm872, %v865, 920167782
    %v879 = vsel %vm871, %v862, %v878
    %v880 = vsel %vm870, %v877, %v879
    %v881 = vsel %vm869, %v859, %v862
    %v882 = vsel %vm872, %v868, 1326507024
    %v883 = vsel %vm871, %v865, %v882
    %v884 = vsel %vm870, %v881, %v883
    %v885 = vshll.u32 %v845, 8
    %v886 = vand.u32 %v885, 65535
    %v887 = vshrl.u32 %v885, 16
    %v888 = vand.u32 %v884, 65535
    %v889 = vshrl.u32 %v884, 16
    %v890 = vmul.u32 %v886, %v888
    %v891 = vmul.u32 %v886, %v889
    %v892 = vmul.u32 %v887, %v888
    %v893 = vmul.u32 %v887, %v889
    %v894 = vshll.u32 %v891, 16
    %v895 = vshrl.u32 %v891, 16
    %v896 = vshll.u32 %v892, 16
    %v897 = vshrl.u32 %v892, 16
    %vm898 = vc.u32 %v890, %v894
    %v899 = vsel %vm898, 1, 0
    %v900 = vadd.s32 %v890, %v894
    %v901 = vadd.s32 %v893, %v899
    %vm902 = vc.u32 %v900, %v896
    %v903 = vsel %vm902, 1, 0
    %v904 = vadd.s32 %v900, %v896
    %v905 = vadd.s32 %v901, %v903
    %v906 = vadd.s32 %v905, %v895
    %v907 = vadd.s32 %v906, %v897
    %v908 = vand.u32 %v885, 65535
    %v909 = vshrl.u32 %v885, 16
    %v910 = vand.u32 %v880, 65535
    %v911 = vshrl.u32 %v880, 16
    %v912 = vmul.u32 %v908, %v910
    %v913 = vmul.u32 %v908, %v911
    %v914 = vmul.u32 %v909, %v910
    %v915 = vmul.u32 %v909, %v911
    %v916 = vshll.u32 %v913, 16
    %v917 = vshrl.u32 %v913, 16
    %v918 = vshll.u32 %v914, 16
    %v919 = vshrl.u32 %v914, 16
    %vm920 = vc.u32 %v912, %v916
    %v921 = vsel %vm920, 1, 0
    %v922 = vadd.s32 %v912, %v916
    %v923 = vadd.s32 %v915, %v921
    %vm924 = vc.u32 %v922, %v918
    %v925 = vsel %vm924, 1, 0
    %v926 = vadd.s32 %v922, %v918
    %v927 = vadd.s32 %v923, %v925
    %v928 = vadd.s32 %v927, %v917
    %v929 = vadd.s32 %v928, %v919
    %v930 = vmul.u32 %v885, %v876
    %v931 = vadd.s32 %v907, %v926
    %vm932 = vc.u32 %v907, %v926
    %v933 = vadd.s32 %v929, 1
    %v934 = vsel %vm932, %v933, %v929
    %v935 = vadd.s32 %v930, %v934
    %v936 = vadd.s32 %v935, 536870912
    %v937 = vshrl.u32 %v936, 30
    %v938 = vshll.u32 %v937, 30
    %v939 = vsub.s32 %v935, %v938
    %vm940 = vcmp.lt.s32.totalorder %v939, 0
    %v941 = vsub.s32 0, %v939
    %v942 = vsel %vm940, %v941, %v939
    %v943 = vclz %v942
    %v944 = vsub.s32 %v943, 2
    %vm945 = vcmp.gt.s32.totalorder 0, %v944
    %v946 = vsel %vm945, 0, %v944
    %v947 = vsub.s32 32, %v946
    %v948 = vshll.u32 %v939, %v946
    %v949 = vshrl.u32 %v931, %v947
    %v950 = vor.u32 %v948, %v949
    %v951 = vsub.s32 4294967266, %v946
    %v952 = vadd.s32 %v951, 127
    %v953 = vshll.u32 %v952, 23
    %v954 = vor.u32 4788187, %v953
    %v955 = vand.u32 2147483647, %v954
    %v957 = vcvt.s32.f32 %v950
    %v958 = vmul.f32 %v957, %v955
    %v959 = vxor.u32 %v958, 2147483648
    %v960 = vsel %vm839, %v959, %v958
    %v961 = vsub.s32 4, %v937
    %v962 = vsel %vm839, %v961, %v937
    %v963 = vsel %vm838, %v515, %v960
    %v964 = vsel %vm838, 0, %v962
    %v965 = vmul.f32 %v963, %v963
    %v966 = vmul.f32 %v965, -0.001358992
    %v967 = vadd.f32 %v966, 0.041655596
    %v968 = vmul.f32 %v965, %v967
    %v969 = vadd.f32 %v968, -0.4999988
    %v970 = vmul.f32 %v965, %v969
    %v971 = vadd.f32 1.0, %v970
    %v972 = vmul.f32 %v963, %v963
    %v973 = vmul.f32 %v972, -0.00019511016
    %v974 = vadd.f32 %v973, 0.008332121
    %v975 = vmul.f32 %v972, %v974
    %v976 = vadd.f32 %v975, -0.16666654
    %v977 = vmul.f32 %v972, %v976
    %v978 = vadd.f32 %v977, 1.0
    %v979 = vmul.f32 %v978, %v963
    %vm980 = vweird.f32 %v515
    %v981 = vand.u32 %v964, 3
    %vm982 = vcmp.lt.s32.totalorder %v981, 2
    %vm983 = vcmp.eq.s32.totalorder %v981, 0
    %v984 = vxor.u32 %v979, 2147483648
    %v985 = vsel %vm983, %v971, %v984
    %vm986 = vcmp.eq.s32.totalorder %v981, 2
    %v987 = vxor.u32 %v971, 2147483648
    %v988 = vsel %vm986, %v987, %v979
    %v989 = vsel %vm982, %v985, %v988
    %v990 = vsel %vm980, nan, %v989
    %v991 = vand.u32 2147483647, %v516
    %vm992 = vcmp.le.f32.partialorder %v991, 0.7853982
    %vm993 = vcmp.lt.s32.totalorder %v516, 0
    %v994 = vand.u32 %v516, 2139095040
    %v995 = vshrl.u32 %v994, 23
    %v996 = vsub.s32 %v995, 127
    %v997 = vand.u32 2147483647, %v516
    %v998 = vand.u32 %v997, 8388607
    %v999 = vor.u32 %v998, 8388608
    %v1000 = vsub.s32 0, %v999
    %v1001 = vadd.s32 %v996, 1
    %vm1002 = vcmp.gt.s32.totalorder %v1001, 0
    %v1003 = vsel %vm1002, %v1001, 0
    %v1004 = vshrl.u32 %v1003, 5
    %v1005 = vand.u32 %v1003, 31
    %v1006 = vsub.s32 32, %v1005
    %v1007 = vshrl.u32 683565275, %v1006
    %v1008 = vshll.u32 683565275, %v1005
    %v1009 = vshrl.u32 2475754826, %v1006
    %v1010 = vor.u32 %v1008, %v1009
    %v1011 = vshll.u32 2475754826, %v1005
    %v1012 = vshrl.u32 2131351028, %v1006
    %v1013 = vor.u32 %v1011, %v1012
    %v1014 = vshll.u32 2131351028, %v1005
    %v1015 = vshrl.u32 2102212464, %v1006
    %v1016 = vor.u32 %v1014, %v1015
    %v1017 = vshll.u32 2102212464, %v1005
    %v1018 = vshrl.u32 920167782, %v1006
    %v1019 = vor.u32 %v1017, %v1018
    %v1020 = vshll.u32 920167782, %v1005
    %v1021 = vshrl.u32 1326507024, %v1006
    %v1022 = vor.u32 %v1020, %v1021
    %vm1023 = vcmp.lt.s32.totalorder %v1004, 1
    %vm1024 = vcmp.lt.s32.totalorder %v1004, 2
    %vm1025 = vcmp.lt.s32.totalorder %v1004, 3
    %vm1026 = vcmp.lt.s32.totalorder %v1004, 4
    %v1027 = vsel %vm1023, %v1007, %v1010
    %v1028 = vsel %vm1026, %v1016, 2102212464
    %v1029 = vsel %vm1025, %v1013, %v1028
    %v1030 = vsel %vm1024, %v1027, %v1029
    %v1031 = vsel %vm1023, %v1010, %v1013
    %v1032 = vsel %vm1026, %v1019, 920167782
    %v1033 = vsel %vm1025, %v1016, %v1032
    %v1034 = vsel %vm1024, %v1031, %v1033
    %v1035 = vsel %vm1023, %v1013, %v1016
    %v1036 = vsel %vm1026, %v1022, 1326507024
    %v1037 = vsel %vm1025, %v1019, %v1036
    %v1038 = vsel %vm1024, %v1035, %v1037
    %v1039 = vshll.u32 %v999, 8
    %v1040 = vand.u32 %v1039, 65535
    %v1041 = vshrl.u32 %v1039, 16
    %v1042 = vand.u32 %v1038, 65535
    %v1043 = vshrl.u32 %v1038, 16
    %v1044 = vmul.u32 %v1040, %v1042
    %v1045 = vmul.u32 %v1040, %v1043
    %v1046 = vmul.u32 %v1041, %v1042
    %v1047 = vmul.u32 %v1041, %v1043
    %v1048 = vshll.u32 %v1045, 16
    %v1049 = vshrl.u32 %v1045, 16
    %v1050 = vshll.u32 %v1046, 16
    %v1051 = vshrl.u32 %v1046, 16
    %vm1052 = vc.u32 %v1044, %v1048
    %v1053 = vsel %vm1052, 1, 0
    %v1054 = vadd.s32 %v1044, %v1048
    %v1055 = vadd.s32 %v1047, %v1053
    %vm1056 = vc.u32 %v1054, %v1050
    %v1057 = vsel %vm1056, 1, 0
    %v1058 = vadd.s32 %v1054, %v1050
    %v1059 = vadd.s32 %v1055, %v1057
    %v1060 = vadd.s32 %v1059, %v1049
    %v1061 = vadd.s32 %v1060, %v1051
    %v1062 = vand.u32 %v1039, 65535
    %v1063 = vshrl.u32 %v1039, 16
    %v1064 = vand.u32 %v1034, 65535
    %v1065 = vshrl.u32 %v1034, 16
    %v1066 = vmul.u32 %v1062, %v1064
    %v1067 = vmul.u32 %v1062, %v1065
    %v1068 = vmul.u32 %v1063, %v1064
    %v1069 = vmul.u32 %v1063, %v1065
    %v1070 = vshll.u32 %v1067, 16
    %v1071 = vshrl.u32 %v1067, 16
    %v1072 = vshll.u32 %v1068, 16
    %v1073 = vshrl.u32 %v1068, 16
    %vm1074 = vc.u32 %v1066, %v1070
    %v1075 = vsel %vm1074, 1, 0
    %v1076 = vadd.s32 %v1066, %v1070
    %v1077 = vadd.s32 %v1069, %v1075
    %vm1078 = vc.u32 %v1076, %v1072
    %v1079 = vsel %vm1078, 1, 0
    %v1080 = vadd.s32 %v1076, %v1072
    %v1081 = vadd.s32 %v1077, %v1079
    %v1082 = vadd.s32 %v1081, %v1071
    %v1083 = vadd.s32 %v1082, %v1073
    %v1084 = vmul.u32 %v1039, %v1030
    %v1085 = vadd.s32 %v1061, %v1080
    %vm1086 = vc.u32 %v1061, %v1080
    %v1087 = vadd.s32 %v1083, 1
    %v1088 = vsel %vm1086, %v1087, %v1083
    %v1089 = vadd.s32 %v1084, %v1088
    %v1090 = vadd.s32 %v1089, 536870912
    %v1091 = vshrl.u32 %v1090, 30
    %v1092 = vshll.u32 %v1091, 30
    %v1093 = vsub.s32 %v1089, %v1092
    %vm1094 = vcmp.lt.s32.totalorder %v1093, 0
    %v1095 = vsub.s32 0, %v1093
    %v1096 = vsel %vm1094, %v1095, %v1093
    %v1097 = vclz %v1096
    %v1098 = vsub.s32 %v1097, 2
    %vm1099 = vcmp.gt.s32.totalorder 0, %v1098
    %v1100 = vsel %vm1099, 0, %v1098
    %v1101 = vsub.s32 32, %v1100
    %v1102 = vshll.u32 %v1093, %v1100
    %v1103 = vshrl.u32 %v1085, %v1101
    %v1104 = vor.u32 %v1102, %v1103
    %v1105 = vsub.s32 4294967266, %v1100
    %v1106 = vadd.s32 %v1105, 127
    %v1107 = vshll.u32 %v1106, 23
    %v1108 = vor.u32 4788187, %v1107
    %v1109 = vand.u32 2147483647, %v1108
    %v1111 = vcvt.s32.f32 %v1104
    %v1112 = vmul.f32 %v1111, %v1109
    %v1113 = vxor.u32 %v1112, 2147483648
    %v1114 = vsel %vm993, %v1113, %v1112
    %v1115 = vsub.s32 4, %v1091
    %v1116 = vsel %vm993, %v1115, %v1091
    %v1117 = vsel %vm992, %v516, %v1114
    %v1118 = vsel %vm992, 0, %v1116
    %v1119 = vmul.f32 %v1117, %v1117
    %v1120 = vmul.f32 %v1119, -0.001358992
    %v1121 = vadd.f32 %v1120, 0.041655596
    %v1122 = vmul.f32 %v1119, %v1121
    %v1123 = vadd.f32 %v1122, -0.4999988
    %v1124 = vmul.f32 %v1119, %v1123
    %v1125 = vadd.f32 1.0, %v1124
    %v1126 = vmul.f32 %v1117, %v1117
    %v1127 = vmul.f32 %v1126, -0.00019511016
    %v1128 = vadd.f32 %v1127, 0.008332121
    %v1129 = vmul.f32 %v1126, %v1128
    %v1130 = vadd.f32 %v1129, -0.16666654
    %v1131 = vmul.f32 %v1126, %v1130
    %v1132 = vadd.f32 %v1131, 1.0
    %v1133 = vmul.f32 %v1132, %v1117
    %vm1134 = vweird.f32 %v516
    %v1135 = vand.u32 %v1118, 3
    %vm1136 = vcmp.lt.s32.totalorder %v1135, 2
    %vm1137 = vcmp.eq.s32.totalorder %v1135, 0
    %v1138 = vxor.u32 %v1133, 2147483648
    %v1139 = vsel %vm1137, %v1125, %v1138
    %vm1140 = vcmp.eq.s32.totalorder %v1135, 2
    %v1141 = vxor.u32 %v1125, 2147483648
    %v1142 = vsel %vm1140, %v1141, %v1133
    %v1143 = vsel %vm1136, %v1139, %v1142
    %v1144 = vsel %vm1134, nan, %v1143
    %v1145 = vand.u32 2147483647, %v517
    %vm1146 = vcmp.le.f32.partialorder %v1145, 0.7853982
    %vm1147 = vcmp.lt.s32.totalorder %v517, 0
    %v1148 = vand.u32 %v517, 2139095040
    %v1149 = vshrl.u32 %v1148, 23
    %v1150 = vsub.s32 %v1149, 127
    %v1151 = vand.u32 2147483647, %v517
    %v1152 = vand.u32 %v1151, 8388607
    %v1153 = vor.u32 %v1152, 8388608
    %v1154 = vsub.s32 0, %v1153
    %v1155 = vadd.s32 %v1150, 1
    %vm1156 = vcmp.gt.s32.totalorder %v1155, 0
    %v1157 = vsel %vm1156, %v1155, 0
    %v1158 = vshrl.u32 %v1157, 5
    %v1159 = vand.u32 %v1157, 31
    %v1160 = vsub.s32 32, %v1159
    %v1161 = vshrl.u32 683565275, %v1160
    %v1162 = vshll.u32 683565275, %v1159
    %v1163 = vshrl.u32 2475754826, %v1160
    %v1164 = vor.u32 %v1162, %v1163
    %v1165 = vshll.u32 2475754826, %v1159
    %v1166 = vshrl.u32 2131351028, %v1160
    %v1167 = vor.u32 %v1165, %v1166
    %v1168 = vshll.u32 2131351028, %v1159
    %v1169 = vshrl.u32 2102212464, %v1160
    %v1170 = vor.u32 %v1168, %v1169
    %v1171 = vshll.u32 2102212464, %v1159
    %v1172 = vshrl.u32 920167782, %v1160
    %v1173 = vor.u32 %v1171, %v1172
    %v1174 = vshll.u32 920167782, %v1159
    %v1175 = vshrl.u32 1326507024, %v1160
    %v1176 = vor.u32 %v1174, %v1175
    %vm1177 = vcmp.lt.s32.totalorder %v1158, 1
    %vm1178 = vcmp.lt.s32.totalorder %v1158, 2
    %vm1179 = vcmp.lt.s32.totalorder %v1158, 3
    %vm1180 = vcmp.lt.s32.totalorder %v1158, 4
    %v1181 = vsel %vm1177, %v1161, %v1164
    %v1182 = vsel %vm1180, %v1170, 2102212464
    %v1183 = vsel %vm1179, %v1167, %v1182
    %v1184 = vsel %vm1178, %v1181, %v1183
    %v1185 = vsel %vm1177, %v1164, %v1167
    %v1186 = vsel %vm1180, %v1173, 920167782
    %v1187 = vsel %vm1179, %v1170, %v1186
    %v1188 = vsel %vm1178, %v1185, %v1187
    %v1189 = vsel %vm1177, %v1167, %v1170
    %v1190 = vsel %vm1180, %v1176, 1326507024
    %v1191 = vsel %vm1179, %v1173, %v1190
    %v1192 = vsel %vm1178, %v1189, %v1191
    %v1193 = vshll.u32 %v1153, 8
    %v1194 = vand.u32 %v1193, 65535
    %v1195 = vshrl.u32 %v1193, 16
    %v1196 = vand.u32 %v1192, 65535
    %v1197 = vshrl.u32 %v1192, 16
    %v1198 = vmul.u32 %v1194, %v1196
    %v1199 = vmul.u32 %v1194, %v1197
    %v1200 = vmul.u32 %v1195, %v1196
    %v1201 = vmul.u32 %v1195, %v1197
    %v1202 = vshll.u32 %v1199, 16
    %v1203 = vshrl.u32 %v1199, 16
    %v1204 = vshll.u32 %v1200, 16
    %v1205 = vshrl.u32 %v1200, 16
    %vm1206 = vc.u32 %v1198, %v1202
    %v1207 = vsel %vm1206, 1, 0
    %v1208 = vadd.s32 %v1198, %v1202
    %v1209 = vadd.s32 %v1201, %v1207
    %vm1210 = vc.u32 %v1208, %v1204
    %v1211 = vsel %vm1210, 1, 0
    %v1212 = vadd.s32 %v1208, %v1204
    %v1213 = vadd.s32 %v1209, %v1211
    %v1214 = vadd.s32 %v1213, %v1203
    %v1215 = vadd.s32 %v1214, %v1205
    %v1216 = vand.u32 %v1193, 65535
    %v1217 = vshrl.u32 %v1193, 16
    %v1218 = vand.u32 %v1188, 65535
    %v1219 = vshrl.u32 %v1188, 16
    %v1220 = vmul.u32 %v1216, %v1218
    %v1221 = vmul.u32 %v1216, %v1219
    %v1222 = vmul.u32 %v1217, %v1218
    %v1223 = vmul.u32 %v1217, %v1219
    %v1224 = vshll.u32 %v1221, 16
    %v1225 = vshrl.u32 %v1221, 16
    %v1226 = vshll.u32 %v1222, 16
    %v1227 = vshrl.u32 %v1222, 16
    %vm1228 = vc.u32 %v1220, %v1224
    %v1229 = vsel %vm1228, 1, 0
    %v1230 = vadd.s32 %v1220, %v1224
    %v1231 = vadd.s32 %v1223, %v1229
    %vm1232 = vc.u32 %v1230, %v1226
    %v1233 = vsel %vm1232, 1, 0
    %v1234 = vadd.s32 %v1230, %v1226
    %v1235 = vadd.s32 %v1231, %v1233
    %v1236 = vadd.s32 %v1235, %v1225
    %v1237 = vadd.s32 %v1236, %v1227
    %v1238 = vmul.u32 %v1193, %v1184
    %v1239 = vadd.s32 %v1215, %v1234
    %vm1240 = vc.u32 %v1215, %v1234
    %v1241 = vadd.s32 %v1237, 1
    %v1242 = vsel %vm1240, %v1241, %v1237
    %v1243 = vadd.s32 %v1238, %v1242
    %v1244 = vadd.s32 %v1243, 536870912
    %v1245 = vshrl.u32 %v1244, 30
    %v1246 = vshll.u32 %v1245, 30
    %v1247 = vsub.s32 %v1243, %v1246
    %vm1248 = vcmp.lt.s32.totalorder %v1247, 0
    %v1249 = vsub.s32 0, %v1247
    %v1250 = vsel %vm1248, %v1249, %v1247
    %v1251 = vclz %v1250
    %v1252 = vsub.s32 %v1251, 2
    %vm1253 = vcmp.gt.s32.totalorder 0, %v1252
    %v1254 = vsel %vm1253, 0, %v1252
    %v1255 = vsub.s32 32, %v1254
    %v1256 = vshll.u32 %v1247, %v1254
    %v1257 = vshrl.u32 %v1239, %v1255
    %v1258 = vor.u32 %v1256, %v1257
    %v1259 = vsub.s32 4294967266, %v1254
    %v1260 = vadd.s32 %v1259, 127
    %v1261 = vshll.u32 %v1260, 23
    %v1262 = vor.u32 4788187, %v1261
    %v1263 = vand.u32 2147483647, %v1262
    %v1265 = vcvt.s32.f32 %v1258
    %v1266 = vmul.f32 %v1265, %v1263
    %v1267 = vxor.u32 %v1266, 2147483648
    %v1268 = vsel %vm1147, %v1267, %v1266
    %v1269 = vsub.s32 4, %v1245
    %v1270 = vsel %vm1147, %v1269, %v1245
    %v1271 = vsel %vm1146, %v517, %v1268
    %v1272 = vsel %vm1146, 0, %v1270
    %v1273 = vmul.f32 %v1271, %v1271
    %v1274 = vmul.f32 %v1273, -0.001358992
    %v1275 = vadd.f32 %v1274, 0.041655596
    %v1276 = vmul.f32 %v1273, %v1275
    %v1277 = vadd.f32 %v1276, -0.4999988
    %v1278 = vmul.f32 %v1273, %v1277
    %v1279 = vadd.f32 1.0, %v1278
    %v1280 = vmul.f32 %v1271, %v1271
    %v1281 = vmul.f32 %v1280, -0.00019511016
    %v1282 = vadd.f32 %v1281, 0.008332121
    %v1283 = vmul.f32 %v1280, %v1282
    %v1284 = vadd.f32 %v1283, -0.16666654
    %v1285 = vmul.f32 %v1280, %v1284
    %v1286 = vadd.f32 %v1285, 1.0
    %v1287 = vmul.f32 %v1286, %v1271
    %vm1288 = vweird.f32 %v517
    %v1289 = vand.u32 %v1272, 3
    %vm1290 = vcmp.lt.s32.totalorder %v1289, 2
    %vm1291 = vcmp.eq.s32.totalorder %v1289, 0
    %v1292 = vxor.u32 %v1287, 2147483648
    %v1293 = vsel %vm1291, %v1279, %v1292
    %vm1294 = vcmp.eq.s32.totalorder %v1289, 2
    %v1295 = vxor.u32 %v1279, 2147483648
    %v1296 = vsel %vm1294, %v1295, %v1287
    %v1297 = vsel %vm1290, %v1293, %v1296
    %v1298 = vsel %vm1288, nan, %v1297
    %v1299 = vand.u32 2147483647, %v518
    %vm1300 = vcmp.le.f32.partialorder %v1299, 0.7853982
    %vm1301 = vcmp.lt.s32.totalorder %v518, 0
    %v1302 = vand.u32 %v518, 2139095040
    %v1303 = vshrl.u32 %v1302, 23
    %v1304 = vsub.s32 %v1303, 127
    %v1305 = vand.u32 2147483647, %v518
    %v1306 = vand.u32 %v1305, 8388607
    %v1307 = vor.u32 %v1306, 8388608
    %v1308 = vsub.s32 0, %v1307
    %v1309 = vadd.s32 %v1304, 1
    %vm1310 = vcmp.gt.s32.totalorder %v1309, 0
    %v1311 = vsel %vm1310, %v1309, 0
    %v1312 = vshrl.u32 %v1311, 5
    %v1313 = vand.u32 %v1311, 31
    %v1314 = vsub.s32 32, %v1313
    %v1315 = vshrl.u32 683565275, %v1314
    %v1316 = vshll.u32 683565275, %v1313
    %v1317 = vshrl.u32 2475754826, %v1314
    %v1318 = vor.u32 %v1316, %v1317
    %v1319 = vshll.u32 2475754826, %v1313
    %v1320 = vshrl.u32 2131351028, %v1314
    %v1321 = vor.u32 %v1319, %v1320
    %v1322 = vshll.u32 2131351028, %v1313
    %v1323 = vshrl.u32 2102212464, %v1314
    %v1324 = vor.u32 %v1322, %v1323
    %v1325 = vshll.u32 2102212464, %v1313
    %v1326 = vshrl.u32 920167782, %v1314
    %v1327 = vor.u32 %v1325, %v1326
    %v1328 = vshll.u32 920167782, %v1313
    %v1329 = vshrl.u32 1326507024, %v1314
    %v1330 = vor.u32 %v1328, %v1329
    %vm1331 = vcmp.lt.s32.totalorder %v1312, 1
    %vm1332 = vcmp.lt.s32.totalorder %v1312, 2
    %vm1333 = vcmp.lt.s32.totalorder %v1312, 3
    %vm1334 = vcmp.lt.s32.totalorder %v1312, 4
    %v1335 = vsel %vm1331, %v1315, %v1318
    %v1336 = vsel %vm1334, %v1324, 2102212464
    %v1337 = vsel %vm1333, %v1321, %v1336
    %v1338 = vsel %vm1332, %v1335, %v1337
    %v1339 = vsel %vm1331, %v1318, %v1321
    %v1340 = vsel %vm1334, %v1327, 920167782
    %v1341 = vsel %vm1333, %v1324, %v1340
    %v1342 = vsel %vm1332, %v1339, %v1341
    %v1343 = vsel %vm1331, %v1321, %v1324
    %v1344 = vsel %vm1334, %v1330, 1326507024
    %v1345 = vsel %vm1333, %v1327, %v1344
    %v1346 = vsel %vm1332, %v1343, %v1345
    %v1347 = vshll.u32 %v1307, 8
    %v1348 = vand.u32 %v1347, 65535
    %v1349 = vshrl.u32 %v1347, 16
    %v1350 = vand.u32 %v1346, 65535
    %v1351 = vshrl.u32 %v1346, 16
    %v1352 = vmul.u32 %v1348, %v1350
    %v1353 = vmul.u32 %v1348, %v1351
    %v1354 = vmul.u32 %v1349, %v1350
    %v1355 = vmul.u32 %v1349, %v1351
    %v1356 = vshll.u32 %v1353, 16
    %v1357 = vshrl.u32 %v1353, 16
    %v1358 = vshll.u32 %v1354, 16
    %v1359 = vshrl.u32 %v1354, 16
    %vm1360 = vc.u32 %v1352, %v1356
    %v1361 = vsel %vm1360, 1, 0
    %v1362 = vadd.s32 %v1352, %v1356
    %v1363 = vadd.s32 %v1355, %v1361
    %vm1364 = vc.u32 %v1362, %v1358
    %v1365 = vsel %vm1364, 1, 0
    %v1366 = vadd.s32 %v1362, %v1358
    %v1367 = vadd.s32 %v1363, %v1365
    %v1368 = vadd.s32 %v1367, %v1357
    %v1369 = vadd.s32 %v1368, %v1359
    %v1370 = vand.u32 %v1347, 65535
    %v1371 = vshrl.u32 %v1347, 16
    %v1372 = vand.u32 %v1342, 65535
    %v1373 = vshrl.u32 %v1342, 16
    %v1374 = vmul.u32 %v1370, %v1372
    %v1375 = vmul.u32 %v1370, %v1373
    %v1376 = vmul.u32 %v1371, %v1372
    %v1377 = vmul.u32 %v1371, %v1373
    %v1378 = vshll.u32 %v1375, 16
    %v1379 = vshrl.u32 %v1375, 16
    %v1380 = vshll.u32 %v1376, 16
    %v1381 = vshrl.u32 %v1376, 16
    %vm1382 = vc.u32 %v1374, %v1378
    %v1383 = vsel %vm1382, 1, 0
    %v1384 = vadd.s32 %v1374, %v1378
    %v1385 = vadd.s32 %v1377, %v1383
    %vm1386 = vc.u32 %v1384, %v1380
    %v1387 = vsel %vm1386, 1, 0
    %v1388 = vadd.s32 %v1384, %v1380
    %v1389 = vadd.s32 %v1385, %v1387
    %v1390 = vadd.s32 %v1389, %v1379
    %v1391 = vadd.s32 %v1390, %v1381
    %v1392 = vmul.u32 %v1347, %v1338
    %v1393 = vadd.s32 %v1369, %v1388
    %vm1394 = vc.u32 %v1369, %v1388
    %v1395 = vadd.s32 %v1391, 1
    %v1396 = vsel %vm1394, %v1395, %v1391
    %v1397 = vadd.s32 %v1392, %v1396
    %v1398 = vadd.s32 %v1397, 536870912
    %v1399 = vshrl.u32 %v1398, 30
    %v1400 = vshll.u32 %v1399, 30
    %v1401 = vsub.s32 %v1397, %v1400
    %vm1402 = vcmp.lt.s32.totalorder %v1401, 0
    %v1403 = vsub.s32 0, %v1401
    %v1404 = vsel %vm1402, %v1403, %v1401
    %v1405 = vclz %v1404
    %v1406 = vsub.s32 %v1405, 2
    %vm1407 = vcmp.gt.s32.totalorder 0, %v1406
    %v1408 = vsel %vm1407, 0, %v1406
    %v1409 = vsub.s32 32, %v1408
    %v1410 = vshll.u32 %v1401, %v1408
    %v1411 = vshrl.u32 %v1393, %v1409
    %v1412 = vor.u32 %v1410, %v1411
    %v1413 = vsub.s32 4294967266, %v1408
    %v1414 = vadd.s32 %v1413, 127
    %v1415 = vshll.u32 %v1414, 23
    %v1416 = vor.u32 4788187, %v1415
    %v1417 = vand.u32 2147483647, %v1416
    %v1419 = vcvt.s32.f32 %v1412
    %v1420 = vmul.f32 %v1419, %v1417
    %v1421 = vxor.u32 %v1420, 2147483648
    %v1422 = vsel %vm1301, %v1421, %v1420
    %v1423 = vsub.s32 4, %v1399
    %v1424 = vsel %vm1301, %v1423, %v1399
    %v1425 = vsel %vm1300, %v518, %v1422
    %v1426 = vsel %vm1300, 0, %v1424
    %v1427 = vmul.f32 %v1425, %v1425
    %v1428 = vmul.f32 %v1427, -0.001358992
    %v1429 = vadd.f32 %v1428, 0.041655596
    %v1430 = vmul.f32 %v1427, %v1429
    %v1431 = vadd.f32 %v1430, -0.4999988
    %v1432 = vmul.f32 %v1427, %v1431
    %v1433 = vadd.f32 1.0, %v1432
    %v1434 = vmul.f32 %v1425, %v1425
    %v1435 = vmul.f32 %v1434, -0.00019511016
    %v1436 = vadd.f32 %v1435, 0.008332121
    %v1437 = vmul.f32 %v1434, %v1436
    %v1438 = vadd.f32 %v1437, -0.16666654
    %v1439 = vmul.f32 %v1434, %v1438
    %v1440 = vadd.f32 %v1439, 1.0
    %v1441 = vmul.f32 %v1440, %v1425
    %vm1442 = vweird.f32 %v518
    %v1443 = vand.u32 %v1426, 3
    %vm1444 = vcmp.lt.s32.totalorder %v1443, 2
    %vm1445 = vcmp.eq.s32.totalorder %v1443, 0
    %v1446 = vxor.u32 %v1441, 2147483648
    %v1447 = vsel %vm1445, %v1433, %v1446
    %vm1448 = vcmp.eq.s32.totalorder %v1443, 2
    %v1449 = vxor.u32 %v1433, 2147483648
    %v1450 = vsel %vm1448, %v1449, %v1441
    %v1451 = vsel %vm1444, %v1447, %v1450
    %v1452 = vsel %vm1442, nan, %v1451
    %v1453 = vand.u32 2147483647, %v519
    %vm1454 = vcmp.le.f32.partialorder %v1453, 0.7853982
    %vm1455 = vcmp.lt.s32.totalorder %v519, 0
    %v1456 = vand.u32 %v519, 2139095040
    %v1457 = vshrl.u32 %v1456, 23
    %v1458 = vsub.s32 %v1457, 127
    %v1459 = vand.u32 2147483647, %v519
    %v1460 = vand.u32 %v1459, 8388607
    %v1461 = vor.u32 %v1460, 8388608
    %v1462 = vsub.s32 0, %v1461
    %v1463 = vadd.s32 %v1458, 1
    %vm1464 = vcmp.gt.s32.totalorder %v1463, 0
    %v1465 = vsel %vm1464, %v1463, 0
    %v1466 = vshrl.u32 %v1465, 5
    %v1467 = vand.u32 %v1465, 31
    %v1468 = vsub.s32 32, %v1467
    %v1469 = vshrl.u32 683565275, %v1468
    %v1470 = vshll.u32 683565275, %v1467
    %v1471 = vshrl.u32 2475754826, %v1468
    %v1472 = vor.u32 %v1470, %v1471
    %v1473 = vshll.u32 2475754826, %v1467
    %v1474 = vshrl.u32 2131351028, %v1468
    %v1475 = vor.u32 %v1473, %v1474
    %v1476 = vshll.u32 2131351028, %v1467
    %v1477 = vshrl.u32 2102212464, %v1468
    %v1478 = vor.u32 %v1476, %v1477
    %v1479 = vshll.u32 2102212464, %v1467
    %v1480 = vshrl.u32 920167782, %v1468
    %v1481 = vor.u32 %v1479, %v1480
    %v1482 = vshll.u32 920167782, %v1467
    %v1483 = vshrl.u32 1326507024, %v1468
    %v1484 = vor.u32 %v1482, %v1483
    %vm1485 = vcmp.lt.s32.totalorder %v1466, 1
    %vm1486 = vcmp.lt.s32.totalorder %v1466, 2
    %vm1487 = vcmp.lt.s32.totalorder %v1466, 3
    %vm1488 = vcmp.lt.s32.totalorder %v1466, 4
    %v1489 = vsel %vm1485, %v1469, %v1472
    %v1490 = vsel %vm1488, %v1478, 2102212464
    %v1491 = vsel %vm1487, %v1475, %v1490
    %v1492 = vsel %vm1486, %v1489, %v1491
    %v1493 = vsel %vm1485, %v1472, %v1475
    %v1494 = vsel %vm1488, %v1481, 920167782
    %v1495 = vsel %vm1487, %v1478, %v1494
    %v1496 = vsel %vm1486, %v1493, %v1495
    %v1497 = vsel %vm1485, %v1475, %v1478
    %v1498 = vsel %vm1488, %v1484, 1326507024
    %v1499 = vsel %vm1487, %v1481, %v1498
    %v1500 = vsel %vm1486, %v1497, %v1499
    %v1501 = vshll.u32 %v1461, 8
    %v1502 = vand.u32 %v1501, 65535
    %v1503 = vshrl.u32 %v1501, 16
    %v1504 = vand.u32 %v1500, 65535
    %v1505 = vshrl.u32 %v1500, 16
    %v1506 = vmul.u32 %v1502, %v1504
    %v1507 = vmul.u32 %v1502, %v1505
    %v1508 = vmul.u32 %v1503, %v1504
    %v1509 = vmul.u32 %v1503, %v1505
    %v1510 = vshll.u32 %v1507, 16
    %v1511 = vshrl.u32 %v1507, 16
    %v1512 = vshll.u32 %v1508, 16
    %v1513 = vshrl.u32 %v1508, 16
    %vm1514 = vc.u32 %v1506, %v1510
    %v1515 = vsel %vm1514, 1, 0
    %v1516 = vadd.s32 %v1506, %v1510
    %v1517 = vadd.s32 %v1509, %v1515
    %vm1518 = vc.u32 %v1516, %v1512
    %v1519 = vsel %vm1518, 1, 0
    %v1520 = vadd.s32 %v1516, %v1512
    %v1521 = vadd.s32 %v1517, %v1519
    %v1522 = vadd.s32 %v1521, %v1511
    %v1523 = vadd.s32 %v1522, %v1513
    %v1524 = vand.u32 %v1501, 65535
    %v1525 = vshrl.u32 %v1501, 16
    %v1526 = vand.u32 %v1496, 65535
    %v1527 = vshrl.u32 %v1496, 16
    %v1528 = vmul.u32 %v1524, %v1526
    %v1529 = vmul.u32 %v1524, %v1527
    %v1530 = vmul.u32 %v1525, %v1526
    %v1531 = vmul.u32 %v1525, %v1527
    %v1532 = vshll.u32 %v1529, 16
    %v1533 = vshrl.u32 %v1529, 16
    %v1534 = vshll.u32 %v1530, 16
    %v1535 = vshrl.u32 %v1530, 16
    %vm1536 = vc.u32 %v1528, %v1532
    %v1537 = vsel %vm1536, 1, 0
    %v1538 = vadd.s32 %v1528, %v1532
    %v1539 = vadd.s32 %v1531, %v1537
    %vm1540 = vc.u32 %v1538, %v1534
    %v1541 = vsel %vm1540, 1, 0
    %v1542 = vadd.s32 %v1538, %v1534
    %v1543 = vadd.s32 %v1539, %v1541
    %v1544 = vadd.s32 %v1543, %v1533
    %v1545 = vadd.s32 %v1544, %v1535
    %v1546 = vmul.u32 %v1501, %v1492
    %v1547 = vadd.s32 %v1523, %v1542
    %vm1548 = vc.u32 %v1523, %v1542
    %v1549 = vadd.s32 %v1545, 1
    %v1550 = vsel %vm1548, %v1549, %v1545
    %v1551 = vadd.s32 %v1546, %v1550
    %v1552 = vadd.s32 %v1551, 536870912
    %v1553 = vshrl.u32 %v1552, 30
    %v1554 = vshll.u32 %v1553, 30
    %v1555 = vsub.s32 %v1551, %v1554
    %vm1556 = vcmp.lt.s32.totalorder %v1555, 0
    %v1557 = vsub.s32 0, %v1555
    %v1558 = vsel %vm1556, %v1557, %v1555
    %v1559 = vclz %v1558
    %v1560 = vsub.s32 %v1559, 2
    %vm1561 = vcmp.gt.s32.totalorder 0, %v1560
    %v1562 = vsel %vm1561, 0, %v1560
    %v1563 = vsub.s32 32, %v1562
    %v1564 = vshll.u32 %v1555, %v1562
    %v1565 = vshrl.u32 %v1547, %v1563
    %v1566 = vor.u32 %v1564, %v1565
    %v1567 = vsub.s32 4294967266, %v1562
    %v1568 = vadd.s32 %v1567, 127
    %v1569 = vshll.u32 %v1568, 23
    %v1570 = vor.u32 4788187, %v1569
    %v1571 = vand.u32 2147483647, %v1570
    %v1573 = vcvt.s32.f32 %v1566
    %v1574 = vmul.f32 %v1573, %v1571
    %v1575 = vxor.u32 %v1574, 2147483648
    %v1576 = vsel %vm1455, %v1575, %v1574
    %v1577 = vsub.s32 4, %v1553
    %v1578 = vsel %vm1455, %v1577, %v1553
    %v1579 = vsel %vm1454, %v519, %v1576
    %v1580 = vsel %vm1454, 0, %v1578
    %v1581 = vmul.f32 %v1579, %v1579
    %v1582 = vmul.f32 %v1581, -0.001358992
    %v1583 = vadd.f32 %v1582, 0.041655596
    %v1584 = vmul.f32 %v1581, %v1583
    %v1585 = vadd.f32 %v1584, -0.4999988
    %v1586 = vmul.f32 %v1581, %v1585
    %v1587 = vadd.f32 1.0, %v1586
    %v1588 = vmul.f32 %v1579, %v1579
    %v1589 = vmul.f32 %v1588, -0.00019511016
    %v1590 = vadd.f32 %v1589, 0.008332121
    %v1591 = vmul.f32 %v1588, %v1590
    %v1592 = vadd.f32 %v1591, -0.16666654
    %v1593 = vmul.f32 %v1588, %v1592
    %v1594 = vadd.f32 %v1593, 1.0
    %v1595 = vmul.f32 %v1594, %v1579
    %vm1596 = vweird.f32 %v519
    %v1597 = vand.u32 %v1580, 3
    %vm1598 = vcmp.lt.s32.totalorder %v1597, 2
    %vm1599 = vcmp.eq.s32.totalorder %v1597, 0
    %v1600 = vxor.u32 %v1595, 2147483648
    %v1601 = vsel %vm1599, %v1587, %v1600
    %vm1602 = vcmp.eq.s32.totalorder %v1597, 2
    %v1603 = vxor.u32 %v1587, 2147483648
    %v1604 = vsel %vm1602, %v1603, %v1595
    %v1605 = vsel %vm1598, %v1601, %v1604
    %v1606 = vsel %vm1596, nan, %v1605
    %v1607 = vand.u32 2147483647, %v520
    %vm1608 = vcmp.le.f32.partialorder %v1607, 0.7853982
    %vm1609 = vcmp.lt.s32.totalorder %v520, 0
    %v1610 = vand.u32 %v520, 2139095040
    %v1611 = vshrl.u32 %v1610, 23
    %v1612 = vsub.s32 %v1611, 127
    %v1613 = vand.u32 2147483647, %v520
    %v1614 = vand.u32 %v1613, 8388607
    %v1615 = vor.u32 %v1614, 8388608
    %v1616 = vsub.s32 0, %v1615
    %v1617 = vadd.s32 %v1612, 1
    %vm1618 = vcmp.gt.s32.totalorder %v1617, 0
    %v1619 = vsel %vm1618, %v1617, 0
    %v1620 = vshrl.u32 %v1619, 5
    %v1621 = vand.u32 %v1619, 31
    %v1622 = vsub.s32 32, %v1621
    %v1623 = vshrl.u32 683565275, %v1622
    %v1624 = vshll.u32 683565275, %v1621
    %v1625 = vshrl.u32 2475754826, %v1622
    %v1626 = vor.u32 %v1624, %v1625
    %v1627 = vshll.u32 2475754826, %v1621
    %v1628 = vshrl.u32 2131351028, %v1622
    %v1629 = vor.u32 %v1627, %v1628
    %v1630 = vshll.u32 2131351028, %v1621
    %v1631 = vshrl.u32 2102212464, %v1622
    %v1632 = vor.u32 %v1630, %v1631
    %v1633 = vshll.u32 2102212464, %v1621
    %v1634 = vshrl.u32 920167782, %v1622
    %v1635 = vor.u32 %v1633, %v1634
    %v1636 = vshll.u32 920167782, %v1621
    %v1637 = vshrl.u32 1326507024, %v1622
    %v1638 = vor.u32 %v1636, %v1637
    %vm1639 = vcmp.lt.s32.totalorder %v1620, 1
    %vm1640 = vcmp.lt.s32.totalorder %v1620, 2
    %vm1641 = vcmp.lt.s32.totalorder %v1620, 3
    %vm1642 = vcmp.lt.s32.totalorder %v1620, 4
    %v1643 = vsel %vm1639, %v1623, %v1626
    %v1644 = vsel %vm1642, %v1632, 2102212464
    %v1645 = vsel %vm1641, %v1629, %v1644
    %v1646 = vsel %vm1640, %v1643, %v1645
    %v1647 = vsel %vm1639, %v1626, %v1629
    %v1648 = vsel %vm1642, %v1635, 920167782
    %v1649 = vsel %vm1641, %v1632, %v1648
    %v1650 = vsel %vm1640, %v1647, %v1649
    %v1651 = vsel %vm1639, %v1629, %v1632
    %v1652 = vsel %vm1642, %v1638, 1326507024
    %v1653 = vsel %vm1641, %v1635, %v1652
    %v1654 = vsel %vm1640, %v1651, %v1653
    %v1655 = vshll.u32 %v1615, 8
    %v1656 = vand.u32 %v1655, 65535
    %v1657 = vshrl.u32 %v1655, 16
    %v1658 = vand.u32 %v1654, 65535
    %v1659 = vshrl.u32 %v1654, 16
    %v1660 = vmul.u32 %v1656, %v1658
    %v1661 = vmul.u32 %v1656, %v1659
    %v1662 = vmul.u32 %v1657, %v1658
    %v1663 = vmul.u32 %v1657, %v1659
    %v1664 = vshll.u32 %v1661, 16
    %v1665 = vshrl.u32 %v1661, 16
    %v1666 = vshll.u32 %v1662, 16
    %v1667 = vshrl.u32 %v1662, 16
    %vm1668 = vc.u32 %v1660, %v1664
    %v1669 = vsel %vm1668, 1, 0
    %v1670 = vadd.s32 %v1660, %v1664
    %v1671 = vadd.s32 %v1663, %v1669
    %vm1672 = vc.u32 %v1670, %v1666
    %v1673 = vsel %vm1672, 1, 0
    %v1674 = vadd.s32 %v1670, %v1666
    %v1675 = vadd.s32 %v1671, %v1673
    %v1676 = vadd.s32 %v1675, %v1665
    %v1677 = vadd.s32 %v1676, %v1667
    %v1678 = vand.u32 %v1655, 65535
    %v1679 = vshrl.u32 %v1655, 16
    %v1680 = vand.u32 %v1650, 65535
    %v1681 = vshrl.u32 %v1650, 16
    %v1682 = vmul.u32 %v1678, %v1680
    %v1683 = vmul.u32 %v1678, %v1681
    %v1684 = vmul.u32 %v1679, %v1680
    %v1685 = vmul.u32 %v1679, %v1681
    %v1686 = vshll.u32 %v1683, 16
    %v1687 = vshrl.u32 %v1683, 16
    %v1688 = vshll.u32 %v1684, 16
    %v1689 = vshrl.u32 %v1684, 16
    %vm1690 = vc.u32 %v1682, %v1686
    %v1691 = vsel %vm1690, 1, 0
    %v1692 = vadd.s32 %v1682, %v1686
    %v1693 = vadd.s32 %v1685, %v1691
    %vm1694 = vc.u32 %v1692, %v1688
    %v1695 = vsel %vm1694, 1, 0
    %v1696 = vadd.s32 %v1692, %v1688
    %v1697 = vadd.s32 %v1693, %v1695
    %v1698 = vadd.s32 %v1697, %v1687
    %v1699 = vadd.s32 %v1698, %v1689
    %v1700 = vmul.u32 %v1655, %v1646
    %v1701 = vadd.s32 %v1677, %v1696
    %vm1702 = vc.u32 %v1677, %v1696
    %v1703 = vadd.s32 %v1699, 1
    %v1704 = vsel %vm1702, %v1703, %v1699
    %v1705 = vadd.s32 %v1700, %v1704
    %v1706 = vadd.s32 %v1705, 536870912
    %v1707 = vshrl.u32 %v1706, 30
    %v1708 = vshll.u32 %v1707, 30
    %v1709 = vsub.s32 %v1705, %v1708
    %vm1710 = vcmp.lt.s32.totalorder %v1709, 0
    %v1711 = vsub.s32 0, %v1709
    %v1712 = vsel %vm1710, %v1711, %v1709
    %v1713 = vclz %v1712
    %v1714 = vsub.s32 %v1713, 2
    %vm1715 = vcmp.gt.s32.totalorder 0, %v1714
    %v1716 = vsel %vm1715, 0, %v1714
    %v1717 = vsub.s32 32, %v1716
    %v1718 = vshll.u32 %v1709, %v1716
    %v1719 = vshrl.u32 %v1701, %v1717
    %v1720 = vor.u32 %v1718, %v1719
    %v1721 = vsub.s32 4294967266, %v1716
    %v1722 = vadd.s32 %v1721, 127
    %v1723 = vshll.u32 %v1722, 23
    %v1724 = vor.u32 4788187, %v1723
    %v1725 = vand.u32 2147483647, %v1724
    %v1727 = vcvt.s32.f32 %v1720
    %v1728 = vmul.f32 %v1727, %v1725
    %v1729 = vxor.u32 %v1728, 2147483648
    %v1730 = vsel %vm1609, %v1729, %v1728
    %v1731 = vsub.s32 4, %v1707
    %v1732 = vsel %vm1609, %v1731, %v1707
    %v1733 = vsel %vm1608, %v520, %v1730
    %v1734 = vsel %vm1608, 0, %v1732
    %v1735 = vmul.f32 %v1733, %v1733
    %v1736 = vmul.f32 %v1735, -0.001358992
    %v1737 = vadd.f32 %v1736, 0.041655596
    %v1738 = vmul.f32 %v1735, %v1737
    %v1739 = vadd.f32 %v1738, -0.4999988
    %v1740 = vmul.f32 %v1735, %v1739
    %v1741 = vadd.f32 1.0, %v1740
    %v1742 = vmul.f32 %v1733, %v1733
    %v1743 = vmul.f32 %v1742, -0.00019511016
    %v1744 = vadd.f32 %v1743, 0.008332121
    %v1745 = vmul.f32 %v1742, %v1744
    %v1746 = vadd.f32 %v1745, -0.16666654
    %v1747 = vmul.f32 %v1742, %v1746
    %v1748 = vadd.f32 %v1747, 1.0
    %v1749 = vmul.f32 %v1748, %v1733
    %vm1750 = vweird.f32 %v520
    %v1751 = vand.u32 %v1734, 3
    %vm1752 = vcmp.lt.s32.totalorder %v1751, 2
    %vm1753 = vcmp.eq.s32.totalorder %v1751, 0
    %v1754 = vxor.u32 %v1749, 2147483648
    %v1755 = vsel %vm1753, %v1741, %v1754
    %vm1756 = vcmp.eq.s32.totalorder %v1751, 2
    %v1757 = vxor.u32 %v1741, 2147483648
    %v1758 = vsel %vm1756, %v1757, %v1749
    %v1759 = vsel %vm1752, %v1755, %v1758
    %v1760 = vsel %vm1750, nan, %v1759
    %v1761 = vand.u32 2147483647, %v521
    %vm1762 = vcmp.le.f32.partialorder %v1761, 0.7853982
    %vm1763 = vcmp.lt.s32.totalorder %v521, 0
    %v1764 = vand.u32 %v521, 2139095040
    %v1765 = vshrl.u32 %v1764, 23
    %v1766 = vsub.s32 %v1765, 127
    %v1767 = vand.u32 2147483647, %v521
    %v1768 = vand.u32 %v1767, 8388607
    %v1769 = vor.u32 %v1768, 8388608
    %v1770 = vsub.s32 0, %v1769
    %v1771 = vadd.s32 %v1766, 1
    %vm1772 = vcmp.gt.s32.totalorder %v1771, 0
    %v1773 = vsel %vm1772, %v1771, 0
    %v1774 = vshrl.u32 %v1773, 5
    %v1775 = vand.u32 %v1773, 31
    %v1776 = vsub.s32 32, %v1775
    %v1777 = vshrl.u32 683565275, %v1776
    %v1778 = vshll.u32 683565275, %v1775
    %v1779 = vshrl.u32 2475754826, %v1776
    %v1780 = vor.u32 %v1778, %v1779
    %v1781 = vshll.u32 2475754826, %v1775
    %v1782 = vshrl.u32 2131351028, %v1776
    %v1783 = vor.u32 %v1781, %v1782
    %v1784 = vshll.u32 2131351028, %v1775
    %v1785 = vshrl.u32 2102212464, %v1776
    %v1786 = vor.u32 %v1784, %v1785
    %v1787 = vshll.u32 2102212464, %v1775
    %v1788 = vshrl.u32 920167782, %v1776
    %v1789 = vor.u32 %v1787, %v1788
    %v1790 = vshll.u32 920167782, %v1775
    %v1791 = vshrl.u32 1326507024, %v1776
    %v1792 = vor.u32 %v1790, %v1791
    %vm1793 = vcmp.lt.s32.totalorder %v1774, 1
    %vm1794 = vcmp.lt.s32.totalorder %v1774, 2
    %vm1795 = vcmp.lt.s32.totalorder %v1774, 3
    %vm1796 = vcmp.lt.s32.totalorder %v1774, 4
    %v1797 = vsel %vm1793, %v1777, %v1780
    %v1798 = vsel %vm1796, %v1786, 2102212464
    %v1799 = vsel %vm1795, %v1783, %v1798
    %v1800 = vsel %vm1794, %v1797, %v1799
    %v1801 = vsel %vm1793, %v1780, %v1783
    %v1802 = vsel %vm1796, %v1789, 920167782
    %v1803 = vsel %vm1795, %v1786, %v1802
    %v1804 = vsel %vm1794, %v1801, %v1803
    %v1805 = vsel %vm1793, %v1783, %v1786
    %v1806 = vsel %vm1796, %v1792, 1326507024
    %v1807 = vsel %vm1795, %v1789, %v1806
    %v1808 = vsel %vm1794, %v1805, %v1807
    %v1809 = vshll.u32 %v1769, 8
    %v1810 = vand.u32 %v1809, 65535
    %v1811 = vshrl.u32 %v1809, 16
    %v1812 = vand.u32 %v1808, 65535
    %v1813 = vshrl.u32 %v1808, 16
    %v1814 = vmul.u32 %v1810, %v1812
    %v1815 = vmul.u32 %v1810, %v1813
    %v1816 = vmul.u32 %v1811, %v1812
    %v1817 = vmul.u32 %v1811, %v1813
    %v1818 = vshll.u32 %v1815, 16
    %v1819 = vshrl.u32 %v1815, 16
    %v1820 = vshll.u32 %v1816, 16
    %v1821 = vshrl.u32 %v1816, 16
    %vm1822 = vc.u32 %v1814, %v1818
    %v1823 = vsel %vm1822, 1, 0
    %v1824 = vadd.s32 %v1814, %v1818
    %v1825 = vadd.s32 %v1817, %v1823
    %vm1826 = vc.u32 %v1824, %v1820
    %v1827 = vsel %vm1826, 1, 0
    %v1828 = vadd.s32 %v1824, %v1820
    %v1829 = vadd.s32 %v1825, %v1827
    %v1830 = vadd.s32 %v1829, %v1819
    %v1831 = vadd.s32 %v1830, %v1821
    %v1832 = vand.u32 %v1809, 65535
    %v1833 = vshrl.u32 %v1809, 16
    %v1834 = vand.u32 %v1804, 65535
    %v1835 = vshrl.u32 %v1804, 16
    %v1836 = vmul.u32 %v1832, %v1834
    %v1837 = vmul.u32 %v1832, %v1835
    %v1838 = vmul.u32 %v1833, %v1834
    %v1839 = vmul.u32 %v1833, %v1835
    %v1840 = vshll.u32 %v1837, 16
    %v1841 = vshrl.u32 %v1837, 16
    %v1842 = vshll.u32 %v1838, 16
    %v1843 = vshrl.u32 %v1838, 16
    %vm1844 = vc.u32 %v1836, %v1840
    %v1845 = vsel %vm1844, 1, 0
    %v1846 = vadd.s32 %v1836, %v1840
    %v1847 = vadd.s32 %v1839, %v1845
    %vm1848 = vc.u32 %v1846, %v1842
    %v1849 = vsel %vm1848, 1, 0
    %v1850 = vadd.s32 %v1846, %v1842
    %v1851 = vadd.s32 %v1847, %v1849
    %v1852 = vadd.s32 %v1851, %v1841
    %v1853 = vadd.s32 %v1852, %v1843
    %v1854 = vmul.u32 %v1809, %v1800
    %v1855 = vadd.s32 %v1831, %v1850
    %vm1856 = vc.u32 %v1831, %v1850
    %v1857 = vadd.s32 %v1853, 1
    %v1858 = vsel %vm1856, %v1857, %v1853
    %v1859 = vadd.s32 %v1854, %v1858
    %v1860 = vadd.s32 %v1859, 536870912
    %v1861 = vshrl.u32 %v1860, 30
    %v1862 = vshll.u32 %v1861, 30
    %v1863 = vsub.s32 %v1859, %v1862
    %vm1864 = vcmp.lt.s32.totalorder %v1863, 0
    %v1865 = vsub.s32 0, %v1863
    %v1866 = vsel %vm1864, %v1865, %v1863
    %v1867 = vclz %v1866
    %v1868 = vsub.s32 %v1867, 2
    %vm1869 = vcmp.gt.s32.totalorder 0, %v1868
    %v1870 = vsel %vm1869, 0, %v1868
    %v1871 = vsub.s32 32, %v1870
    %v1872 = vshll.u32 %v1863, %v1870
    %v1873 = vshrl.u32 %v1855, %v1871
    %v1874 = vor.u32 %v1872, %v1873
    %v1875 = vsub.s32 4294967266, %v1870
    %v1876 = vadd.s32 %v1875, 127
    %v1877 = vshll.u32 %v1876, 23
    %v1878 = vor.u32 4788187, %v1877
    %v1879 = vand.u32 2147483647, %v1878
    %v1881 = vcvt.s32.f32 %v1874
    %v1882 = vmul.f32 %v1881, %v1879
    %v1883 = vxor.u32 %v1882, 2147483648
    %v1884 = vsel %vm1763, %v1883, %v1882
    %v1885 = vsub.s32 4, %v1861
    %v1886 = vsel %vm1763, %v1885, %v1861
    %v1887 = vsel %vm1762, %v521, %v1884
    %v1888 = vsel %vm1762, 0, %v1886
    %v1889 = vmul.f32 %v1887, %v1887
    %v1890 = vmul.f32 %v1889, -0.001358992
    %v1891 = vadd.f32 %v1890, 0.041655596
    %v1892 = vmul.f32 %v1889, %v1891
    %v1893 = vadd.f32 %v1892, -0.4999988
    %v1894 = vmul.f32 %v1889, %v1893
    %v1895 = vadd.f32 1.0, %v1894
    %v1896 = vmul.f32 %v1887, %v1887
    %v1897 = vmul.f32 %v1896, -0.00019511016
    %v1898 = vadd.f32 %v1897, 0.008332121
    %v1899 = vmul.f32 %v1896, %v1898
    %v1900 = vadd.f32 %v1899, -0.16666654
    %v1901 = vmul.f32 %v1896, %v1900
    %v1902 = vadd.f32 %v1901, 1.0
    %v1903 = vmul.f32 %v1902, %v1887
    %vm1904 = vweird.f32 %v521
    %v1905 = vand.u32 %v1888, 3
    %vm1906 = vcmp.lt.s32.totalorder %v1905, 2
    %vm1907 = vcmp.eq.s32.totalorder %v1905, 0
    %v1908 = vxor.u32 %v1903, 2147483648
    %v1909 = vsel %vm1907, %v1895, %v1908
    %vm1910 = vcmp.eq.s32.totalorder %v1905, 2
    %v1911 = vxor.u32 %v1895, 2147483648
    %v1912 = vsel %vm1910, %v1911, %v1903
    %v1913 = vsel %vm1906, %v1909, %v1912
    %v1914 = vsel %vm1904, nan, %v1913
    %v1915 = vand.u32 2147483647, %v522
    %vm1916 = vcmp.le.f32.partialorder %v1915, 0.7853982
    %vm1917 = vcmp.lt.s32.totalorder %v522, 0
    %v1918 = vand.u32 %v522, 2139095040
    %v1919 = vshrl.u32 %v1918, 23
    %v1920 = vsub.s32 %v1919, 127
    %v1921 = vand.u32 2147483647, %v522
    %v1922 = vand.u32 %v1921, 8388607
    %v1923 = vor.u32 %v1922, 8388608
    %v1924 = vsub.s32 0, %v1923
    %v1925 = vadd.s32 %v1920, 1
    %vm1926 = vcmp.gt.s32.totalorder %v1925, 0
    %v1927 = vsel %vm1926, %v1925, 0
    %v1928 = vshrl.u32 %v1927, 5
    %v1929 = vand.u32 %v1927, 31
    %v1930 = vsub.s32 32, %v1929
    %v1931 = vshrl.u32 683565275, %v1930
    %v1932 = vshll.u32 683565275, %v1929
    %v1933 = vshrl.u32 2475754826, %v1930
    %v1934 = vor.u32 %v1932, %v1933
    %v1935 = vshll.u32 2475754826, %v1929
    %v1936 = vshrl.u32 2131351028, %v1930
    %v1937 = vor.u32 %v1935, %v1936
    %v1938 = vshll.u32 2131351028, %v1929
    %v1939 = vshrl.u32 2102212464, %v1930
    %v1940 = vor.u32 %v1938, %v1939
    %v1941 = vshll.u32 2102212464, %v1929
    %v1942 = vshrl.u32 920167782, %v1930
    %v1943 = vor.u32 %v1941, %v1942
    %v1944 = vshll.u32 920167782, %v1929
    %v1945 = vshrl.u32 1326507024, %v1930
    %v1946 = vor.u32 %v1944, %v1945
    %vm1947 = vcmp.lt.s32.totalorder %v1928, 1
    %vm1948 = vcmp.lt.s32.totalorder %v1928, 2
    %vm1949 = vcmp.lt.s32.totalorder %v1928, 3
    %vm1950 = vcmp.lt.s32.totalorder %v1928, 4
    %v1951 = vsel %vm1947, %v1931, %v1934
    %v1952 = vsel %vm1950, %v1940, 2102212464
    %v1953 = vsel %vm1949, %v1937, %v1952
    %v1954 = vsel %vm1948, %v1951, %v1953
    %v1955 = vsel %vm1947, %v1934, %v1937
    %v1956 = vsel %vm1950, %v1943, 920167782
    %v1957 = vsel %vm1949, %v1940, %v1956
    %v1958 = vsel %vm1948, %v1955, %v1957
    %v1959 = vsel %vm1947, %v1937, %v1940
    %v1960 = vsel %vm1950, %v1946, 1326507024
    %v1961 = vsel %vm1949, %v1943, %v1960
    %v1962 = vsel %vm1948, %v1959, %v1961
    %v1963 = vshll.u32 %v1923, 8
    %v1964 = vand.u32 %v1963, 65535
    %v1965 = vshrl.u32 %v1963, 16
    %v1966 = vand.u32 %v1962, 65535
    %v1967 = vshrl.u32 %v1962, 16
    %v1968 = vmul.u32 %v1964, %v1966
    %v1969 = vmul.u32 %v1964, %v1967
    %v1970 = vmul.u32 %v1965, %v1966
    %v1971 = vmul.u32 %v1965, %v1967
    %v1972 = vshll.u32 %v1969, 16
    %v1973 = vshrl.u32 %v1969, 16
    %v1974 = vshll.u32 %v1970, 16
    %v1975 = vshrl.u32 %v1970, 16
    %vm1976 = vc.u32 %v1968, %v1972
    %v1977 = vsel %vm1976, 1, 0
    %v1978 = vadd.s32 %v1968, %v1972
    %v1979 = vadd.s32 %v1971, %v1977
    %vm1980 = vc.u32 %v1978, %v1974
    %v1981 = vsel %vm1980, 1, 0
    %v1982 = vadd.s32 %v1978, %v1974
    %v1983 = vadd.s32 %v1979, %v1981
    %v1984 = vadd.s32 %v1983, %v1973
    %v1985 = vadd.s32 %v1984, %v1975
    %v1986 = vand.u32 %v1963, 65535
    %v1987 = vshrl.u32 %v1963, 16
    %v1988 = vand.u32 %v1958, 65535
    %v1989 = vshrl.u32 %v1958, 16
    %v1990 = vmul.u32 %v1986, %v1988
    %v1991 = vmul.u32 %v1986, %v1989
    %v1992 = vmul.u32 %v1987, %v1988
    %v1993 = vmul.u32 %v1987, %v1989
    %v1994 = vshll.u32 %v1991, 16
    %v1995 = vshrl.u32 %v1991, 16
    %v1996 = vshll.u32 %v1992, 16
    %v1997 = vshrl.u32 %v1992, 16
    %vm1998 = vc.u32 %v1990, %v1994
    %v1999 = vsel %vm1998, 1, 0
    %v2000 = vadd.s32 %v1990, %v1994
    %v2001 = vadd.s32 %v1993, %v1999
    %vm2002 = vc.u32 %v2000, %v1996
    %v2003 = vsel %vm2002, 1, 0
    %v2004 = vadd.s32 %v2000, %v1996
    %v2005 = vadd.s32 %v2001, %v2003
    %v2006 = vadd.s32 %v2005, %v1995
    %v2007 = vadd.s32 %v2006, %v1997
    %v2008 = vmul.u32 %v1963, %v1954
    %v2009 = vadd.s32 %v1985, %v2004
    %vm2010 = vc.u32 %v1985, %v2004
    %v2011 = vadd.s32 %v2007, 1
    %v2012 = vsel %vm2010, %v2011, %v2007
    %v2013 = vadd.s32 %v2008, %v2012
    %v2014 = vadd.s32 %v2013, 536870912
    %v2015 = vshrl.u32 %v2014, 30
    %v2016 = vshll.u32 %v2015, 30
    %v2017 = vsub.s32 %v2013, %v2016
    %vm2018 = vcmp.lt.s32.totalorder %v2017, 0
    %v2019 = vsub.s32 0, %v2017
    %v2020 = vsel %vm2018, %v2019, %v2017
    %v2021 = vclz %v2020
    %v2022 = vsub.s32 %v2021, 2
    %vm2023 = vcmp.gt.s32.totalorder 0, %v2022
    %v2024 = vsel %vm2023, 0, %v2022
    %v2025 = vsub.s32 32, %v2024
    %v2026 = vshll.u32 %v2017, %v2024
    %v2027 = vshrl.u32 %v2009, %v2025
    %v2028 = vor.u32 %v2026, %v2027
    %v2029 = vsub.s32 4294967266, %v2024
    %v2030 = vadd.s32 %v2029, 127
    %v2031 = vshll.u32 %v2030, 23
    %v2032 = vor.u32 4788187, %v2031
    %v2033 = vand.u32 2147483647, %v2032
    %v2035 = vcvt.s32.f32 %v2028
    %v2036 = vmul.f32 %v2035, %v2033
    %v2037 = vxor.u32 %v2036, 2147483648
    %v2038 = vsel %vm1917, %v2037, %v2036
    %v2039 = vsub.s32 4, %v2015
    %v2040 = vsel %vm1917, %v2039, %v2015
    %v2041 = vsel %vm1916, %v522, %v2038
    %v2042 = vsel %vm1916, 0, %v2040
    %v2043 = vmul.f32 %v2041, %v2041
    %v2044 = vmul.f32 %v2043, -0.001358992
    %v2045 = vadd.f32 %v2044, 0.041655596
    %v2046 = vmul.f32 %v2043, %v2045
    %v2047 = vadd.f32 %v2046, -0.4999988
    %v2048 = vmul.f32 %v2043, %v2047
    %v2049 = vadd.f32 1.0, %v2048
    %v2050 = vmul.f32 %v2041, %v2041
    %v2051 = vmul.f32 %v2050, -0.00019511016
    %v2052 = vadd.f32 %v2051, 0.008332121
    %v2053 = vmul.f32 %v2050, %v2052
    %v2054 = vadd.f32 %v2053, -0.16666654
    %v2055 = vmul.f32 %v2050, %v2054
    %v2056 = vadd.f32 %v2055, 1.0
    %v2057 = vmul.f32 %v2056, %v2041
    %vm2058 = vweird.f32 %v522
    %v2059 = vand.u32 %v2042, 3
    %vm2060 = vcmp.lt.s32.totalorder %v2059, 2
    %vm2061 = vcmp.eq.s32.totalorder %v2059, 0
    %v2062 = vxor.u32 %v2057, 2147483648
    %v2063 = vsel %vm2061, %v2049, %v2062
    %vm2064 = vcmp.eq.s32.totalorder %v2059, 2
    %v2065 = vxor.u32 %v2049, 2147483648
    %v2066 = vsel %vm2064, %v2065, %v2057
    %v2067 = vsel %vm2060, %v2063, %v2066
    %v2068 = vsel %vm2058, nan, %v2067
    %v2069 = vand.u32 2147483647, %v523
    %vm2070 = vcmp.le.f32.partialorder %v2069, 0.7853982
    %vm2071 = vcmp.lt.s32.totalorder %v523, 0
    %v2072 = vand.u32 %v523, 2139095040
    %v2073 = vshrl.u32 %v2072, 23
    %v2074 = vsub.s32 %v2073, 127
    %v2075 = vand.u32 2147483647, %v523
    %v2076 = vand.u32 %v2075, 8388607
    %v2077 = vor.u32 %v2076, 8388608
    %v2078 = vsub.s32 0, %v2077
    %v2079 = vadd.s32 %v2074, 1
    %vm2080 = vcmp.gt.s32.totalorder %v2079, 0
    %v2081 = vsel %vm2080, %v2079, 0
    %v2082 = vshrl.u32 %v2081, 5
    %v2083 = vand.u32 %v2081, 31
    %v2084 = vsub.s32 32, %v2083
    %v2085 = vshrl.u32 683565275, %v2084
    %v2086 = vshll.u32 683565275, %v2083
    %v2087 = vshrl.u32 2475754826, %v2084
    %v2088 = vor.u32 %v2086, %v2087
    %v2089 = vshll.u32 2475754826, %v2083
    %v2090 = vshrl.u32 2131351028, %v2084
    %v2091 = vor.u32 %v2089, %v2090
    %v2092 = vshll.u32 2131351028, %v2083
    %v2093 = vshrl.u32 2102212464, %v2084
    %v2094 = vor.u32 %v2092, %v2093
    %v2095 = vshll.u32 2102212464, %v2083
    %v2096 = vshrl.u32 920167782, %v2084
    %v2097 = vor.u32 %v2095, %v2096
    %v2098 = vshll.u32 920167782, %v2083
    %v2099 = vshrl.u32 1326507024, %v2084
    %v2100 = vor.u32 %v2098, %v2099
    %vm2101 = vcmp.lt.s32.totalorder %v2082, 1
    %vm2102 = vcmp.lt.s32.totalorder %v2082, 2
    %vm2103 = vcmp.lt.s32.totalorder %v2082, 3
    %vm2104 = vcmp.lt.s32.totalorder %v2082, 4
    %v2105 = vsel %vm2101, %v2085, %v2088
    %v2106 = vsel %vm2104, %v2094, 2102212464
    %v2107 = vsel %vm2103, %v2091, %v2106
    %v2108 = vsel %vm2102, %v2105, %v2107
    %v2109 = vsel %vm2101, %v2088, %v2091
    %v2110 = vsel %vm2104, %v2097, 920167782
    %v2111 = vsel %vm2103, %v2094, %v2110
    %v2112 = vsel %vm2102, %v2109, %v2111
    %v2113 = vsel %vm2101, %v2091, %v2094
    %v2114 = vsel %vm2104, %v2100, 1326507024
    %v2115 = vsel %vm2103, %v2097, %v2114
    %v2116 = vsel %vm2102, %v2113, %v2115
    %v2117 = vshll.u32 %v2077, 8
    %v2118 = vand.u32 %v2117, 65535
    %v2119 = vshrl.u32 %v2117, 16
    %v2120 = vand.u32 %v2116, 65535
    %v2121 = vshrl.u32 %v2116, 16
    %v2122 = vmul.u32 %v2118, %v2120
    %v2123 = vmul.u32 %v2118, %v2121
    %v2124 = vmul.u32 %v2119, %v2120
    %v2125 = vmul.u32 %v2119, %v2121
    %v2126 = vshll.u32 %v2123, 16
    %v2127 = vshrl.u32 %v2123, 16
    %v2128 = vshll.u32 %v2124, 16
    %v2129 = vshrl.u32 %v2124, 16
    %vm2130 = vc.u32 %v2122, %v2126
    %v2131 = vsel %vm2130, 1, 0
    %v2132 = vadd.s32 %v2122, %v2126
    %v2133 = vadd.s32 %v2125, %v2131
    %vm2134 = vc.u32 %v2132, %v2128
    %v2135 = vsel %vm2134, 1, 0
    %v2136 = vadd.s32 %v2132, %v2128
    %v2137 = vadd.s32 %v2133, %v2135
    %v2138 = vadd.s32 %v2137, %v2127
    %v2139 = vadd.s32 %v2138, %v2129
    %v2140 = vand.u32 %v2117, 65535
    %v2141 = vshrl.u32 %v2117, 16
    %v2142 = vand.u32 %v2112, 65535
    %v2143 = vshrl.u32 %v2112, 16
    %v2144 = vmul.u32 %v2140, %v2142
    %v2145 = vmul.u32 %v2140, %v2143
    %v2146 = vmul.u32 %v2141, %v2142
    %v2147 = vmul.u32 %v2141, %v2143
    %v2148 = vshll.u32 %v2145, 16
    %v2149 = vshrl.u32 %v2145, 16
    %v2150 = vshll.u32 %v2146, 16
    %v2151 = vshrl.u32 %v2146, 16
    %vm2152 = vc.u32 %v2144, %v2148
    %v2153 = vsel %vm2152, 1, 0
    %v2154 = vadd.s32 %v2144, %v2148
    %v2155 = vadd.s32 %v2147, %v2153
    %vm2156 = vc.u32 %v2154, %v2150
    %v2157 = vsel %vm2156, 1, 0
    %v2158 = vadd.s32 %v2154, %v2150
    %v2159 = vadd.s32 %v2155, %v2157
    %v2160 = vadd.s32 %v2159, %v2149
    %v2161 = vadd.s32 %v2160, %v2151
    %v2162 = vmul.u32 %v2117, %v2108
    %v2163 = vadd.s32 %v2139, %v2158
    %vm2164 = vc.u32 %v2139, %v2158
    %v2165 = vadd.s32 %v2161, 1
    %v2166 = vsel %vm2164, %v2165, %v2161
    %v2167 = vadd.s32 %v2162, %v2166
    %v2168 = vadd.s32 %v2167, 536870912
    %v2169 = vshrl.u32 %v2168, 30
    %v2170 = vshll.u32 %v2169, 30
    %v2171 = vsub.s32 %v2167, %v2170
    %vm2172 = vcmp.lt.s32.totalorder %v2171, 0
    %v2173 = vsub.s32 0, %v2171
    %v2174 = vsel %vm2172, %v2173, %v2171
    %v2175 = vclz %v2174
    %v2176 = vsub.s32 %v2175, 2
    %vm2177 = vcmp.gt.s32.totalorder 0, %v2176
    %v2178 = vsel %vm2177, 0, %v2176
    %v2179 = vsub.s32 32, %v2178
    %v2180 = vshll.u32 %v2171, %v2178
    %v2181 = vshrl.u32 %v2163, %v2179
    %v2182 = vor.u32 %v2180, %v2181
    %v2183 = vsub.s32 4294967266, %v2178
    %v2184 = vadd.s32 %v2183, 127
    %v2185 = vshll.u32 %v2184, 23
    %v2186 = vor.u32 4788187, %v2185
    %v2187 = vand.u32 2147483647, %v2186
    %v2189 = vcvt.s32.f32 %v2182
    %v2190 = vmul.f32 %v2189, %v2187
    %v2191 = vxor.u32 %v2190, 2147483648
    %v2192 = vsel %vm2071, %v2191, %v2190
    %v2193 = vsub.s32 4, %v2169
    %v2194 = vsel %vm2071, %v2193, %v2169
    %v2195 = vsel %vm2070, %v523, %v2192
    %v2196 = vsel %vm2070, 0, %v2194
    %v2197 = vmul.f32 %v2195, %v2195
    %v2198 = vmul.f32 %v2197, -0.001358992
    %v2199 = vadd.f32 %v2198, 0.041655596
    %v2200 = vmul.f32 %v2197, %v2199
    %v2201 = vadd.f32 %v2200, -0.4999988
    %v2202 = vmul.f32 %v2197, %v2201
    %v2203 = vadd.f32 1.0, %v2202
    %v2204 = vmul.f32 %v2195, %v2195
    %v2205 = vmul.f32 %v2204, -0.00019511016
    %v2206 = vadd.f32 %v2205, 0.008332121
    %v2207 = vmul.f32 %v2204, %v2206
    %v2208 = vadd.f32 %v2207, -0.16666654
    %v2209 = vmul.f32 %v2204, %v2208
    %v2210 = vadd.f32 %v2209, 1.0
    %v2211 = vmul.f32 %v2210, %v2195
    %vm2212 = vweird.f32 %v523
    %v2213 = vand.u32 %v2196, 3
    %vm2214 = vcmp.lt.s32.totalorder %v2213, 2
    %vm2215 = vcmp.eq.s32.totalorder %v2213, 0
    %v2216 = vxor.u32 %v2211, 2147483648
    %v2217 = vsel %vm2215, %v2203, %v2216
    %vm2218 = vcmp.eq.s32.totalorder %v2213, 2
    %v2219 = vxor.u32 %v2203, 2147483648
    %v2220 = vsel %vm2218, %v2219, %v2211
    %v2221 = vsel %vm2214, %v2217, %v2220
    %v2222 = vsel %vm2212, nan, %v2221
    %v2223 = vand.u32 2147483647, %v524
    %vm2224 = vcmp.le.f32.partialorder %v2223, 0.7853982
    %vm2225 = vcmp.lt.s32.totalorder %v524, 0
    %v2226 = vand.u32 %v524, 2139095040
    %v2227 = vshrl.u32 %v2226, 23
    %v2228 = vsub.s32 %v2227, 127
    %v2229 = vand.u32 2147483647, %v524
    %v2230 = vand.u32 %v2229, 8388607
    %v2231 = vor.u32 %v2230, 8388608
    %v2232 = vsub.s32 0, %v2231
    %v2233 = vadd.s32 %v2228, 1
    %vm2234 = vcmp.gt.s32.totalorder %v2233, 0
    %v2235 = vsel %vm2234, %v2233, 0
    %v2236 = vshrl.u32 %v2235, 5
    %v2237 = vand.u32 %v2235, 31
    %v2238 = vsub.s32 32, %v2237
    %v2239 = vshrl.u32 683565275, %v2238
    %v2240 = vshll.u32 683565275, %v2237
    %v2241 = vshrl.u32 2475754826, %v2238
    %v2242 = vor.u32 %v2240, %v2241
    %v2243 = vshll.u32 2475754826, %v2237
    %v2244 = vshrl.u32 2131351028, %v2238
    %v2245 = vor.u32 %v2243, %v2244
    %v2246 = vshll.u32 2131351028, %v2237
    %v2247 = vshrl.u32 2102212464, %v2238
    %v2248 = vor.u32 %v2246, %v2247
    %v2249 = vshll.u32 2102212464, %v2237
    %v2250 = vshrl.u32 920167782, %v2238
    %v2251 = vor.u32 %v2249, %v2250
    %v2252 = vshll.u32 920167782, %v2237
    %v2253 = vshrl.u32 1326507024, %v2238
    %v2254 = vor.u32 %v2252, %v2253
    %vm2255 = vcmp.lt.s32.totalorder %v2236, 1
    %vm2256 = vcmp.lt.s32.totalorder %v2236, 2
    %vm2257 = vcmp.lt.s32.totalorder %v2236, 3
    %vm2258 = vcmp.lt.s32.totalorder %v2236, 4
    %v2259 = vsel %vm2255, %v2239, %v2242
    %v2260 = vsel %vm2258, %v2248, 2102212464
    %v2261 = vsel %vm2257, %v2245, %v2260
    %v2262 = vsel %vm2256, %v2259, %v2261
    %v2263 = vsel %vm2255, %v2242, %v2245
    %v2264 = vsel %vm2258, %v2251, 920167782
    %v2265 = vsel %vm2257, %v2248, %v2264
    %v2266 = vsel %vm2256, %v2263, %v2265
    %v2267 = vsel %vm2255, %v2245, %v2248
    %v2268 = vsel %vm2258, %v2254, 1326507024
    %v2269 = vsel %vm2257, %v2251, %v2268
    %v2270 = vsel %vm2256, %v2267, %v2269
    %v2271 = vshll.u32 %v2231, 8
    %v2272 = vand.u32 %v2271, 65535
    %v2273 = vshrl.u32 %v2271, 16
    %v2274 = vand.u32 %v2270, 65535
    %v2275 = vshrl.u32 %v2270, 16
    %v2276 = vmul.u32 %v2272, %v2274
    %v2277 = vmul.u32 %v2272, %v2275
    %v2278 = vmul.u32 %v2273, %v2274
    %v2279 = vmul.u32 %v2273, %v2275
    %v2280 = vshll.u32 %v2277, 16
    %v2281 = vshrl.u32 %v2277, 16
    %v2282 = vshll.u32 %v2278, 16
    %v2283 = vshrl.u32 %v2278, 16
    %vm2284 = vc.u32 %v2276, %v2280
    %v2285 = vsel %vm2284, 1, 0
    %v2286 = vadd.s32 %v2276, %v2280
    %v2287 = vadd.s32 %v2279, %v2285
    %vm2288 = vc.u32 %v2286, %v2282
    %v2289 = vsel %vm2288, 1, 0
    %v2290 = vadd.s32 %v2286, %v2282
    %v2291 = vadd.s32 %v2287, %v2289
    %v2292 = vadd.s32 %v2291, %v2281
    %v2293 = vadd.s32 %v2292, %v2283
    %v2294 = vand.u32 %v2271, 65535
    %v2295 = vshrl.u32 %v2271, 16
    %v2296 = vand.u32 %v2266, 65535
    %v2297 = vshrl.u32 %v2266, 16
    %v2298 = vmul.u32 %v2294, %v2296
    %v2299 = vmul.u32 %v2294, %v2297
    %v2300 = vmul.u32 %v2295, %v2296
    %v2301 = vmul.u32 %v2295, %v2297
    %v2302 = vshll.u32 %v2299, 16
    %v2303 = vshrl.u32 %v2299, 16
    %v2304 = vshll.u32 %v2300, 16
    %v2305 = vshrl.u32 %v2300, 16
    %vm2306 = vc.u32 %v2298, %v2302
    %v2307 = vsel %vm2306, 1, 0
    %v2308 = vadd.s32 %v2298, %v2302
    %v2309 = vadd.s32 %v2301, %v2307
    %vm2310 = vc.u32 %v2308, %v2304
    %v2311 = vsel %vm2310, 1, 0
    %v2312 = vadd.s32 %v2308, %v2304
    %v2313 = vadd.s32 %v2309, %v2311
    %v2314 = vadd.s32 %v2313, %v2303
    %v2315 = vadd.s32 %v2314, %v2305
    %v2316 = vmul.u32 %v2271, %v2262
    %v2317 = vadd.s32 %v2293, %v2312
    %vm2318 = vc.u32 %v2293, %v2312
    %v2319 = vadd.s32 %v2315, 1
    %v2320 = vsel %vm2318, %v2319, %v2315
    %v2321 = vadd.s32 %v2316, %v2320
    %v2322 = vadd.s32 %v2321, 536870912
    %v2323 = vshrl.u32 %v2322, 30
    %v2324 = vshll.u32 %v2323, 30
    %v2325 = vsub.s32 %v2321, %v2324
    %vm2326 = vcmp.lt.s32.totalorder %v2325, 0
    %v2327 = vsub.s32 0, %v2325
    %v2328 = vsel %vm2326, %v2327, %v2325
    %v2329 = vclz %v2328
    %v2330 = vsub.s32 %v2329, 2
    %vm2331 = vcmp.gt.s32.totalorder 0, %v2330
    %v2332 = vsel %vm2331, 0, %v2330
    %v2333 = vsub.s32 32, %v2332
    %v2334 = vshll.u32 %v2325, %v2332
    %v2335 = vshrl.u32 %v2317, %v2333
    %v2336 = vor.u32 %v2334, %v2335
    %v2337 = vsub.s32 4294967266, %v2332
    %v2338 = vadd.s32 %v2337, 127
    %v2339 = vshll.u32 %v2338, 23
    %v2340 = vor.u32 4788187, %v2339
    %v2341 = vand.u32 2147483647, %v2340
    %v2343 = vcvt.s32.f32 %v2336
    %v2344 = vmul.f32 %v2343, %v2341
    %v2345 = vxor.u32 %v2344, 2147483648
    %v2346 = vsel %vm2225, %v2345, %v2344
    %v2347 = vsub.s32 4, %v2323
    %v2348 = vsel %vm2225, %v2347, %v2323
    %v2349 = vsel %vm2224, %v524, %v2346
    %v2350 = vsel %vm2224, 0, %v2348
    %v2351 = vmul.f32 %v2349, %v2349
    %v2352 = vmul.f32 %v2351, -0.001358992
    %v2353 = vadd.f32 %v2352, 0.041655596
    %v2354 = vmul.f32 %v2351, %v2353
    %v2355 = vadd.f32 %v2354, -0.4999988
    %v2356 = vmul.f32 %v2351, %v2355
    %v2357 = vadd.f32 1.0, %v2356
    %v2358 = vmul.f32 %v2349, %v2349
    %v2359 = vmul.f32 %v2358, -0.00019511016
    %v2360 = vadd.f32 %v2359, 0.008332121
    %v2361 = vmul.f32 %v2358, %v2360
    %v2362 = vadd.f32 %v2361, -0.16666654
    %v2363 = vmul.f32 %v2358, %v2362
    %v2364 = vadd.f32 %v2363, 1.0
    %v2365 = vmul.f32 %v2364, %v2349
    %vm2366 = vweird.f32 %v524
    %v2367 = vand.u32 %v2350, 3
    %vm2368 = vcmp.lt.s32.totalorder %v2367, 2
    %vm2369 = vcmp.eq.s32.totalorder %v2367, 0
    %v2370 = vxor.u32 %v2365, 2147483648
    %v2371 = vsel %vm2369, %v2357, %v2370
    %vm2372 = vcmp.eq.s32.totalorder %v2367, 2
    %v2373 = vxor.u32 %v2357, 2147483648
    %v2374 = vsel %vm2372, %v2373, %v2365
    %v2375 = vsel %vm2368, %v2371, %v2374
    %v2376 = vsel %vm2366, nan, %v2375
    %v2377 = vand.u32 2147483647, %v525
    %vm2378 = vcmp.le.f32.partialorder %v2377, 0.7853982
    %vm2379 = vcmp.lt.s32.totalorder %v525, 0
    %v2380 = vand.u32 %v525, 2139095040
    %v2381 = vshrl.u32 %v2380, 23
    %v2382 = vsub.s32 %v2381, 127
    %v2383 = vand.u32 2147483647, %v525
    %v2384 = vand.u32 %v2383, 8388607
    %v2385 = vor.u32 %v2384, 8388608
    %v2386 = vsub.s32 0, %v2385
    %v2387 = vadd.s32 %v2382, 1
    %vm2388 = vcmp.gt.s32.totalorder %v2387, 0
    %v2389 = vsel %vm2388, %v2387, 0
    %v2390 = vshrl.u32 %v2389, 5
    %v2391 = vand.u32 %v2389, 31
    %v2392 = vsub.s32 32, %v2391
    %v2393 = vshrl.u32 683565275, %v2392
    %v2394 = vshll.u32 683565275, %v2391
    %v2395 = vshrl.u32 2475754826, %v2392
    %v2396 = vor.u32 %v2394, %v2395
    %v2397 = vshll.u32 2475754826, %v2391
    %v2398 = vshrl.u32 2131351028, %v2392
    %v2399 = vor.u32 %v2397, %v2398
    %v2400 = vshll.u32 2131351028, %v2391
    %v2401 = vshrl.u32 2102212464, %v2392
    %v2402 = vor.u32 %v2400, %v2401
    %v2403 = vshll.u32 2102212464, %v2391
    %v2404 = vshrl.u32 920167782, %v2392
    %v2405 = vor.u32 %v2403, %v2404
    %v2406 = vshll.u32 920167782, %v2391
    %v2407 = vshrl.u32 1326507024, %v2392
    %v2408 = vor.u32 %v2406, %v2407
    %vm2409 = vcmp.lt.s32.totalorder %v2390, 1
    %vm2410 = vcmp.lt.s32.totalorder %v2390, 2
    %vm2411 = vcmp.lt.s32.totalorder %v2390, 3
    %vm2412 = vcmp.lt.s32.totalorder %v2390, 4
    %v2413 = vsel %vm2409, %v2393, %v2396
    %v2414 = vsel %vm2412, %v2402, 2102212464
    %v2415 = vsel %vm2411, %v2399, %v2414
    %v2416 = vsel %vm2410, %v2413, %v2415
    %v2417 = vsel %vm2409, %v2396, %v2399
    %v2418 = vsel %vm2412, %v2405, 920167782
    %v2419 = vsel %vm2411, %v2402, %v2418
    %v2420 = vsel %vm2410, %v2417, %v2419
    %v2421 = vsel %vm2409, %v2399, %v2402
    %v2422 = vsel %vm2412, %v2408, 1326507024
    %v2423 = vsel %vm2411, %v2405, %v2422
    %v2424 = vsel %vm2410, %v2421, %v2423
    %v2425 = vshll.u32 %v2385, 8
    %v2426 = vand.u32 %v2425, 65535
    %v2427 = vshrl.u32 %v2425, 16
    %v2428 = vand.u32 %v2424, 65535
    %v2429 = vshrl.u32 %v2424, 16
    %v2430 = vmul.u32 %v2426, %v2428
    %v2431 = vmul.u32 %v2426, %v2429
    %v2432 = vmul.u32 %v2427, %v2428
    %v2433 = vmul.u32 %v2427, %v2429
    %v2434 = vshll.u32 %v2431, 16
    %v2435 = vshrl.u32 %v2431, 16
    %v2436 = vshll.u32 %v2432, 16
    %v2437 = vshrl.u32 %v2432, 16
    %vm2438 = vc.u32 %v2430, %v2434
    %v2439 = vsel %vm2438, 1, 0
    %v2440 = vadd.s32 %v2430, %v2434
    %v2441 = vadd.s32 %v2433, %v2439
    %vm2442 = vc.u32 %v2440, %v2436
    %v2443 = vsel %vm2442, 1, 0
    %v2444 = vadd.s32 %v2440, %v2436
    %v2445 = vadd.s32 %v2441, %v2443
    %v2446 = vadd.s32 %v2445, %v2435
    %v2447 = vadd.s32 %v2446, %v2437
    %v2448 = vand.u32 %v2425, 65535
    %v2449 = vshrl.u32 %v2425, 16
    %v2450 = vand.u32 %v2420, 65535
    %v2451 = vshrl.u32 %v2420, 16
    %v2452 = vmul.u32 %v2448, %v2450
    %v2453 = vmul.u32 %v2448, %v2451
    %v2454 = vmul.u32 %v2449, %v2450
    %v2455 = vmul.u32 %v2449, %v2451
    %v2456 = vshll.u32 %v2453, 16
    %v2457 = vshrl.u32 %v2453, 16
    %v2458 = vshll.u32 %v2454, 16
    %v2459 = vshrl.u32 %v2454, 16
    %vm2460 = vc.u32 %v2452, %v2456
    %v2461 = vsel %vm2460, 1, 0
    %v2462 = vadd.s32 %v2452, %v2456
    %v2463 = vadd.s32 %v2455, %v2461
    %vm2464 = vc.u32 %v2462, %v2458
    %v2465 = vsel %vm2464, 1, 0
    %v2466 = vadd.s32 %v2462, %v2458
    %v2467 = vadd.s32 %v2463, %v2465
    %v2468 = vadd.s32 %v2467, %v2457
    %v2469 = vadd.s32 %v2468, %v2459
    %v2470 = vmul.u32 %v2425, %v2416
    %v2471 = vadd.s32 %v2447, %v2466
    %vm2472 = vc.u32 %v2447, %v2466
    %v2473 = vadd.s32 %v2469, 1
    %v2474 = vsel %vm2472, %v2473, %v2469
    %v2475 = vadd.s32 %v2470, %v2474
    %v2476 = vadd.s32 %v2475, 536870912
    %v2477 = vshrl.u32 %v2476, 30
    %v2478 = vshll.u32 %v2477, 30
    %v2479 = vsub.s32 %v2475, %v2478
    %vm2480 = vcmp.lt.s32.totalorder %v2479, 0
    %v2481 = vsub.s32 0, %v2479
    %v2482 = vsel %vm2480, %v2481, %v2479
    %v2483 = vclz %v2482
    %v2484 = vsub.s32 %v2483, 2
    %vm2485 = vcmp.gt.s32.totalorder 0, %v2484
    %v2486 = vsel %vm2485, 0, %v2484
    %v2487 = vsub.s32 32, %v2486
    %v2488 = vshll.u32 %v2479, %v2486
    %v2489 = vshrl.u32 %v2471, %v2487
    %v2490 = vor.u32 %v2488, %v2489
    %v2491 = vsub.s32 4294967266, %v2486
    %v2492 = vadd.s32 %v2491, 127
    %v2493 = vshll.u32 %v2492, 23
    %v2494 = vor.u32 4788187, %v2493
    %v2495 = vand.u32 2147483647, %v2494
    %v2497 = vcvt.s32.f32 %v2490
    %v2498 = vmul.f32 %v2497, %v2495
    %v2499 = vxor.u32 %v2498, 2147483648
    %v2500 = vsel %vm2379, %v2499, %v2498
    %v2501 = vsub.s32 4, %v2477
    %v2502 = vsel %vm2379, %v2501, %v2477
    %v2503 = vsel %vm2378, %v525, %v2500
    %v2504 = vsel %vm2378, 0, %v2502
    %v2505 = vmul.f32 %v2503, %v2503
    %v2506 = vmul.f32 %v2505, -0.001358992
    %v2507 = vadd.f32 %v2506, 0.041655596
    %v2508 = vmul.f32 %v2505, %v2507
    %v2509 = vadd.f32 %v2508, -0.4999988
    %v2510 = vmul.f32 %v2505, %v2509
    %v2511 = vadd.f32 1.0, %v2510
    %v2512 = vmul.f32 %v2503, %v2503
    %v2513 = vmul.f32 %v2512, -0.00019511016
    %v2514 = vadd.f32 %v2513, 0.008332121
    %v2515 = vmul.f32 %v2512, %v2514
    %v2516 = vadd.f32 %v2515, -0.16666654
    %v2517 = vmul.f32 %v2512, %v2516
    %v2518 = vadd.f32 %v2517, 1.0
    %v2519 = vmul.f32 %v2518, %v2503
    %vm2520 = vweird.f32 %v525
    %v2521 = vand.u32 %v2504, 3
    %vm2522 = vcmp.lt.s32.totalorder %v2521, 2
    %vm2523 = vcmp.eq.s32.totalorder %v2521, 0
    %v2524 = vxor.u32 %v2519, 2147483648
    %v2525 = vsel %vm2523, %v2511, %v2524
    %vm2526 = vcmp.eq.s32.totalorder %v2521, 2
    %v2527 = vxor.u32 %v2511, 2147483648
    %v2528 = vsel %vm2526, %v2527, %v2519
    %v2529 = vsel %vm2522, %v2525, %v2528
    %v2530 = vsel %vm2520, nan, %v2529
    %v2531 = vand.u32 2147483647, %v526
    %vm2532 = vcmp.le.f32.partialorder %v2531, 0.7853982
    %vm2533 = vcmp.lt.s32.totalorder %v526, 0
    %v2534 = vand.u32 %v526, 2139095040
    %v2535 = vshrl.u32 %v2534, 23
    %v2536 = vsub.s32 %v2535, 127
    %v2537 = vand.u32 2147483647, %v526
    %v2538 = vand.u32 %v2537, 8388607
    %v2539 = vor.u32 %v2538, 8388608
    %v2540 = vsub.s32 0, %v2539
    %v2541 = vadd.s32 %v2536, 1
    %vm2542 = vcmp.gt.s32.totalorder %v2541, 0
    %v2543 = vsel %vm2542, %v2541, 0
    %v2544 = vshrl.u32 %v2543, 5
    %v2545 = vand.u32 %v2543, 31
    %v2546 = vsub.s32 32, %v2545
    %v2547 = vshrl.u32 683565275, %v2546
    %v2548 = vshll.u32 683565275, %v2545
    %v2549 = vshrl.u32 2475754826, %v2546
    %v2550 = vor.u32 %v2548, %v2549
    %v2551 = vshll.u32 2475754826, %v2545
    %v2552 = vshrl.u32 2131351028, %v2546
    %v2553 = vor.u32 %v2551, %v2552
    %v2554 = vshll.u32 2131351028, %v2545
    %v2555 = vshrl.u32 2102212464, %v2546
    %v2556 = vor.u32 %v2554, %v2555
    %v2557 = vshll.u32 2102212464, %v2545
    %v2558 = vshrl.u32 920167782, %v2546
    %v2559 = vor.u32 %v2557, %v2558
    %v2560 = vshll.u32 920167782, %v2545
    %v2561 = vshrl.u32 1326507024, %v2546
    %v2562 = vor.u32 %v2560, %v2561
    %vm2563 = vcmp.lt.s32.totalorder %v2544, 1
    %vm2564 = vcmp.lt.s32.totalorder %v2544, 2
    %vm2565 = vcmp.lt.s32.totalorder %v2544, 3
    %vm2566 = vcmp.lt.s32.totalorder %v2544, 4
    %v2567 = vsel %vm2563, %v2547, %v2550
    %v2568 = vsel %vm2566, %v2556, 2102212464
    %v2569 = vsel %vm2565, %v2553, %v2568
    %v2570 = vsel %vm2564, %v2567, %v2569
    %v2571 = vsel %vm2563, %v2550, %v2553
    %v2572 = vsel %vm2566, %v2559, 920167782
    %v2573 = vsel %vm2565, %v2556, %v2572
    %v2574 = vsel %vm2564, %v2571, %v2573
    %v2575 = vsel %vm2563, %v2553, %v2556
    %v2576 = vsel %vm2566, %v2562, 1326507024
    %v2577 = vsel %vm2565, %v2559, %v2576
    %v2578 = vsel %vm2564, %v2575, %v2577
    %v2579 = vshll.u32 %v2539, 8
    %v2580 = vand.u32 %v2579, 65535
    %v2581 = vshrl.u32 %v2579, 16
    %v2582 = vand.u32 %v2578, 65535
    %v2583 = vshrl.u32 %v2578, 16
    %v2584 = vmul.u32 %v2580, %v2582
    %v2585 = vmul.u32 %v2580, %v2583
    %v2586 = vmul.u32 %v2581, %v2582
    %v2587 = vmul.u32 %v2581, %v2583
    %v2588 = vshll.u32 %v2585, 16
    %v2589 = vshrl.u32 %v2585, 16
    %v2590 = vshll.u32 %v2586, 16
    %v2591 = vshrl.u32 %v2586, 16
    %vm2592 = vc.u32 %v2584, %v2588
    %v2593 = vsel %vm2592, 1, 0
    %v2594 = vadd.s32 %v2584, %v2588
    %v2595 = vadd.s32 %v2587, %v2593
    %vm2596 = vc.u32 %v2594, %v2590
    %v2597 = vsel %vm2596, 1, 0
    %v2598 = vadd.s32 %v2594, %v2590
    %v2599 = vadd.s32 %v2595, %v2597
    %v2600 = vadd.s32 %v2599, %v2589
    %v2601 = vadd.s32 %v2600, %v2591
    %v2602 = vand.u32 %v2579, 65535
    %v2603 = vshrl.u32 %v2579, 16
    %v2604 = vand.u32 %v2574, 65535
    %v2605 = vshrl.u32 %v2574, 16
    %v2606 = vmul.u32 %v2602, %v2604
    %v2607 = vmul.u32 %v2602, %v2605
    %v2608 = vmul.u32 %v2603, %v2604
    %v2609 = vmul.u32 %v2603, %v2605
    %v2610 = vshll.u32 %v2607, 16
    %v2611 = vshrl.u32 %v2607, 16
    %v2612 = vshll.u32 %v2608, 16
    %v2613 = vshrl.u32 %v2608, 16
    %vm2614 = vc.u32 %v2606, %v2610
    %v2615 = vsel %vm2614, 1, 0
    %v2616 = vadd.s32 %v2606, %v2610
    %v2617 = vadd.s32 %v2609, %v2615
    %vm2618 = vc.u32 %v2616, %v2612
    %v2619 = vsel %vm2618, 1, 0
    %v2620 = vadd.s32 %v2616, %v2612
    %v2621 = vadd.s32 %v2617, %v2619
    %v2622 = vadd.s32 %v2621, %v2611
    %v2623 = vadd.s32 %v2622, %v2613
    %v2624 = vmul.u32 %v2579, %v2570
    %v2625 = vadd.s32 %v2601, %v2620
    %vm2626 = vc.u32 %v2601, %v2620
    %v2627 = vadd.s32 %v2623, 1
    %v2628 = vsel %vm2626, %v2627, %v2623
    %v2629 = vadd.s32 %v2624, %v2628
    %v2630 = vadd.s32 %v2629, 536870912
    %v2631 = vshrl.u32 %v2630, 30
    %v2632 = vshll.u32 %v2631, 30
    %v2633 = vsub.s32 %v2629, %v2632
    %vm2634 = vcmp.lt.s32.totalorder %v2633, 0
    %v2635 = vsub.s32 0, %v2633
    %v2636 = vsel %vm2634, %v2635, %v2633
    %v2637 = vclz %v2636
    %v2638 = vsub.s32 %v2637, 2
    %vm2639 = vcmp.gt.s32.totalorder 0, %v2638
    %v2640 = vsel %vm2639, 0, %v2638
    %v2641 = vsub.s32 32, %v2640
    %v2642 = vshll.u32 %v2633, %v2640
    %v2643 = vshrl.u32 %v2625, %v2641
    %v2644 = vor.u32 %v2642, %v2643
    %v2645 = vsub.s32 4294967266, %v2640
    %v2646 = vadd.s32 %v2645, 127
    %v2647 = vshll.u32 %v2646, 23
    %v2648 = vor.u32 4788187, %v2647
    %v2649 = vand.u32 2147483647, %v2648
    %v2651 = vcvt.s32.f32 %v2644
    %v2652 = vmul.f32 %v2651, %v2649
    %v2653 = vxor.u32 %v2652, 2147483648
    %v2654 = vsel %vm2533, %v2653, %v2652
    %v2655 = vsub.s32 4, %v2631
    %v2656 = vsel %vm2533, %v2655, %v2631
    %v2657 = vsel %vm2532, %v526, %v2654
    %v2658 = vsel %vm2532, 0, %v2656
    %v2659 = vmul.f32 %v2657, %v2657
    %v2660 = vmul.f32 %v2659, -0.001358992
    %v2661 = vadd.f32 %v2660, 0.041655596
    %v2662 = vmul.f32 %v2659, %v2661
    %v2663 = vadd.f32 %v2662, -0.4999988
    %v2664 = vmul.f32 %v2659, %v2663
    %v2665 = vadd.f32 1.0, %v2664
    %v2666 = vmul.f32 %v2657, %v2657
    %v2667 = vmul.f32 %v2666, -0.00019511016
    %v2668 = vadd.f32 %v2667, 0.008332121
    %v2669 = vmul.f32 %v2666, %v2668
    %v2670 = vadd.f32 %v2669, -0.16666654
    %v2671 = vmul.f32 %v2666, %v2670
    %v2672 = vadd.f32 %v2671, 1.0
    %v2673 = vmul.f32 %v2672, %v2657
    %vm2674 = vweird.f32 %v526
    %v2675 = vand.u32 %v2658, 3
    %vm2676 = vcmp.lt.s32.totalorder %v2675, 2
    %vm2677 = vcmp.eq.s32.totalorder %v2675, 0
    %v2678 = vxor.u32 %v2673, 2147483648
    %v2679 = vsel %vm2677, %v2665, %v2678
    %vm2680 = vcmp.eq.s32.totalorder %v2675, 2
    %v2681 = vxor.u32 %v2665, 2147483648
    %v2682 = vsel %vm2680, %v2681, %v2673
    %v2683 = vsel %vm2676, %v2679, %v2682
    %v2684 = vsel %vm2674, nan, %v2683
    %v2685 = vand.u32 2147483647, %v527
    %vm2686 = vcmp.le.f32.partialorder %v2685, 0.7853982
    %vm2687 = vcmp.lt.s32.totalorder %v527, 0
    %v2688 = vand.u32 %v527, 2139095040
    %v2689 = vshrl.u32 %v2688, 23
    %v2690 = vsub.s32 %v2689, 127
    %v2691 = vand.u32 2147483647, %v527
    %v2692 = vand.u32 %v2691, 8388607
    %v2693 = vor.u32 %v2692, 8388608
    %v2694 = vsub.s32 0, %v2693
    %v2695 = vadd.s32 %v2690, 1
    %vm2696 = vcmp.gt.s32.totalorder %v2695, 0
    %v2697 = vsel %vm2696, %v2695, 0
    %v2698 = vshrl.u32 %v2697, 5
    %v2699 = vand.u32 %v2697, 31
    %v2700 = vsub.s32 32, %v2699
    %v2701 = vshrl.u32 683565275, %v2700
    %v2702 = vshll.u32 683565275, %v2699
    %v2703 = vshrl.u32 2475754826, %v2700
    %v2704 = vor.u32 %v2702, %v2703
    %v2705 = vshll.u32 2475754826, %v2699
    %v2706 = vshrl.u32 2131351028, %v2700
    %v2707 = vor.u32 %v2705, %v2706
    %v2708 = vshll.u32 2131351028, %v2699
    %v2709 = vshrl.u32 2102212464, %v2700
    %v2710 = vor.u32 %v2708, %v2709
    %v2711 = vshll.u32 2102212464, %v2699
    %v2712 = vshrl.u32 920167782, %v2700
    %v2713 = vor.u32 %v2711, %v2712
    %v2714 = vshll.u32 920167782, %v2699
    %v2715 = vshrl.u32 1326507024, %v2700
    %v2716 = vor.u32 %v2714, %v2715
    %vm2717 = vcmp.lt.s32.totalorder %v2698, 1
    %vm2718 = vcmp.lt.s32.totalorder %v2698, 2
    %vm2719 = vcmp.lt.s32.totalorder %v2698, 3
    %vm2720 = vcmp.lt.s32.totalorder %v2698, 4
    %v2721 = vsel %vm2717, %v2701, %v2704
    %v2722 = vsel %vm2720, %v2710, 2102212464
    %v2723 = vsel %vm2719, %v2707, %v2722
    %v2724 = vsel %vm2718, %v2721, %v2723
    %v2725 = vsel %vm2717, %v2704, %v2707
    %v2726 = vsel %vm2720, %v2713, 920167782
    %v2727 = vsel %vm2719, %v2710, %v2726
    %v2728 = vsel %vm2718, %v2725, %v2727
    %v2729 = vsel %vm2717, %v2707, %v2710
    %v2730 = vsel %vm2720, %v2716, 1326507024
    %v2731 = vsel %vm2719, %v2713, %v2730
    %v2732 = vsel %vm2718, %v2729, %v2731
    %v2733 = vshll.u32 %v2693, 8
    %v2734 = vand.u32 %v2733, 65535
    %v2735 = vshrl.u32 %v2733, 16
    %v2736 = vand.u32 %v2732, 65535
    %v2737 = vshrl.u32 %v2732, 16
    %v2738 = vmul.u32 %v2734, %v2736
    %v2739 = vmul.u32 %v2734, %v2737
    %v2740 = vmul.u32 %v2735, %v2736
    %v2741 = vmul.u32 %v2735, %v2737
    %v2742 = vshll.u32 %v2739, 16
    %v2743 = vshrl.u32 %v2739, 16
    %v2744 = vshll.u32 %v2740, 16
    %v2745 = vshrl.u32 %v2740, 16
    %vm2746 = vc.u32 %v2738, %v2742
    %v2747 = vsel %vm2746, 1, 0
    %v2748 = vadd.s32 %v2738, %v2742
    %v2749 = vadd.s32 %v2741, %v2747
    %vm2750 = vc.u32 %v2748, %v2744
    %v2751 = vsel %vm2750, 1, 0
    %v2752 = vadd.s32 %v2748, %v2744
    %v2753 = vadd.s32 %v2749, %v2751
    %v2754 = vadd.s32 %v2753, %v2743
    %v2755 = vadd.s32 %v2754, %v2745
    %v2756 = vand.u32 %v2733, 65535
    %v2757 = vshrl.u32 %v2733, 16
    %v2758 = vand.u32 %v2728, 65535
    %v2759 = vshrl.u32 %v2728, 16
    %v2760 = vmul.u32 %v2756, %v2758
    %v2761 = vmul.u32 %v2756, %v2759
    %v2762 = vmul.u32 %v2757, %v2758
    %v2763 = vmul.u32 %v2757, %v2759
    %v2764 = vshll.u32 %v2761, 16
    %v2765 = vshrl.u32 %v2761, 16
    %v2766 = vshll.u32 %v2762, 16
    %v2767 = vshrl.u32 %v2762, 16
    %vm2768 = vc.u32 %v2760, %v2764
    %v2769 = vsel %vm2768, 1, 0
    %v2770 = vadd.s32 %v2760, %v2764
    %v2771 = vadd.s32 %v2763, %v2769
    %vm2772 = vc.u32 %v2770, %v2766
    %v2773 = vsel %vm2772, 1, 0
    %v2774 = vadd.s32 %v2770, %v2766
    %v2775 = vadd.s32 %v2771, %v2773
    %v2776 = vadd.s32 %v2775, %v2765
    %v2777 = vadd.s32 %v2776, %v2767
    %v2778 = vmul.u32 %v2733, %v2724
    %v2779 = vadd.s32 %v2755, %v2774
    %vm2780 = vc.u32 %v2755, %v2774
    %v2781 = vadd.s32 %v2777, 1
    %v2782 = vsel %vm2780, %v2781, %v2777
    %v2783 = vadd.s32 %v2778, %v2782
    %v2784 = vadd.s32 %v2783, 536870912
    %v2785 = vshrl.u32 %v2784, 30
    %v2786 = vshll.u32 %v2785, 30
    %v2787 = vsub.s32 %v2783, %v2786
    %vm2788 = vcmp.lt.s32.totalorder %v2787, 0
    %v2789 = vsub.s32 0, %v2787
    %v2790 = vsel %vm2788, %v2789, %v2787
    %v2791 = vclz %v2790
    %v2792 = vsub.s32 %v2791, 2
    %vm2793 = vcmp.gt.s32.totalorder 0, %v2792
    %v2794 = vsel %vm2793, 0, %v2792
    %v2795 = vsub.s32 32, %v2794
    %v2796 = vshll.u32 %v2787, %v2794
    %v2797 = vshrl.u32 %v2779, %v2795
    %v2798 = vor.u32 %v2796, %v2797
    %v2799 = vsub.s32 4294967266, %v2794
    %v2800 = vadd.s32 %v2799, 127
    %v2801 = vshll.u32 %v2800, 23
    %v2802 = vor.u32 4788187, %v2801
    %v2803 = vand.u32 2147483647, %v2802
    %v2805 = vcvt.s32.f32 %v2798
    %v2806 = vmul.f32 %v2805, %v2803
    %v2807 = vxor.u32 %v2806, 2147483648
    %v2808 = vsel %vm2687, %v2807, %v2806
    %v2809 = vsub.s32 4, %v2785
    %v2810 = vsel %vm2687, %v2809, %v2785
    %v2811 = vsel %vm2686, %v527, %v2808
    %v2812 = vsel %vm2686, 0, %v2810
    %v2813 = vmul.f32 %v2811, %v2811
    %v2814 = vmul.f32 %v2813, -0.001358992
    %v2815 = vadd.f32 %v2814, 0.041655596
    %v2816 = vmul.f32 %v2813, %v2815
    %v2817 = vadd.f32 %v2816, -0.4999988
    %v2818 = vmul.f32 %v2813, %v2817
    %v2819 = vadd.f32 1.0, %v2818
    %v2820 = vmul.f32 %v2811, %v2811
    %v2821 = vmul.f32 %v2820, -0.00019511016
    %v2822 = vadd.f32 %v2821, 0.008332121
    %v2823 = vmul.f32 %v2820, %v2822
    %v2824 = vadd.f32 %v2823, -0.16666654
    %v2825 = vmul.f32 %v2820, %v2824
    %v2826 = vadd.f32 %v2825, 1.0
    %v2827 = vmul.f32 %v2826, %v2811
    %vm2828 = vweird.f32 %v527
    %v2829 = vand.u32 %v2812, 3
    %vm2830 = vcmp.lt.s32.totalorder %v2829, 2
    %vm2831 = vcmp.eq.s32.totalorder %v2829, 0
    %v2832 = vxor.u32 %v2827, 2147483648
    %v2833 = vsel %vm2831, %v2819, %v2832
    %vm2834 = vcmp.eq.s32.totalorder %v2829, 2
    %v2835 = vxor.u32 %v2819, 2147483648
    %v2836 = vsel %vm2834, %v2835, %v2827
    %v2837 = vsel %vm2830, %v2833, %v2836
    %v2838 = vsel %vm2828, nan, %v2837
    %v2839 = vand.u32 2147483647, %v528
    %vm2840 = vcmp.le.f32.partialorder %v2839, 0.7853982
    %vm2841 = vcmp.lt.s32.totalorder %v528, 0
    %v2842 = vand.u32 %v528, 2139095040
    %v2843 = vshrl.u32 %v2842, 23
    %v2844 = vsub.s32 %v2843, 127
    %v2845 = vand.u32 2147483647, %v528
    %v2846 = vand.u32 %v2845, 8388607
    %v2847 = vor.u32 %v2846, 8388608
    %v2848 = vsub.s32 0, %v2847
    %v2849 = vadd.s32 %v2844, 1
    %vm2850 = vcmp.gt.s32.totalorder %v2849, 0
    %v2851 = vsel %vm2850, %v2849, 0
    %v2852 = vshrl.u32 %v2851, 5
    %v2853 = vand.u32 %v2851, 31
    %v2854 = vsub.s32 32, %v2853
    %v2855 = vshrl.u32 683565275, %v2854
    %v2856 = vshll.u32 683565275, %v2853
    %v2857 = vshrl.u32 2475754826, %v2854
    %v2858 = vor.u32 %v2856, %v2857
    %v2859 = vshll.u32 2475754826, %v2853
    %v2860 = vshrl.u32 2131351028, %v2854
    %v2861 = vor.u32 %v2859, %v2860
    %v2862 = vshll.u32 2131351028, %v2853
    %v2863 = vshrl.u32 2102212464, %v2854
    %v2864 = vor.u32 %v2862, %v2863
    %v2865 = vshll.u32 2102212464, %v2853
    %v2866 = vshrl.u32 920167782, %v2854
    %v2867 = vor.u32 %v2865, %v2866
    %v2868 = vshll.u32 920167782, %v2853
    %v2869 = vshrl.u32 1326507024, %v2854
    %v2870 = vor.u32 %v2868, %v2869
    %vm2871 = vcmp.lt.s32.totalorder %v2852, 1
    %vm2872 = vcmp.lt.s32.totalorder %v2852, 2
    %vm2873 = vcmp.lt.s32.totalorder %v2852, 3
    %vm2874 = vcmp.lt.s32.totalorder %v2852, 4
    %v2875 = vsel %vm2871, %v2855, %v2858
    %v2876 = vsel %vm2874, %v2864, 2102212464
    %v2877 = vsel %vm2873, %v2861, %v2876
    %v2878 = vsel %vm2872, %v2875, %v2877
    %v2879 = vsel %vm2871, %v2858, %v2861
    %v2880 = vsel %vm2874, %v2867, 920167782
    %v2881 = vsel %vm2873, %v2864, %v2880
    %v2882 = vsel %vm2872, %v2879, %v2881
    %v2883 = vsel %vm2871, %v2861, %v2864
    %v2884 = vsel %vm2874, %v2870, 1326507024
    %v2885 = vsel %vm2873, %v2867, %v2884
    %v2886 = vsel %vm2872, %v2883, %v2885
    %v2887 = vshll.u32 %v2847, 8
    %v2888 = vand.u32 %v2887, 65535
    %v2889 = vshrl.u32 %v2887, 16
    %v2890 = vand.u32 %v2886, 65535
    %v2891 = vshrl.u32 %v2886, 16
    %v2892 = vmul.u32 %v2888, %v2890
    %v2893 = vmul.u32 %v2888, %v2891
    %v2894 = vmul.u32 %v2889, %v2890
    %v2895 = vmul.u32 %v2889, %v2891
    %v2896 = vshll.u32 %v2893, 16
    %v2897 = vshrl.u32 %v2893, 16
    %v2898 = vshll.u32 %v2894, 16
    %v2899 = vshrl.u32 %v2894, 16
    %vm2900 = vc.u32 %v2892, %v2896
    %v2901 = vsel %vm2900, 1, 0
    %v2902 = vadd.s32 %v2892, %v2896
    %v2903 = vadd.s32 %v2895, %v2901
    %vm2904 = vc.u32 %v2902, %v2898
    %v2905 = vsel %vm2904, 1, 0
    %v2906 = vadd.s32 %v2902, %v2898
    %v2907 = vadd.s32 %v2903, %v2905
    %v2908 = vadd.s32 %v2907, %v2897
    %v2909 = vadd.s32 %v2908, %v2899
    %v2910 = vand.u32 %v2887, 65535
    %v2911 = vshrl.u32 %v2887, 16
    %v2912 = vand.u32 %v2882, 65535
    %v2913 = vshrl.u32 %v2882, 16
    %v2914 = vmul.u32 %v2910, %v2912
    %v2915 = vmul.u32 %v2910, %v2913
    %v2916 = vmul.u32 %v2911, %v2912
    %v2917 = vmul.u32 %v2911, %v2913
    %v2918 = vshll.u32 %v2915, 16
    %v2919 = vshrl.u32 %v2915, 16
    %v2920 = vshll.u32 %v2916, 16
    %v2921 = vshrl.u32 %v2916, 16
    %vm2922 = vc.u32 %v2914, %v2918
    %v2923 = vsel %vm2922, 1, 0
    %v2924 = vadd.s32 %v2914, %v2918
    %v2925 = vadd.s32 %v2917, %v2923
    %vm2926 = vc.u32 %v2924, %v2920
    %v2927 = vsel %vm2926, 1, 0
    %v2928 = vadd.s32 %v2924, %v2920
    %v2929 = vadd.s32 %v2925, %v2927
    %v2930 = vadd.s32 %v2929, %v2919
    %v2931 = vadd.s32 %v2930, %v2921
    %v2932 = vmul.u32 %v2887, %v2878
    %v2933 = vadd.s32 %v2909, %v2928
    %vm2934 = vc.u32 %v2909, %v2928
    %v2935 = vadd.s32 %v2931, 1
    %v2936 = vsel %vm2934, %v2935, %v2931
    %v2937 = vadd.s32 %v2932, %v2936
    %v2938 = vadd.s32 %v2937, 536870912
    %v2939 = vshrl.u32 %v2938, 30
    %v2940 = vshll.u32 %v2939, 30
    %v2941 = vsub.s32 %v2937, %v2940
    %vm2942 = vcmp.lt.s32.totalorder %v2941, 0
    %v2943 = vsub.s32 0, %v2941
    %v2944 = vsel %vm2942, %v2943, %v2941
    %v2945 = vclz %v2944
    %v2946 = vsub.s32 %v2945, 2
    %vm2947 = vcmp.gt.s32.totalorder 0, %v2946
    %v2948 = vsel %vm2947, 0, %v2946
    %v2949 = vsub.s32 32, %v2948
    %v2950 = vshll.u32 %v2941, %v2948
    %v2951 = vshrl.u32 %v2933, %v2949
    %v2952 = vor.u32 %v2950, %v2951
    %v2953 = vsub.s32 4294967266, %v2948
    %v2954 = vadd.s32 %v2953, 127
    %v2955 = vshll.u32 %v2954, 23
    %v2956 = vor.u32 4788187, %v2955
    %v2957 = vand.u32 2147483647, %v2956
    %v2959 = vcvt.s32.f32 %v2952
    %v2960 = vmul.f32 %v2959, %v2957
    %v2961 = vxor.u32 %v2960, 2147483648
    %v2962 = vsel %vm2841, %v2961, %v2960
    %v2963 = vsub.s32 4, %v2939
    %v2964 = vsel %vm2841, %v2963, %v2939
    %v2965 = vsel %vm2840, %v528, %v2962
    %v2966 = vsel %vm2840, 0, %v2964
    %v2967 = vmul.f32 %v2965, %v2965
    %v2968 = vmul.f32 %v2967, -0.001358992
    %v2969 = vadd.f32 %v2968, 0.041655596
    %v2970 = vmul.f32 %v2967, %v2969
    %v2971 = vadd.f32 %v2970, -0.4999988
    %v2972 = vmul.f32 %v2967, %v2971
    %v2973 = vadd.f32 1.0, %v2972
    %v2974 = vmul.f32 %v2965, %v2965
    %v2975 = vmul.f32 %v2974, -0.00019511016
    %v2976 = vadd.f32 %v2975, 0.008332121
    %v2977 = vmul.f32 %v2974, %v2976
    %v2978 = vadd.f32 %v2977, -0.16666654
    %v2979 = vmul.f32 %v2974, %v2978
    %v2980 = vadd.f32 %v2979, 1.0
    %v2981 = vmul.f32 %v2980, %v2965
    %vm2982 = vweird.f32 %v528
    %v2983 = vand.u32 %v2966, 3
    %vm2984 = vcmp.lt.s32.totalorder %v2983, 2
    %vm2985 = vcmp.eq.s32.totalorder %v2983, 0
    %v2986 = vxor.u32 %v2981, 2147483648
    %v2987 = vsel %vm2985, %v2973, %v2986
    %vm2988 = vcmp.eq.s32.totalorder %v2983, 2
    %v2989 = vxor.u32 %v2973, 2147483648
    %v2990 = vsel %vm2988, %v2989, %v2981
    %v2991 = vsel %vm2984, %v2987, %v2990
    %v2992 = vsel %vm2982, nan, %v2991
    %v2993 = vadd.f32 %v682, 1.0
    %v2994 = vadd.f32 %v836, 1.0
    %v2995 = vadd.f32 %v990, 1.0
    %v2996 = vadd.f32 %v1144, 1.0
    %v2997 = vadd.f32 %v1298, 1.0
    %v2998 = vadd.f32 %v1452, 1.0
    %v2999 = vadd.f32 %v1606, 1.0
    %v3000 = vadd.f32 %v1760, 1.0
    %v3001 = vadd.f32 %v1914, 1.0
    %v3002 = vadd.f32 %v2068, 1.0
    %v3003 = vadd.f32 %v2222, 1.0
    %v3004 = vadd.f32 %v2376, 1.0
    %v3005 = vadd.f32 %v2530, 1.0
    %v3006 = vadd.f32 %v2684, 1.0
    %v3007 = vadd.f32 %v2838, 1.0
    %v3008 = vadd.f32 %v2992, 1.0
    %v3009 = vmul.f32 %v2993, 0.5
    %v3010 = vmul.f32 %v2994, 0.5
    %v3011 = vmul.f32 %v2995, 0.5
    %v3012 = vmul.f32 %v2996, 0.5
    %v3013 = vmul.f32 %v2997, 0.5
    %v3014 = vmul.f32 %v2998, 0.5
    %v3015 = vmul.f32 %v2999, 0.5
    %v3016 = vmul.f32 %v3000, 0.5
    %v3017 = vmul.f32 %v3001, 0.5
    %v3018 = vmul.f32 %v3002, 0.5
    %v3019 = vmul.f32 %v3003, 0.5
    %v3020 = vmul.f32 %v3004, 0.5
    %v3021 = vmul.f32 %v3005, 0.5
    %v3022 = vmul.f32 %v3006, 0.5
    %v3023 = vmul.f32 %v3007, 0.5
    %v3024 = vmul.f32 %v3008, 0.5
    %v3025 = vsel %vm497, %v3009, 0.0
    %v3026 = vsel %vm498, %v3010, 0.0
    %v3027 = vsel %vm499, %v3011, 0.0
    %v3028 = vsel %vm500, %v3012, 0.0
    %v3029 = vsel %vm501, %v3013, 0.0
    %v3030 = vsel %vm502, %v3014, 0.0
    %v3031 = vsel %vm503, %v3015, 0.0
    %v3032 = vsel %vm504, %v3016, 0.0
    %v3033 = vsel %vm505, %v3017, 0.0
    %v3034 = vsel %vm506, %v3018, 0.0
    %v3035 = vsel %vm507, %v3019, 0.0
    %v3036 = vsel %vm508, %v3020, 0.0
    %v3037 = vsel %vm509, %v3021, 0.0
    %v3038 = vsel %vm510, %v3022, 0.0
    %v3039 = vsel %vm511, %v3023, 0.0
    %v3040 = vsel %vm512, %v3024, 0.0
    %vm3041 = vcmask 7168
    %3042 = vst.msk [vmem:[%s7] sm:$0xff] %vm3041, %v3025
    %3043 = vst.msk [vmem:[%s7 + $0x8] sm:$0xff] %vm3041, %v3026
    %3044 = vst.msk [vmem:[%s7 + $0x10] sm:$0xff] %vm3041, %v3027
    %3045 = vst.msk [vmem:[%s7 + $0x18] sm:$0xff] %vm3041, %v3028
    %3046 = vst.msk [vmem:[%s7 + $0x20] sm:$0xff] %vm3041, %v3029
    %3047 = vst.msk [vmem:[%s7 + $0x28] sm:$0xff] %vm3041, %v3030
    %3048 = vst.msk [vmem:[%s7 + $0x30] sm:$0xff] %vm3041, %v3031
    %3049 = vst.msk [vmem:[%s7 + $0x38] sm:$0xff] %vm3041, %v3032
    %3050 = vst.msk [vmem:[%s7 + $0x40] sm:$0xff] %vm3041, %v3033
    %3051 = vst.msk [vmem:[%s7 + $0x48] sm:$0xff] %vm3041, %v3034
    %3052 = vst.msk [vmem:[%s7 + $0x50] sm:$0xff] %vm3041, %v3035
    %3053 = vst.msk [vmem:[%s7 + $0x58] sm:$0xff] %vm3041, %v3036
    %3054 = vst.msk [vmem:[%s7 + $0x60] sm:$0xff] %vm3041, %v3037
    %3055 = vst.msk [vmem:[%s7 + $0x68] sm:$0xff] %vm3041, %v3038
    %3056 = vst.msk [vmem:[%s7 + $0x70] sm:$0xff] %vm3041, %v3039
    %3057 = vst.msk [vmem:[%s7 + $0x78] sm:$0xff] %vm3041, %v3040
    // Predicated region
    $region18: #{tpu_custom_call.1} parent=1 // pred_check
      _
    $region19: #{tpu_custom_call.1} parent=1 // pred_check_branch
      %3059 = sbr.rel (0) target = $region21
    $region20: #{tpu_custom_call.1} parent=1 // pred_region
      %3061 = vsyncadd [#allocation3], 0
      %s3062 = sshll.u32 [#allocation2], 4
      %s3063 = int_to_ptr.vmem [resolvable:$true] %s3062
      %s3064 = sshll.u32 %s4, 4
      %s3065 = int_to_ptr.hbm [resolvable:$true] %s3064
      %3070 = dma.vmem_to_hbm [thread:$0]  %s3063, 1024, %s3065, [#allocation3], 64, 64, 4
    $region21: #{tpu_custom_call.1} parent=1 // pred_fallthru
      _
    // Predicated region
    $region22: #{tpu_custom_call.1} parent=1 // pred_check
      _
    $region23: #{tpu_custom_call.1} parent=1 // pred_check_branch
      %3072 = sbr.rel (0) target = $region25
    $region24: #{tpu_custom_call.1} parent=1 // pred_region
      %3074 = vsyncadd [#allocation5], 0
      %s3075 = sshll.u32 [#allocation4], 4
      %s3076 = int_to_ptr.vmem [resolvable:$true] %s3075
      %s3077 = sshll.u32 %s5, 4
      %s3078 = int_to_ptr.hbm [resolvable:$true] %s3077
      %3083 = dma.vmem_to_hbm [thread:$0]  %s3076, 1024, %s3078, [#allocation5], 64, 64, 4
    $region25: #{tpu_custom_call.1} parent=1 // pred_fallthru
      _
    // Predicated region
    $region26: #{tpu_custom_call.1} parent=1 // pred_check
      _
    $region27: #{tpu_custom_call.1} parent=1 // pred_check_branch
      %3085 = sbr.rel (0) target = $region29
    $region28: #{tpu_custom_call.1} parent=1 // pred_region
      %3087 = vsyncadd [#allocation5], 0
      %s3088 = sshll.u32 [#allocation6], 4
      %s3089 = int_to_ptr.vmem [resolvable:$true] %s3088
      %s3090 = sshll.u32 %s6, 4
      %s3091 = int_to_ptr.hbm [resolvable:$true] %s3090
      %3096 = dma.vmem_to_hbm [thread:$0]  %s3089, 1024, %s3091, [#allocation5], 64, 64, 4
    $region29: #{tpu_custom_call.1} parent=1 // pred_fallthru
      _
    // Predicated region
    $region30: #{tpu_custom_call.1} parent=1 // pred_check
      _
    $region31: #{tpu_custom_call.1} parent=1 // pred_check_branch
      %3098 = sbr.rel (0) target = $region33
    $region32: #{tpu_custom_call.1} parent=1 // pred_region
      _
    $region33: #{tpu_custom_call.1} parent=1 // pred_fallthru
      _
    // Predicated region
    $region34: #{tpu_custom_call.1} parent=1 // pred_check
      _
    $region35: #{tpu_custom_call.1} parent=1 // pred_check_branch
      %3100 = sbr.rel (0) target = $region37
    $region36: #{tpu_custom_call.1} parent=1 // pred_region
      %3102 = dma.done [#allocation3], 1024
    $region37: #{tpu_custom_call.1} parent=1 // pred_fallthru
      _
    // Predicated region
    $region38: #{tpu_custom_call.1} parent=1 // pred_check
      _
    $region39: #{tpu_custom_call.1} parent=1 // pred_check_branch
      %3104 = sbr.rel (0) target = $region41
    $region40: #{tpu_custom_call.1} parent=1 // pred_region
      %3106 = dma.done [#allocation5], 1024
    $region41: #{tpu_custom_call.1} parent=1 // pred_fallthru
      _
    // Predicated region
    $region42: #{tpu_custom_call.1} parent=1 // pred_check
      _
    $region43: #{tpu_custom_call.1} parent=1 // pred_check_branch
      %3108 = sbr.rel (0) target = $region45
    $region44: #{tpu_custom_call.1} parent=1 // pred_region
      %3110 = dma.done [#allocation5], 1024
    $region45: #{tpu_custom_call.1} parent=1 // pred_fallthru
      _
    // Predicated region
    $region46: #{tpu_custom_call.1} parent=1 // pred_check
      _
    $region47: #{tpu_custom_call.1} parent=1 // pred_check_branch
      %3112 = sbr.rel (0) target = $region49
    $region48: #{tpu_custom_call.1} parent=1 // pred_region
      _
    $region49: #{tpu_custom_call.1} parent=1 // pred_fallthru
      _
    %3113 = vsyncpa [#allocation3], 1
    %3114 = vsyncpa [#allocation5], 1

</llo_original>
